<compile_context>
chip_gen: v6e
topology: v6e:2x2x1
jax: 0.10.0
libtpu: 0.0.40
codegen_flags: <defaults>
</compile_context>

<pallas_src>
import math
from functools import partial

import jax
import jax.numpy as jnp
from jax.experimental import pallas as pl
from jax.experimental.pallas import tpu as pltpu

_SQRT1_2 = 1.0 / math.sqrt(2.0)


# --------------------------------------------------------------------------
# Fused kernel: [Conv3x3 -> LayerNorm(C) -> GELU -> (+residual)] x layers
#               -> 1x1 projection -> NCHW-flat store
# --------------------------------------------------------------------------
def _projector_kernel(x_ref, *args, cins, cproj, eps):
    """args = (w_0, b_0, ..., w_{L-1}, b_{L-1}, wp, bp, o_ref, xpad)

    x_ref : (TB, H, W, Cin0)  f32 batch tile of the input
    w_i   : (9*cins[i], cproj) bf16 conv weight, HWIO flattened (tap-major)
    b_i   : (1, cproj)        f32 conv bias
    wp    : (cproj, dout)     bf16 1x1 projection weight
    bp    : (1, dout)         f32 projection bias
    o_ref : (TB, dout, H*W)   output (NCHW with H,W flattened)
    xpad  : (TB, H+2, W+2, max(cins)) bf16 zero-halo scratch slab
    """
    layers = len(cins)
    nwt = 2 * layers + 2
    wrefs = args[:nwt]
    o_ref = args[nwt]
    xpad = args[nwt + 1]
    wp_ref, bp_ref = wrefs[2 * layers], wrefs[2 * layers + 1]

    TB, H, W, _ = x_ref.shape
    HW = H * W
    rows = TB * HW
    dout = wp_ref.shape[-1]
    cmax = xpad.shape[-1]

    # --- zero ONLY the 1-pixel halo border; interior is overwritten below.
    #     Done every grid step: with a "parallel" grid a core may never run
    #     program_id == 0, so a one-time init could leave stale VMEM.
    zrow = jnp.zeros((TB, 1, W + 2, cmax), xpad.dtype)
    xpad[:, 0:1, :, :] = zrow
    xpad[:, H + 1:H + 2, :, :] = zrow
    zcol = jnp.zeros((TB, H, 1, cmax), xpad.dtype)
    xpad[:, 1:H + 1, 0:1, :] = zcol
    xpad[:, 1:H + 1, W + 1:W + 2, :] = zcol

    # Current activation / residual carried in f32 (never leaves the chip).
    cur = x_ref[...].reshape(rows, cins[0]).astype(jnp.float32)

    for li in range(layers):
        cin = cins[li]
        w_ref = wrefs[2 * li]
        b_ref = wrefs[2 * li + 1]

        # Write the block input into the interior of the halo slab (bf16 MXU
        # operand); the halo channels [0:cmax] stay zero from the border init.
        xpad[:, 1:H + 1, 1:W + 1, 0:cin] = (
            cur.reshape(TB, H, W, cin).astype(xpad.dtype))

        # 3x3 conv as 9 tap-GEMMs accumulated directly in f32 (no im2col slab).
        acc = None
        for kh in range(3):
            for kw in range(3):
                t = kh * 3 + kw
                tap = xpad[:, kh:kh + H, kw:kw + W, 0:cin].reshape(rows, cin)
                part = jnp.dot(tap, w_ref[t * cin:(t + 1) * cin, :],
                               preferred_element_type=jnp.float32)
                acc = part if acc is None else acc + part
        acc = acc + b_ref[...]                       # (rows, cproj) f32

        # LayerNorm over channels (no affine), mean-centered variance.
        mean = jnp.mean(acc, axis=-1, keepdims=True)
        xc = acc - mean
        var = jnp.mean(xc * xc, axis=-1, keepdims=True)
        y = xc * jax.lax.rsqrt(var + jnp.float32(eps))

        # Exact GELU (torch nn.GELU default, approximate='none').
        y = 0.5 * y * (1.0 + jax.lax.erf(y * jnp.float32(_SQRT1_2)))

        # PyTorch adds the block input only when channel counts match.
        if cin == cproj:
            y = y + cur
        cur = y

    # Fused 1x1 projection: the last activation never touches HBM.
    z = jnp.dot(cur.astype(wp_ref.dtype), wp_ref[...],
                preferred_element_type=jnp.float32) + bp_ref[...]
    z = z.reshape(TB, HW, dout)

    # In-kernel NCHW store: per-image 2-D transpose rides the (idle) XLU and
    # removes the wrapper-level XLA transpose over the whole output in HBM.
    for bi in range(TB):
        o_ref[bi, :, :] = z[bi].T.astype(o_ref.dtype)


# --------------------------------------------------------------------------
# Tiling / VMEM helpers
# --------------------------------------------------------------------------
def _tpu_vmem_capacity():
    try:
        return int(pltpu.get_tpu_info().vmem_capacity_bytes)
    except Exception:
        return 64 * 1024 * 1024          # conservative (v7x per-TensorCore)


def _target_rows():
    # Bigger tiles amortize the ~0.35us/step overhead and lengthen compute per
    # step on 128-MiB-VMEM parts (v5e/v6e); keep ~512 rows on 64-MiB v7x.
    return 512 if _tpu_vmem_capacity() <= 64 * 1024 * 1024 else 1024


def _vmem_limit_bytes(need):
    # Counted once (the x2 double-buffer factor is already inside `need`);
    # cap below physical VMEM so compiler-internal scratch/semaphores fit.
    cap = _tpu_vmem_capacity()
    ceiling = max(cap - 8 * 1024 * 1024, 32 * 1024 * 1024)
    return int(min(max(need, 32 * 1024 * 1024), ceiling))


def _pick_batch_tile(batch, hw, target_rows):
    """Largest batch tile giving ~target_rows pixels per grid step while
    keeping >= 4 grid steps when the batch allows (>= 2 per TensorCore after
    v7x megacore sharding, so the software pipeline actually overlaps DMA)."""
    tb = max(1, min(batch, target_rows // max(hw, 1)))
    if batch >= 4:
        tb = min(tb, max(1, batch // 4))
    elif batch > 1:
        tb = min(tb, max(1, batch // 2))
    while batch % tb:
        tb -= 1
    return tb


# --------------------------------------------------------------------------
# Parameters & forward wrapper
# --------------------------------------------------------------------------
def init_params(key, input_dim, projector_dim, out_dim, layers=2):
    """Mirrors Projector._init_weights: Conv2d weight ~ N(0, 0.02), bias = 0.
    Conv weights are stored GEMM-ready: HWIO (3,3,Cin,Cout) flattened to
    (9*Cin, Cout), bf16 (MXU operand dtype); biases f32.  The 1x1 proj weight
    is stored as (Cin, Cout).  (Loading real PyTorch weights requires the
    OIHW -> HWIO permutation before this flatten.)"""
    keys = jax.random.split(key, layers + 1)
    blocks = []
    in_ch = input_dim
    for i in range(layers):
        w = 0.02 * jax.random.normal(keys[i], (3, 3, in_ch, projector_dim),
                                     jnp.float32)
        blocks.append((w.reshape(9 * in_ch, projector_dim).astype(jnp.bfloat16),
                       jnp.zeros((1, projector_dim), jnp.float32)))
        in_ch = projector_dim
    wp = 0.02 * jax.random.normal(keys[-1], (projector_dim, out_dim), jnp.float32)
    return {"blocks": blocks,
            "proj": (wp.astype(jnp.bfloat16),
                     jnp.zeros((1, out_dim), jnp.float32))}


def projector_forward(x, params):
    """x: (B, T, C) -> (B, out_dim, H, W) with H = W = sqrt(T)."""
    B, T, C = x.shape
    H = W = int(math.isqrt(T))
    assert H * W == T, "Projector assumes T is a perfect square"
    HW = H * W
    xh = x.reshape(B, H, W, C)           # PyTorch's NCHW tensor viewed as NHWC

    blocks = params["blocks"]
    wp, bp = params["proj"]
    layers = len(blocks)
    cproj = blocks[0][0].shape[-1]
    out_dim = wp.shape[-1]
    cins = tuple([C] + [cproj] * (layers - 1))
    cmax = max(cins)

    tb = _pick_batch_tile(B, HW, _target_rows())
    rows = tb * HW

    # Inputs: the batch-tiled activation + all weights (constant index maps).
    flat_w = []
    in_specs = [pl.BlockSpec((tb, H, W, C), lambda i: (i, 0, 0, 0))]
    for (w2, b2) in blocks:
        in_specs.append(pl.BlockSpec(w2.shape, lambda i: (0, 0)))
        in_specs.append(pl.BlockSpec(b2.shape, lambda i: (0, 0)))
        flat_w += [w2, b2]
    in_specs.append(pl.BlockSpec(wp.shape, lambda i: (0, 0)))
    in_specs.append(pl.BlockSpec(bp.shape, lambda i: (0, 0)))
    flat_w += [wp, bp]

    out_shape = jax.ShapeDtypeStruct((B, out_dim, HW), x.dtype)
    out_specs = pl.BlockSpec((tb, out_dim, HW), lambda i: (i, 0, 0))

    scratch_shapes = [pltpu.VMEM((tb, H + 2, W + 2, cmax), jnp.bfloat16)]

    # VMEM budget: double-buffered in/out blocks and weights + halo scratch +
    # rough f32 temporaries (cur/acc/y/z) the compiler keeps live per step.
    in_blk = rows * C * x.dtype.itemsize
    out_blk = rows * out_dim * x.dtype.itemsize
    w_bytes = sum(int(a.size) * a.dtype.itemsize for a in flat_w)
    halo = tb * (H + 2) * (W + 2) * cmax * 2
    tmps = rows * 4 * (3 * cproj + out_dim + cmax)
    need = 2 * (in_blk + out_blk + w_bytes) + halo + tmps

    out = pl.pallas_call(
        partial(_projector_kernel, cins=cins, cproj=cproj, eps=1e-5),
        out_shape=out_shape,
        grid=(B // tb,),
        in_specs=in_specs,
        out_specs=out_specs,
        scratch_shapes=scratch_shapes,
        compiler_params=pltpu.CompilerParams(
            dimension_semantics=("parallel",),   # megacore-shardable on v7x
            vmem_limit_bytes=_vmem_limit_bytes(need),
        ),
    )(xh, *flat_w)
    return out.reshape(B, out_dim, H, W)         # free reshape (HW -> H, W)


if __name__ == "__main__":
    key = jax.random.PRNGKey(0)
    kx, kp = jax.random.split(key)

    # Small shapes consistent with the module: B=2, T=16 (4x4 grid);
    # input_dim == projector_dim so the residual path is exercised.
    B, T = 2, 16
    input_dim, projector_dim, out_dim = 32, 32, 64

    x = jax.random.normal(kx, (B, T, input_dim), dtype=jnp.float32)
    params = init_params(kp, input_dim, projector_dim, out_dim, layers=2)

    fwd = jax.jit(projector_forward)
    out = jax.block_until_ready(fwd(x, params))

    assert out.shape == (B, out_dim, 4, 4), out.shape
    assert out.dtype == jnp.float32, out.dtype
    assert bool(jnp.all(jnp.isfinite(out)))
    print("KERNEL_OK")
</pallas_src>

<mosaic_0001>
module attributes {stable_mosaic.version = 11 : i64} {
  func.func @_projector_kernel(%arg0: i32, %arg1: memref<1x4x4x32xf32, #tpu.memory_space<vmem>>, %arg2: memref<288x32xbf16, #tpu.memory_space<vmem>>, %arg3: memref<1x32xf32, #tpu.memory_space<vmem>>, %arg4: memref<288x32xbf16, #tpu.memory_space<vmem>>, %arg5: memref<1x32xf32, #tpu.memory_space<vmem>>, %arg6: memref<32x64xbf16, #tpu.memory_space<vmem>>, %arg7: memref<1x64xf32, #tpu.memory_space<vmem>>, %arg8: memref<1x64x16xf32, #tpu.memory_space<vmem>>, %arg9: memref<1x6x6x32xbf16, #tpu.memory_space<vmem>>) attributes {dimension_semantics = [#tpu.dimension_semantics<parallel>], iteration_bounds = array<i64: 2>, scalar_prefetch = 0 : i64, scratch_operands = 1 : i64, tpu.core_type = #tpu.core_type<tc>, window_params = [{transform_indices = @transform_0, window_bounds = array<i64: 1, 4, 4, 32>}, {pipeline_mode = #tpu.pipeline_mode<synchronous>, transform_indices = @transform_1, window_bounds = array<i64: 288, 32>}, {pipeline_mode = #tpu.pipeline_mode<synchronous>, transform_indices = @transform_2, window_bounds = array<i64: 1, 32>}, {pipeline_mode = #tpu.pipeline_mode<synchronous>, transform_indices = @transform_3, window_bounds = array<i64: 288, 32>}, {pipeline_mode = #tpu.pipeline_mode<synchronous>, transform_indices = @transform_4, window_bounds = array<i64: 1, 32>}, {pipeline_mode = #tpu.pipeline_mode<synchronous>, transform_indices = @transform_5, window_bounds = array<i64: 32, 64>}, {pipeline_mode = #tpu.pipeline_mode<synchronous>, transform_indices = @transform_6, window_bounds = array<i64: 1, 64>}, {transform_indices = @transform_7, window_bounds = array<i64: 1, 64, 16>}]} {
    %cst = arith.constant 0.000000e+00 : bf16
    %0 = vector.broadcast %cst : bf16 to vector<1x1x6x32xbf16>
    %c0 = arith.constant 0 : index
    %c0_0 = arith.constant 0 : index
    %c0_1 = arith.constant 0 : index
    %c0_2 = arith.constant 0 : index
    %1 = vector.load %arg9[%c0, %c0_0, %c0_1, %c0_2] : memref<1x6x6x32xbf16, #tpu.memory_space<vmem>>, vector<1x1x6x32xbf16>
    tpu.vector_store %arg9[%c0, %c0_0, %c0_1, %c0_2], %0 {strides = array<i32>} : memref<1x6x6x32xbf16, #tpu.memory_space<vmem>>, vector<1x1x6x32xbf16>,
    %c0_3 = arith.constant 0 : index
    %c5 = arith.constant 5 : index
    %c0_4 = arith.constant 0 : index
    %c0_5 = arith.constant 0 : index
    %2 = vector.load %arg9[%c0_3, %c5, %c0_4, %c0_5] : memref<1x6x6x32xbf16, #tpu.memory_space<vmem>>, vector<1x1x6x32xbf16>
    tpu.vector_store %arg9[%c0_3, %c5, %c0_4, %c0_5], %0 {strides = array<i32>} : memref<1x6x6x32xbf16, #tpu.memory_space<vmem>>, vector<1x1x6x32xbf16>,
    %cst_6 = arith.constant 0.000000e+00 : bf16
    %3 = vector.broadcast %cst_6 : bf16 to vector<1x4x1x32xbf16>
    %c0_7 = arith.constant 0 : index
    %c1 = arith.constant 1 : index
    %c0_8 = arith.constant 0 : index
    %c0_9 = arith.constant 0 : index
    %4 = vector.load %arg9[%c0_7, %c1, %c0_8, %c0_9] : memref<1x6x6x32xbf16, #tpu.memory_space<vmem>>, vector<1x4x1x32xbf16>
    tpu.vector_store %arg9[%c0_7, %c1, %c0_8, %c0_9], %3 {strides = array<i32>} : memref<1x6x6x32xbf16, #tpu.memory_space<vmem>>, vector<1x4x1x32xbf16>,
    %c0_10 = arith.constant 0 : index
    %c1_11 = arith.constant 1 : index
    %c5_12 = arith.constant 5 : index
    %c0_13 = arith.constant 0 : index
    %5 = vector.load %arg9[%c0_10, %c1_11, %c5_12, %c0_13] : memref<1x6x6x32xbf16, #tpu.memory_space<vmem>>, vector<1x4x1x32xbf16>
    tpu.vector_store %arg9[%c0_10, %c1_11, %c5_12, %c0_13], %3 {strides = array<i32>} : memref<1x6x6x32xbf16, #tpu.memory_space<vmem>>, vector<1x4x1x32xbf16>,
    %c0_14 = arith.constant 0 : index
    %c0_15 = arith.constant 0 : index
    %c0_16 = arith.constant 0 : index
    %c0_17 = arith.constant 0 : index
    %6 = vector.load %arg1[%c0_14, %c0_15, %c0_16, %c0_17] : memref<1x4x4x32xf32, #tpu.memory_space<vmem>>, vector<1x4x4x32xf32>
    %7 = vector.shape_cast %6 : vector<1x4x4x32xf32> to vector<16x32xf32>
    %8 = vector.shape_cast %7 : vector<16x32xf32> to vector<1x4x4x32xf32>
    %9 = arith.truncf %8 : vector<1x4x4x32xf32> to vector<1x4x4x32xbf16>
    %c0_18 = arith.constant 0 : index
    %c1_19 = arith.constant 1 : index
    %c1_20 = arith.constant 1 : index
    %c0_21 = arith.constant 0 : index
    %10 = vector.load %arg9[%c0_18, %c1_19, %c1_20, %c0_21] : memref<1x6x6x32xbf16, #tpu.memory_space<vmem>>, vector<1x4x4x32xbf16>
    tpu.vector_store %arg9[%c0_18, %c1_19, %c1_20, %c0_21], %9 {strides = array<i32>} : memref<1x6x6x32xbf16, #tpu.memory_space<vmem>>, vector<1x4x4x32xbf16>,
    %c0_22 = arith.constant 0 : index
    %c0_23 = arith.constant 0 : index
    %c0_24 = arith.constant 0 : index
    %c0_25 = arith.constant 0 : index
    %11 = vector.load %arg9[%c0_22, %c0_23, %c0_24, %c0_25] : memref<1x6x6x32xbf16, #tpu.memory_space<vmem>>, vector<1x4x4x32xbf16>
    %12 = vector.shape_cast %11 : vector<1x4x4x32xbf16> to vector<16x32xbf16>
    %c0_26 = arith.constant 0 : index
    %c0_27 = arith.constant 0 : index
    %13 = vector.load %arg2[%c0_26, %c0_27] : memref<288x32xbf16, #tpu.memory_space<vmem>>, vector<32x32xbf16>
    %cst_28 = arith.constant dense<0.000000e+00> : vector<16x32xf32>
    %14 = tpu.matmul %12, %13, %cst_28 {dimension_numbers = #tpu.dot_dimension_numbers<[1], [0], [0], [1], [0, 0, 1, 1], [], []>} : vector<16x32xbf16>, vector<32x32xbf16>, vector<16x32xf32> -> vector<16x32xf32>
    %c0_29 = arith.constant 0 : index
    %c0_30 = arith.constant 0 : index
    %c1_31 = arith.constant 1 : index
    %c0_32 = arith.constant 0 : index
    %15 = vector.load %arg9[%c0_29, %c0_30, %c1_31, %c0_32] : memref<1x6x6x32xbf16, #tpu.memory_space<vmem>>, vector<1x4x4x32xbf16>
    %16 = vector.shape_cast %15 : vector<1x4x4x32xbf16> to vector<16x32xbf16>
    %c32 = arith.constant 32 : index
    %c0_33 = arith.constant 0 : index
    %17 = vector.load %arg2[%c32, %c0_33] : memref<288x32xbf16, #tpu.memory_space<vmem>>, vector<32x32xbf16>
    %cst_34 = arith.constant dense<0.000000e+00> : vector<16x32xf32>
    %18 = tpu.matmul %16, %17, %cst_34 {dimension_numbers = #tpu.dot_dimension_numbers<[1], [0], [0], [1], [0, 0, 1, 1], [], []>} : vector<16x32xbf16>, vector<32x32xbf16>, vector<16x32xf32> -> vector<16x32xf32>
    %19 = arith.addf %14, %18 : vector<16x32xf32>
    %c0_35 = arith.constant 0 : index
    %c0_36 = arith.constant 0 : index
    %c2 = arith.constant 2 : index
    %c0_37 = arith.constant 0 : index
    %20 = vector.load %arg9[%c0_35, %c0_36, %c2, %c0_37] : memref<1x6x6x32xbf16, #tpu.memory_space<vmem>>, vector<1x4x4x32xbf16>
    %21 = vector.shape_cast %20 : vector<1x4x4x32xbf16> to vector<16x32xbf16>
    %c64 = arith.constant 64 : index
    %c0_38 = arith.constant 0 : index
    %22 = vector.load %arg2[%c64, %c0_38] : memref<288x32xbf16, #tpu.memory_space<vmem>>, vector<32x32xbf16>
    %cst_39 = arith.constant dense<0.000000e+00> : vector<16x32xf32>
    %23 = tpu.matmul %21, %22, %cst_39 {dimension_numbers = #tpu.dot_dimension_numbers<[1], [0], [0], [1], [0, 0, 1, 1], [], []>} : vector<16x32xbf16>, vector<32x32xbf16>, vector<16x32xf32> -> vector<16x32xf32>
    %24 = arith.addf %19, %23 : vector<16x32xf32>
    %c0_40 = arith.constant 0 : index
    %c1_41 = arith.constant 1 : index
    %c0_42 = arith.constant 0 : index
    %c0_43 = arith.constant 0 : index
    %25 = vector.load %arg9[%c0_40, %c1_41, %c0_42, %c0_43] : memref<1x6x6x32xbf16, #tpu.memory_space<vmem>>, vector<1x4x4x32xbf16>
    %26 = vector.shape_cast %25 : vector<1x4x4x32xbf16> to vector<16x32xbf16>
    %c96 = arith.constant 96 : index
    %c0_44 = arith.constant 0 : index
    %27 = vector.load %arg2[%c96, %c0_44] : memref<288x32xbf16, #tpu.memory_space<vmem>>, vector<32x32xbf16>
    %cst_45 = arith.constant dense<0.000000e+00> : vector<16x32xf32>
    %28 = tpu.matmul %26, %27, %cst_45 {dimension_numbers = #tpu.dot_dimension_numbers<[1], [0], [0], [1], [0, 0, 1, 1], [], []>} : vector<16x32xbf16>, vector<32x32xbf16>, vector<16x32xf32> -> vector<16x32xf32>
    %29 = arith.addf %24, %28 : vector<16x32xf32>
    %c0_46 = arith.constant 0 : index
    %c1_47 = arith.constant 1 : index
    %c1_48 = arith.constant 1 : index
    %c0_49 = arith.constant 0 : index
    %30 = vector.load %arg9[%c0_46, %c1_47, %c1_48, %c0_49] : memref<1x6x6x32xbf16, #tpu.memory_space<vmem>>, vector<1x4x4x32xbf16>
    %31 = vector.shape_cast %30 : vector<1x4x4x32xbf16> to vector<16x32xbf16>
    %c128 = arith.constant 128 : index
    %c0_50 = arith.constant 0 : index
    %32 = vector.load %arg2[%c128, %c0_50] : memref<288x32xbf16, #tpu.memory_space<vmem>>, vector<32x32xbf16>
    %cst_51 = arith.constant dense<0.000000e+00> : vector<16x32xf32>
    %33 = tpu.matmul %31, %32, %cst_51 {dimension_numbers = #tpu.dot_dimension_numbers<[1], [0], [0], [1], [0, 0, 1, 1], [], []>} : vector<16x32xbf16>, vector<32x32xbf16>, vector<16x32xf32> -> vector<16x32xf32>
    %34 = arith.addf %29, %33 : vector<16x32xf32>
    %c0_52 = arith.constant 0 : index
    %c1_53 = arith.constant 1 : index
    %c2_54 = arith.constant 2 : index
    %c0_55 = arith.constant 0 : index
    %35 = vector.load %arg9[%c0_52, %c1_53, %c2_54, %c0_55] : memref<1x6x6x32xbf16, #tpu.memory_space<vmem>>, vector<1x4x4x32xbf16>
    %36 = vector.shape_cast %35 : vector<1x4x4x32xbf16> to vector<16x32xbf16>
    %c160 = arith.constant 160 : index
    %c0_56 = arith.constant 0 : index
    %37 = vector.load %arg2[%c160, %c0_56] : memref<288x32xbf16, #tpu.memory_space<vmem>>, vector<32x32xbf16>
    %cst_57 = arith.constant dense<0.000000e+00> : vector<16x32xf32>
    %38 = tpu.matmul %36, %37, %cst_57 {dimension_numbers = #tpu.dot_dimension_numbers<[1], [0], [0], [1], [0, 0, 1, 1], [], []>} : vector<16x32xbf16>, vector<32x32xbf16>, vector<16x32xf32> -> vector<16x32xf32>
    %39 = arith.addf %34, %38 : vector<16x32xf32>
    %c0_58 = arith.constant 0 : index
    %c2_59 = arith.constant 2 : index
    %c0_60 = arith.constant 0 : index
    %c0_61 = arith.constant 0 : index
    %40 = vector.load %arg9[%c0_58, %c2_59, %c0_60, %c0_61] : memref<1x6x6x32xbf16, #tpu.memory_space<vmem>>, vector<1x4x4x32xbf16>
    %41 = vector.shape_cast %40 : vector<1x4x4x32xbf16> to vector<16x32xbf16>
    %c192 = arith.constant 192 : index
    %c0_62 = arith.constant 0 : index
    %42 = vector.load %arg2[%c192, %c0_62] : memref<288x32xbf16, #tpu.memory_space<vmem>>, vector<32x32xbf16>
    %cst_63 = arith.constant dense<0.000000e+00> : vector<16x32xf32>
    %43 = tpu.matmul %41, %42, %cst_63 {dimension_numbers = #tpu.dot_dimension_numbers<[1], [0], [0], [1], [0, 0, 1, 1], [], []>} : vector<16x32xbf16>, vector<32x32xbf16>, vector<16x32xf32> -> vector<16x32xf32>
    %44 = arith.addf %39, %43 : vector<16x32xf32>
    %c0_64 = arith.constant 0 : index
    %c2_65 = arith.constant 2 : index
    %c1_66 = arith.constant 1 : index
    %c0_67 = arith.constant 0 : index
    %45 = vector.load %arg9[%c0_64, %c2_65, %c1_66, %c0_67] : memref<1x6x6x32xbf16, #tpu.memory_space<vmem>>, vector<1x4x4x32xbf16>
    %46 = vector.shape_cast %45 : vector<1x4x4x32xbf16> to vector<16x32xbf16>
    %c224 = arith.constant 224 : index
    %c0_68 = arith.constant 0 : index
    %47 = vector.load %arg2[%c224, %c0_68] : memref<288x32xbf16, #tpu.memory_space<vmem>>, vector<32x32xbf16>
    %cst_69 = arith.constant dense<0.000000e+00> : vector<16x32xf32>
    %48 = tpu.matmul %46, %47, %cst_69 {dimension_numbers = #tpu.dot_dimension_numbers<[1], [0], [0], [1], [0, 0, 1, 1], [], []>} : vector<16x32xbf16>, vector<32x32xbf16>, vector<16x32xf32> -> vector<16x32xf32>
    %49 = arith.addf %44, %48 : vector<16x32xf32>
    %c0_70 = arith.constant 0 : index
    %c2_71 = arith.constant 2 : index
    %c2_72 = arith.constant 2 : index
    %c0_73 = arith.constant 0 : index
    %50 = vector.load %arg9[%c0_70, %c2_71, %c2_72, %c0_73] : memref<1x6x6x32xbf16, #tpu.memory_space<vmem>>, vector<1x4x4x32xbf16>
    %51 = vector.shape_cast %50 : vector<1x4x4x32xbf16> to vector<16x32xbf16>
    %c256 = arith.constant 256 : index
    %c0_74 = arith.constant 0 : index
    %52 = vector.load %arg2[%c256, %c0_74] : memref<288x32xbf16, #tpu.memory_space<vmem>>, vector<32x32xbf16>
    %cst_75 = arith.constant dense<0.000000e+00> : vector<16x32xf32>
    %53 = tpu.matmul %51, %52, %cst_75 {dimension_numbers = #tpu.dot_dimension_numbers<[1], [0], [0], [1], [0, 0, 1, 1], [], []>} : vector<16x32xbf16>, vector<32x32xbf16>, vector<16x32xf32> -> vector<16x32xf32>
    %54 = arith.addf %49, %53 : vector<16x32xf32>
    %c0_76 = arith.constant 0 : index
    %c0_77 = arith.constant 0 : index
    %55 = vector.load %arg3[%c0_76, %c0_77] : memref<1x32xf32, #tpu.memory_space<vmem>>, vector<1x32xf32>
    %56 = vector.broadcast %55 : vector<1x32xf32> to vector<16x32xf32>
    %57 = arith.addf %54, %56 : vector<16x32xf32>
    %cst_78 = arith.constant dense<0.000000e+00> : vector<16xf32>
    %58 = vector.multi_reduction <add>, %57, %cst_78 [1] : vector<16x32xf32> to vector<16xf32>
    %59 = vector.shape_cast %58 : vector<16xf32> to vector<16x1xf32>
    %cst_79 = arith.constant 3.200000e+01 : f32
    %60 = vector.broadcast %cst_79 : f32 to vector<16x1xf32>
    %61 = arith.divf %59, %60 : vector<16x1xf32>
    %62 = vector.broadcast %61 : vector<16x1xf32> to vector<16x32xf32>
    %63 = arith.subf %57, %62 : vector<16x32xf32>
    %64 = arith.mulf %63, %63 : vector<16x32xf32>
    %cst_80 = arith.constant dense<0.000000e+00> : vector<16xf32>
    %65 = vector.multi_reduction <add>, %64, %cst_80 [1] : vector<16x32xf32> to vector<16xf32>
    %66 = vector.shape_cast %65 : vector<16xf32> to vector<16x1xf32>
    %cst_81 = arith.constant 3.200000e+01 : f32
    %67 = vector.broadcast %cst_81 : f32 to vector<16x1xf32>
    %68 = arith.divf %66, %67 : vector<16x1xf32>
    %cst_82 = arith.constant 9.99999974E-6 : f32
    %69 = vector.broadcast %cst_82 : f32 to vector<16x1xf32>
    %70 = arith.addf %68, %69 : vector<16x1xf32>
    %71 = math.rsqrt %70 : vector<16x1xf32>
    %72 = vector.broadcast %71 : vector<16x1xf32> to vector<16x32xf32>
    %73 = arith.mulf %63, %72 : vector<16x32xf32>
    %cst_83 = arith.constant 5.000000e-01 : f32
    %74 = vector.broadcast %cst_83 : f32 to vector<16x32xf32>
    %75 = arith.mulf %74, %73 : vector<16x32xf32>
    %cst_84 = arith.constant 0.707106769 : f32
    %76 = vector.broadcast %cst_84 : f32 to vector<16x32xf32>
    %77 = arith.mulf %73, %76 : vector<16x32xf32>
    %78 = math.erf %77 : vector<16x32xf32>
    %cst_85 = arith.constant 1.000000e+00 : f32
    %79 = vector.broadcast %cst_85 : f32 to vector<16x32xf32>
    %80 = arith.addf %79, %78 : vector<16x32xf32>
    %81 = arith.mulf %75, %80 : vector<16x32xf32>
    %82 = arith.addf %81, %7 : vector<16x32xf32>
    %83 = vector.shape_cast %82 : vector<16x32xf32> to vector<1x4x4x32xf32>
    %84 = arith.truncf %83 : vector<1x4x4x32xf32> to vector<1x4x4x32xbf16>
    %c0_86 = arith.constant 0 : index
    %c1_87 = arith.constant 1 : index
    %c1_88 = arith.constant 1 : index
    %c0_89 = arith.constant 0 : index
    %85 = vector.load %arg9[%c0_86, %c1_87, %c1_88, %c0_89] : memref<1x6x6x32xbf16, #tpu.memory_space<vmem>>, vector<1x4x4x32xbf16>
    tpu.vector_store %arg9[%c0_86, %c1_87, %c1_88, %c0_89], %84 {strides = array<i32>} : memref<1x6x6x32xbf16, #tpu.memory_space<vmem>>, vector<1x4x4x32xbf16>,
    %c0_90 = arith.constant 0 : index
    %c0_91 = arith.constant 0 : index
    %c0_92 = arith.constant 0 : index
    %c0_93 = arith.constant 0 : index
    %86 = vector.load %arg9[%c0_90, %c0_91, %c0_92, %c0_93] : memref<1x6x6x32xbf16, #tpu.memory_space<vmem>>, vector<1x4x4x32xbf16>
    %87 = vector.shape_cast %86 : vector<1x4x4x32xbf16> to vector<16x32xbf16>
    %c0_94 = arith.constant 0 : index
    %c0_95 = arith.constant 0 : index
    %88 = vector.load %arg4[%c0_94, %c0_95] : memref<288x32xbf16, #tpu.memory_space<vmem>>, vector<32x32xbf16>
    %cst_96 = arith.constant dense<0.000000e+00> : vector<16x32xf32>
    %89 = tpu.matmul %87, %88, %cst_96 {dimension_numbers = #tpu.dot_dimension_numbers<[1], [0], [0], [1], [0, 0, 1, 1], [], []>} : vector<16x32xbf16>, vector<32x32xbf16>, vector<16x32xf32> -> vector<16x32xf32>
    %c0_97 = arith.constant 0 : index
    %c0_98 = arith.constant 0 : index
    %c1_99 = arith.constant 1 : index
    %c0_100 = arith.constant 0 : index
    %90 = vector.load %arg9[%c0_97, %c0_98, %c1_99, %c0_100] : memref<1x6x6x32xbf16, #tpu.memory_space<vmem>>, vector<1x4x4x32xbf16>
    %91 = vector.shape_cast %90 : vector<1x4x4x32xbf16> to vector<16x32xbf16>
    %c32_101 = arith.constant 32 : index
    %c0_102 = arith.constant 0 : index
    %92 = vector.load %arg4[%c32_101, %c0_102] : memref<288x32xbf16, #tpu.memory_space<vmem>>, vector<32x32xbf16>
    %cst_103 = arith.constant dense<0.000000e+00> : vector<16x32xf32>
    %93 = tpu.matmul %91, %92, %cst_103 {dimension_numbers = #tpu.dot_dimension_numbers<[1], [0], [0], [1], [0, 0, 1, 1], [], []>} : vector<16x32xbf16>, vector<32x32xbf16>, vector<16x32xf32> -> vector<16x32xf32>
    %94 = arith.addf %89, %93 : vector<16x32xf32>
    %c0_104 = arith.constant 0 : index
    %c0_105 = arith.constant 0 : index
    %c2_106 = arith.constant 2 : index
    %c0_107 = arith.constant 0 : index
    %95 = vector.load %arg9[%c0_104, %c0_105, %c2_106, %c0_107] : memref<1x6x6x32xbf16, #tpu.memory_space<vmem>>, vector<1x4x4x32xbf16>
    %96 = vector.shape_cast %95 : vector<1x4x4x32xbf16> to vector<16x32xbf16>
    %c64_108 = arith.constant 64 : index
    %c0_109 = arith.constant 0 : index
    %97 = vector.load %arg4[%c64_108, %c0_109] : memref<288x32xbf16, #tpu.memory_space<vmem>>, vector<32x32xbf16>
    %cst_110 = arith.constant dense<0.000000e+00> : vector<16x32xf32>
    %98 = tpu.matmul %96, %97, %cst_110 {dimension_numbers = #tpu.dot_dimension_numbers<[1], [0], [0], [1], [0, 0, 1, 1], [], []>} : vector<16x32xbf16>, vector<32x32xbf16>, vector<16x32xf32> -> vector<16x32xf32>
    %99 = arith.addf %94, %98 : vector<16x32xf32>
    %c0_111 = arith.constant 0 : index
    %c1_112 = arith.constant 1 : index
    %c0_113 = arith.constant 0 : index
    %c0_114 = arith.constant 0 : index
    %100 = vector.load %arg9[%c0_111, %c1_112, %c0_113, %c0_114] : memref<1x6x6x32xbf16, #tpu.memory_space<vmem>>, vector<1x4x4x32xbf16>
    %101 = vector.shape_cast %100 : vector<1x4x4x32xbf16> to vector<16x32xbf16>
    %c96_115 = arith.constant 96 : index
    %c0_116 = arith.constant 0 : index
    %102 = vector.load %arg4[%c96_115, %c0_116] : memref<288x32xbf16, #tpu.memory_space<vmem>>, vector<32x32xbf16>
    %cst_117 = arith.constant dense<0.000000e+00> : vector<16x32xf32>
    %103 = tpu.matmul %101, %102, %cst_117 {dimension_numbers = #tpu.dot_dimension_numbers<[1], [0], [0], [1], [0, 0, 1, 1], [], []>} : vector<16x32xbf16>, vector<32x32xbf16>, vector<16x32xf32> -> vector<16x32xf32>
    %104 = arith.addf %99, %103 : vector<16x32xf32>
    %c0_118 = arith.constant 0 : index
    %c1_119 = arith.constant 1 : index
    %c1_120 = arith.constant 1 : index
    %c0_121 = arith.constant 0 : index
    %105 = vector.load %arg9[%c0_118, %c1_119, %c1_120, %c0_121] : memref<1x6x6x32xbf16, #tpu.memory_space<vmem>>, vector<1x4x4x32xbf16>
    %106 = vector.shape_cast %105 : vector<1x4x4x32xbf16> to vector<16x32xbf16>
    %c128_122 = arith.constant 128 : index
    %c0_123 = arith.constant 0 : index
    %107 = vector.load %arg4[%c128_122, %c0_123] : memref<288x32xbf16, #tpu.memory_space<vmem>>, vector<32x32xbf16>
    %cst_124 = arith.constant dense<0.000000e+00> : vector<16x32xf32>
    %108 = tpu.matmul %106, %107, %cst_124 {dimension_numbers = #tpu.dot_dimension_numbers<[1], [0], [0], [1], [0, 0, 1, 1], [], []>} : vector<16x32xbf16>, vector<32x32xbf16>, vector<16x32xf32> -> vector<16x32xf32>
    %109 = arith.addf %104, %108 : vector<16x32xf32>
    %c0_125 = arith.constant 0 : index
    %c1_126 = arith.constant 1 : index
    %c2_127 = arith.constant 2 : index
    %c0_128 = arith.constant 0 : index
    %110 = vector.load %arg9[%c0_125, %c1_126, %c2_127, %c0_128] : memref<1x6x6x32xbf16, #tpu.memory_space<vmem>>, vector<1x4x4x32xbf16>
    %111 = vector.shape_cast %110 : vector<1x4x4x32xbf16> to vector<16x32xbf16>
    %c160_129 = arith.constant 160 : index
    %c0_130 = arith.constant 0 : index
    %112 = vector.load %arg4[%c160_129, %c0_130] : memref<288x32xbf16, #tpu.memory_space<vmem>>, vector<32x32xbf16>
    %cst_131 = arith.constant dense<0.000000e+00> : vector<16x32xf32>
    %113 = tpu.matmul %111, %112, %cst_131 {dimension_numbers = #tpu.dot_dimension_numbers<[1], [0], [0], [1], [0, 0, 1, 1], [], []>} : vector<16x32xbf16>, vector<32x32xbf16>, vector<16x32xf32> -> vector<16x32xf32>
    %114 = arith.addf %109, %113 : vector<16x32xf32>
    %c0_132 = arith.constant 0 : index
    %c2_133 = arith.constant 2 : index
    %c0_134 = arith.constant 0 : index
    %c0_135 = arith.constant 0 : index
    %115 = vector.load %arg9[%c0_132, %c2_133, %c0_134, %c0_135] : memref<1x6x6x32xbf16, #tpu.memory_space<vmem>>, vector<1x4x4x32xbf16>
    %116 = vector.shape_cast %115 : vector<1x4x4x32xbf16> to vector<16x32xbf16>
    %c192_136 = arith.constant 192 : index
    %c0_137 = arith.constant 0 : index
    %117 = vector.load %arg4[%c192_136, %c0_137] : memref<288x32xbf16, #tpu.memory_space<vmem>>, vector<32x32xbf16>
    %cst_138 = arith.constant dense<0.000000e+00> : vector<16x32xf32>
    %118 = tpu.matmul %116, %117, %cst_138 {dimension_numbers = #tpu.dot_dimension_numbers<[1], [0], [0], [1], [0, 0, 1, 1], [], []>} : vector<16x32xbf16>, vector<32x32xbf16>, vector<16x32xf32> -> vector<16x32xf32>
    %119 = arith.addf %114, %118 : vector<16x32xf32>
    %c0_139 = arith.constant 0 : index
    %c2_140 = arith.constant 2 : index
    %c1_141 = arith.constant 1 : index
    %c0_142 = arith.constant 0 : index
    %120 = vector.load %arg9[%c0_139, %c2_140, %c1_141, %c0_142] : memref<1x6x6x32xbf16, #tpu.memory_space<vmem>>, vector<1x4x4x32xbf16>
    %121 = vector.shape_cast %120 : vector<1x4x4x32xbf16> to vector<16x32xbf16>
    %c224_143 = arith.constant 224 : index
    %c0_144 = arith.constant 0 : index
    %122 = vector.load %arg4[%c224_143, %c0_144] : memref<288x32xbf16, #tpu.memory_space<vmem>>, vector<32x32xbf16>
    %cst_145 = arith.constant dense<0.000000e+00> : vector<16x32xf32>
    %123 = tpu.matmul %121, %122, %cst_145 {dimension_numbers = #tpu.dot_dimension_numbers<[1], [0], [0], [1], [0, 0, 1, 1], [], []>} : vector<16x32xbf16>, vector<32x32xbf16>, vector<16x32xf32> -> vector<16x32xf32>
    %124 = arith.addf %119, %123 : vector<16x32xf32>
    %c0_146 = arith.constant 0 : index
    %c2_147 = arith.constant 2 : index
    %c2_148 = arith.constant 2 : index
    %c0_149 = arith.constant 0 : index
    %125 = vector.load %arg9[%c0_146, %c2_147, %c2_148, %c0_149] : memref<1x6x6x32xbf16, #tpu.memory_space<vmem>>, vector<1x4x4x32xbf16>
    %126 = vector.shape_cast %125 : vector<1x4x4x32xbf16> to vector<16x32xbf16>
    %c256_150 = arith.constant 256 : index
    %c0_151 = arith.constant 0 : index
    %127 = vector.load %arg4[%c256_150, %c0_151] : memref<288x32xbf16, #tpu.memory_space<vmem>>, vector<32x32xbf16>
    %cst_152 = arith.constant dense<0.000000e+00> : vector<16x32xf32>
    %128 = tpu.matmul %126, %127, %cst_152 {dimension_numbers = #tpu.dot_dimension_numbers<[1], [0], [0], [1], [0, 0, 1, 1], [], []>} : vector<16x32xbf16>, vector<32x32xbf16>, vector<16x32xf32> -> vector<16x32xf32>
    %129 = arith.addf %124, %128 : vector<16x32xf32>
    %c0_153 = arith.constant 0 : index
    %c0_154 = arith.constant 0 : index
    %130 = vector.load %arg5[%c0_153, %c0_154] : memref<1x32xf32, #tpu.memory_space<vmem>>, vector<1x32xf32>
    %131 = vector.broadcast %130 : vector<1x32xf32> to vector<16x32xf32>
    %132 = arith.addf %129, %131 : vector<16x32xf32>
    %cst_155 = arith.constant dense<0.000000e+00> : vector<16xf32>
    %133 = vector.multi_reduction <add>, %132, %cst_155 [1] : vector<16x32xf32> to vector<16xf32>
    %134 = vector.shape_cast %133 : vector<16xf32> to vector<16x1xf32>
    %cst_156 = arith.constant 3.200000e+01 : f32
    %135 = vector.broadcast %cst_156 : f32 to vector<16x1xf32>
    %136 = arith.divf %134, %135 : vector<16x1xf32>
    %137 = vector.broadcast %136 : vector<16x1xf32> to vector<16x32xf32>
    %138 = arith.subf %132, %137 : vector<16x32xf32>
    %139 = arith.mulf %138, %138 : vector<16x32xf32>
    %cst_157 = arith.constant dense<0.000000e+00> : vector<16xf32>
    %140 = vector.multi_reduction <add>, %139, %cst_157 [1] : vector<16x32xf32> to vector<16xf32>
    %141 = vector.shape_cast %140 : vector<16xf32> to vector<16x1xf32>
    %cst_158 = arith.constant 3.200000e+01 : f32
    %142 = vector.broadcast %cst_158 : f32 to vector<16x1xf32>
    %143 = arith.divf %141, %142 : vector<16x1xf32>
    %cst_159 = arith.constant 9.99999974E-6 : f32
    %144 = vector.broadcast %cst_159 : f32 to vector<16x1xf32>
    %145 = arith.addf %143, %144 : vector<16x1xf32>
    %146 = math.rsqrt %145 : vector<16x1xf32>
    %147 = vector.broadcast %146 : vector<16x1xf32> to vector<16x32xf32>
    %148 = arith.mulf %138, %147 : vector<16x32xf32>
    %cst_160 = arith.constant 5.000000e-01 : f32
    %149 = vector.broadcast %cst_160 : f32 to vector<16x32xf32>
    %150 = arith.mulf %149, %148 : vector<16x32xf32>
    %cst_161 = arith.constant 0.707106769 : f32
    %151 = vector.broadcast %cst_161 : f32 to vector<16x32xf32>
    %152 = arith.mulf %148, %151 : vector<16x32xf32>
    %153 = math.erf %152 : vector<16x32xf32>
    %cst_162 = arith.constant 1.000000e+00 : f32
    %154 = vector.broadcast %cst_162 : f32 to vector<16x32xf32>
    %155 = arith.addf %154, %153 : vector<16x32xf32>
    %156 = arith.mulf %150, %155 : vector<16x32xf32>
    %157 = arith.addf %156, %82 : vector<16x32xf32>
    %158 = arith.truncf %157 : vector<16x32xf32> to vector<16x32xbf16>
    %c0_163 = arith.constant 0 : index
    %c0_164 = arith.constant 0 : index
    %159 = vector.load %arg6[%c0_163, %c0_164] : memref<32x64xbf16, #tpu.memory_space<vmem>>, vector<32x64xbf16>
    %cst_165 = arith.constant dense<0.000000e+00> : vector<16x64xf32>
    %160 = tpu.matmul %158, %159, %cst_165 {dimension_numbers = #tpu.dot_dimension_numbers<[1], [0], [0], [1], [0, 0, 1, 1], [], []>} : vector<16x32xbf16>, vector<32x64xbf16>, vector<16x64xf32> -> vector<16x64xf32>
    %c0_166 = arith.constant 0 : index
    %c0_167 = arith.constant 0 : index
    %161 = vector.load %arg7[%c0_166, %c0_167] : memref<1x64xf32, #tpu.memory_space<vmem>>, vector<1x64xf32>
    %162 = vector.broadcast %161 : vector<1x64xf32> to vector<16x64xf32>
    %163 = arith.addf %160, %162 : vector<16x64xf32>
    %164 = vector.shape_cast %163 : vector<16x64xf32> to vector<1x16x64xf32>
    %165 = vector.shape_cast %164 : vector<1x16x64xf32> to vector<16x64xf32>
    %166 = tpu.transpose %165, [1, 0] : vector<16x64xf32> -> vector<64x16xf32>
    %c0_168 = arith.constant 0 : index
    %c0_169 = arith.constant 0 : index
    %c0_170 = arith.constant 0 : index
    %167 = vector.load %arg8[%c0_168, %c0_169, %c0_170] : memref<1x64x16xf32, #tpu.memory_space<vmem>>, vector<1x64x16xf32>
    %168 = vector.shape_cast %167 : vector<1x64x16xf32> to vector<64x16xf32>
    %169 = vector.shape_cast %166 : vector<64x16xf32> to vector<1x64x16xf32>
    tpu.vector_store %arg8[%c0_168, %c0_169, %c0_170], %169 {strides = array<i32>} : memref<1x64x16xf32, #tpu.memory_space<vmem>>, vector<1x64x16xf32>,
    return
  }
  func.func @transform_0(%arg0: i32) -> (i32, i32, i32, i32) {
    %c0_i32 = arith.constant 0 : i32
    %c0_i32_0 = arith.constant 0 : i32
    %c0_i32_1 = arith.constant 0 : i32
    %c0_i32_2 = arith.constant 0 : i32
    return %arg0, %c0_i32, %c0_i32_0, %c0_i32_1 : i32, i32, i32, i32
  }
  func.func @transform_1(%arg0: i32) -> (i32, i32) {
    %c0_i32 = arith.constant 0 : i32
    %c0_i32_0 = arith.constant 0 : i32
    %c0_i32_1 = arith.constant 0 : i32
    return %c0_i32, %c0_i32_0 : i32, i32
  }
  func.func @transform_2(%arg0: i32) -> (i32, i32) {
    %c0_i32 = arith.constant 0 : i32
    %c0_i32_0 = arith.constant 0 : i32
    %c0_i32_1 = arith.constant 0 : i32
    return %c0_i32, %c0_i32_0 : i32, i32
  }
  func.func @transform_3(%arg0: i32) -> (i32, i32) {
    %c0_i32 = arith.constant 0 : i32
    %c0_i32_0 = arith.constant 0 : i32
    %c0_i32_1 = arith.constant 0 : i32
    return %c0_i32, %c0_i32_0 : i32, i32
  }
  func.func @transform_4(%arg0: i32) -> (i32, i32) {
    %c0_i32 = arith.constant 0 : i32
    %c0_i32_0 = arith.constant 0 : i32
    %c0_i32_1 = arith.constant 0 : i32
    return %c0_i32, %c0_i32_0 : i32, i32
  }
  func.func @transform_5(%arg0: i32) -> (i32, i32) {
    %c0_i32 = arith.constant 0 : i32
    %c0_i32_0 = arith.constant 0 : i32
    %c0_i32_1 = arith.constant 0 : i32
    return %c0_i32, %c0_i32_0 : i32, i32
  }
  func.func @transform_6(%arg0: i32) -> (i32, i32) {
    %c0_i32 = arith.constant 0 : i32
    %c0_i32_0 = arith.constant 0 : i32
    %c0_i32_1 = arith.constant 0 : i32
    return %c0_i32, %c0_i32_0 : i32, i32
  }
  func.func @transform_7(%arg0: i32) -> (i32, i32, i32) {
    %c0_i32 = arith.constant 0 : i32
    %c0_i32_0 = arith.constant 0 : i32
    %c0_i32_1 = arith.constant 0 : i32
    return %arg0, %c0_i32, %c0_i32_0 : i32, i32, i32
  }
}

</mosaic_0001>

<llo_original>
// kernel: projector_forward.1
$region0: #{projector_forward.1}
  #allocation0 [shape = 'u32[]', space=smem, size = 0x4, offset = 0x4, fixed_abs, tag = 'smem constant byte address 0x4 - core index']
  #allocation1 [shape = 'u32[144,128]{1,0:T(1,128)}', space=vmem, size = 0x12000, scoped, tag = 'internal scratch']
  #allocation2 [shape = 'bf16[1,6,6,32]{3,2,1,0:T(8,128)(2,1)}', space=vmem, size = 0x3000, scoped, tag = 'scratch operand']
  %s0 = inlined_call_operand.vmem [shape: f32[2,4,4,32], index: 0, kind: input, shape index: {}]
  %s1 = inlined_call_operand.vmem [shape: bf16[288,32], index: 1, kind: input, shape index: {}]
  %s2 = inlined_call_operand.vmem [shape: f32[1,32], index: 2, kind: input, shape index: {}]
  %s3 = inlined_call_operand.vmem [shape: bf16[288,32], index: 3, kind: input, shape index: {}]
  %s4 = inlined_call_operand.vmem [shape: f32[1,32], index: 4, kind: input, shape index: {}]
  %s5 = inlined_call_operand.vmem [shape: bf16[32,64], index: 5, kind: input, shape index: {}]
  %s6 = inlined_call_operand.vmem [shape: f32[1,64], index: 6, kind: input, shape index: {}]
  %s7 = inlined_call_operand.vmem [shape: f32[2,64,16], index: 7, kind: output, shape index: {}]
  %s8 = sld [smem:[#allocation0]]
  $region61: #{projector_forward.1} parent=0
    _
  %s10 = ssub.s32 1, %s8
  %s11 = scalar_select 0, %s10, %s8
  loop: start=0, step=1, limit=4
  $region2: #{projector_forward.1} parent=0 // loop_pre_header
    _
  $region3: #{projector_forward.1} parent=0 // loop_header
    %s13 = sphi 0, %s17
    %p14 = scmp.ge.s32.totalorder %s13, 4
    %s23 = sphi 0, %s25
    %s26 = sphi 0, %s23
    %s27 = sphi 0, %s26
    %s43 = sphi 0, %s27
    %s47 = sphi 0, %s47
    %s49 = sphi 0, %s47
    %s50 = sphi 0, %s49
    %s64 = sphi 0, %s50
    %s68 = sphi 0, %s68
    %s70 = sphi 0, %s68
    %s71 = sphi 0, %s70
    %s85 = sphi 0, %s71
    %s89 = sphi 0, %s89
    %s91 = sphi 0, %s89
    %s92 = sphi 0, %s91
    %s106 = sphi 0, %s92
    %s110 = sphi 0, %s110
    %s112 = sphi 0, %s110
    %s113 = sphi 0, %s112
    %s127 = sphi 0, %s113
    %s131 = sphi 0, %s131
    %s133 = sphi 0, %s131
    %s134 = sphi 0, %s133
    %s148 = sphi 0, %s134
    %s152 = sphi 0, %s152
    %s154 = sphi 0, %s152
    %s155 = sphi 0, %s154
    %s169 = sphi 0, %s155
    %s175 = sphi 0, %s177
    %s178 = sphi 0, %s175
    %s179 = sphi 0, %s178
    %s195 = sphi 0, %s179
  $region4: #{projector_forward.1} parent=0 // loop_header_branch
    %16 = sbr.rel (%p14) target = $region8
  $region5: #{projector_forward.1} parent=0 // loop_body
    %s18 = ssub.s32 %s13, 1
    %s19 = ssub.s32 %s13, 2
    %s20 = sadd.s32 %s13, 1
    %s21 = ssub.s32 %s13, %s20
    %p22 = scmp.eq.s32.totalorder %s21, 0
    %s24 = sadd.s32 %s23, 1
    %s25 = scalar_select %p22, %s23, %s24
    %p28 = pneg %p22
    %p29 = scmp.eq.s32.totalorder %s13, 1
    %p30 = por %p28, %p29
    %p31 = scmp.ne.s32.totalorder %s23, %s26
    %p32 = scmp.eq.s32.totalorder %s13, 0
    %p33 = por %p31, %p32
    %p34 = scmp.ne.s32.totalorder %s23, %s26
    %p35 = scmp.eq.s32.totalorder %s18, 1
    %p36 = por %p34, %p35
    %p37 = scmp.ne.s32.totalorder %s26, %s27
    %p38 = scmp.eq.s32.totalorder %s18, 0
    %p39 = por %p37, %p38
    %p40 = scmp.ne.s32.totalorder %s26, %s27
    %p41 = scmp.eq.s32.totalorder %s19, 1
    %p42 = por %p40, %p41
    %p44 = scmp.ne.s32.totalorder %s27, %s43
    %p45 = scmp.eq.s32.totalorder %s19, 0
    %p46 = por %p44, %p45
    %s48 = sadd.s32 %s47, 1
    %p51 = scmp.eq.s32.totalorder %s13, 1
    %p52 = scmp.ne.s32.totalorder %s47, %s49
    %p53 = scmp.eq.s32.totalorder %s13, 0
    %p54 = por %p52, %p53
    %p55 = scmp.ne.s32.totalorder %s47, %s49
    %p56 = scmp.eq.s32.totalorder %s18, 1
    %p57 = por %p55, %p56
    %p58 = scmp.ne.s32.totalorder %s49, %s50
    %p59 = scmp.eq.s32.totalorder %s18, 0
    %p60 = por %p58, %p59
    %p61 = scmp.ne.s32.totalorder %s49, %s50
    %p62 = scmp.eq.s32.totalorder %s19, 1
    %p63 = por %p61, %p62
    %p65 = scmp.ne.s32.totalorder %s50, %s64
    %p66 = scmp.eq.s32.totalorder %s19, 0
    %p67 = por %p65, %p66
    %s69 = sadd.s32 %s68, 1
    %p72 = scmp.eq.s32.totalorder %s13, 1
    %p73 = scmp.ne.s32.totalorder %s68, %s70
    %p74 = scmp.eq.s32.totalorder %s13, 0
    %p75 = por %p73, %p74
    %p76 = scmp.ne.s32.totalorder %s68, %s70
    %p77 = scmp.eq.s32.totalorder %s18, 1
    %p78 = por %p76, %p77
    %p79 = scmp.ne.s32.totalorder %s70, %s71
    %p80 = scmp.eq.s32.totalorder %s18, 0
    %p81 = por %p79, %p80
    %p82 = scmp.ne.s32.totalorder %s70, %s71
    %p83 = scmp.eq.s32.totalorder %s19, 1
    %p84 = por %p82, %p83
    %p86 = scmp.ne.s32.totalorder %s71, %s85
    %p87 = scmp.eq.s32.totalorder %s19, 0
    %p88 = por %p86, %p87
    %s90 = sadd.s32 %s89, 1
    %p93 = scmp.eq.s32.totalorder %s13, 1
    %p94 = scmp.ne.s32.totalorder %s89, %s91
    %p95 = scmp.eq.s32.totalorder %s13, 0
    %p96 = por %p94, %p95
    %p97 = scmp.ne.s32.totalorder %s89, %s91
    %p98 = scmp.eq.s32.totalorder %s18, 1
    %p99 = por %p97, %p98
    %p100 = scmp.ne.s32.totalorder %s91, %s92
    %p101 = scmp.eq.s32.totalorder %s18, 0
    %p102 = por %p100, %p101
    %p103 = scmp.ne.s32.totalorder %s91, %s92
    %p104 = scmp.eq.s32.totalorder %s19, 1
    %p105 = por %p103, %p104
    %p107 = scmp.ne.s32.totalorder %s92, %s106
    %p108 = scmp.eq.s32.totalorder %s19, 0
    %p109 = por %p107, %p108
    %s111 = sadd.s32 %s110, 1
    %p114 = scmp.eq.s32.totalorder %s13, 1
    %p115 = scmp.ne.s32.totalorder %s110, %s112
    %p116 = scmp.eq.s32.totalorder %s13, 0
    %p117 = por %p115, %p116
    %p118 = scmp.ne.s32.totalorder %s110, %s112
    %p119 = scmp.eq.s32.totalorder %s18, 1
    %p120 = por %p118, %p119
    %p121 = scmp.ne.s32.totalorder %s112, %s113
    %p122 = scmp.eq.s32.totalorder %s18, 0
    %p123 = por %p121, %p122
    %p124 = scmp.ne.s32.totalorder %s112, %s113
    %p125 = scmp.eq.s32.totalorder %s19, 1
    %p126 = por %p124, %p125
    %p128 = scmp.ne.s32.totalorder %s113, %s127
    %p129 = scmp.eq.s32.totalorder %s19, 0
    %p130 = por %p128, %p129
    %s132 = sadd.s32 %s131, 1
    %p135 = scmp.eq.s32.totalorder %s13, 1
    %p136 = scmp.ne.s32.totalorder %s131, %s133
    %p137 = scmp.eq.s32.totalorder %s13, 0
    %p138 = por %p136, %p137
    %p139 = scmp.ne.s32.totalorder %s131, %s133
    %p140 = scmp.eq.s32.totalorder %s18, 1
    %p141 = por %p139, %p140
    %p142 = scmp.ne.s32.totalorder %s133, %s134
    %p143 = scmp.eq.s32.totalorder %s18, 0
    %p144 = por %p142, %p143
    %p145 = scmp.ne.s32.totalorder %s133, %s134
    %p146 = scmp.eq.s32.totalorder %s19, 1
    %p147 = por %p145, %p146
    %p149 = scmp.ne.s32.totalorder %s134, %s148
    %p150 = scmp.eq.s32.totalorder %s19, 0
    %p151 = por %p149, %p150
    %s153 = sadd.s32 %s152, 1
    %p156 = scmp.eq.s32.totalorder %s13, 1
    %p157 = scmp.ne.s32.totalorder %s152, %s154
    %p158 = scmp.eq.s32.totalorder %s13, 0
    %p159 = por %p157, %p158
    %p160 = scmp.ne.s32.totalorder %s152, %s154
    %p161 = scmp.eq.s32.totalorder %s18, 1
    %p162 = por %p160, %p161
    %p163 = scmp.ne.s32.totalorder %s154, %s155
    %p164 = scmp.eq.s32.totalorder %s18, 0
    %p165 = por %p163, %p164
    %p166 = scmp.ne.s32.totalorder %s154, %s155
    %p167 = scmp.eq.s32.totalorder %s19, 1
    %p168 = por %p166, %p167
    %p170 = scmp.ne.s32.totalorder %s155, %s169
    %p171 = scmp.eq.s32.totalorder %s19, 0
    %p172 = por %p170, %p171
    %s173 = ssub.s32 %s13, %s20
    %p174 = scmp.eq.s32.totalorder %s173, 0
    %s176 = sadd.s32 %s175, 1
    %s177 = scalar_select %p174, %s175, %s176
    %p180 = pneg %p174
    %p181 = scmp.eq.s32.totalorder %s13, 1
    %p182 = por %p180, %p181
    %p183 = scmp.ne.s32.totalorder %s175, %s178
    %p184 = scmp.eq.s32.totalorder %s13, 0
    %p185 = por %p183, %p184
    %p186 = scmp.ne.s32.totalorder %s175, %s178
    %p187 = scmp.eq.s32.totalorder %s18, 1
    %p188 = por %p186, %p187
    %p189 = scmp.ne.s32.totalorder %s178, %s179
    %p190 = scmp.eq.s32.totalorder %s18, 0
    %p191 = por %p189, %p190
    %p192 = scmp.ne.s32.totalorder %s178, %s179
    %p193 = scmp.eq.s32.totalorder %s19, 1
    %p194 = por %p192, %p193
    %p196 = scmp.ne.s32.totalorder %s179, %s195
    %p197 = scmp.eq.s32.totalorder %s19, 0
    %p198 = por %p196, %p197
    %p199 = scmp.le.s32.totalorder 1, %s13
    %p200 = scmp.lt.s32.totalorder %s13, 3
    %p201 = pnand %p199, %p200
    %p202 = pneg %p201
    // Predicated region
    $region9: #{projector_forward.1} parent=5 // pred_check
      _
    $region10: #{projector_forward.1} parent=5 // pred_check_branch
      %204 = sbr.rel (%p201) target = $region12
    $region11: #{projector_forward.1} parent=5 // pred_region
      %s205 = ssub.s32 %s13, 1
      // Predicated region
      $region13: #{projector_forward.1} parent=11 // pred_check
        %p206 = pneg %p60
      $region14: #{projector_forward.1} parent=11 // pred_check_branch
        %208 = sbr.rel (%p206) target = $region16
      $region15: #{projector_forward.1} parent=11 // pred_region
        _
      $region16: #{projector_forward.1} parent=11 // pred_fallthru
        _
      // Predicated region
      $region17: #{projector_forward.1} parent=11 // pred_check
        %p209 = pneg %p81
      $region18: #{projector_forward.1} parent=11 // pred_check_branch
        %211 = sbr.rel (%p209) target = $region20
      $region19: #{projector_forward.1} parent=11 // pred_region
        _
      $region20: #{projector_forward.1} parent=11 // pred_fallthru
        _
      // Predicated region
      $region21: #{projector_forward.1} parent=11 // pred_check
        %p212 = pneg %p102
      $region22: #{projector_forward.1} parent=11 // pred_check_branch
        %214 = sbr.rel (%p212) target = $region24
      $region23: #{projector_forward.1} parent=11 // pred_region
        _
      $region24: #{projector_forward.1} parent=11 // pred_fallthru
        _
      // Predicated region
      $region25: #{projector_forward.1} parent=11 // pred_check
        %p215 = pneg %p123
      $region26: #{projector_forward.1} parent=11 // pred_check_branch
        %217 = sbr.rel (%p215) target = $region28
      $region27: #{projector_forward.1} parent=11 // pred_region
        _
      $region28: #{projector_forward.1} parent=11 // pred_fallthru
        _
      // Predicated region
      $region29: #{projector_forward.1} parent=11 // pred_check
        %p218 = pneg %p144
      $region30: #{projector_forward.1} parent=11 // pred_check_branch
        %220 = sbr.rel (%p218) target = $region32
      $region31: #{projector_forward.1} parent=11 // pred_region
        _
      $region32: #{projector_forward.1} parent=11 // pred_fallthru
        _
      // Predicated region
      $region33: #{projector_forward.1} parent=11 // pred_check
        %p221 = pneg %p165
      $region34: #{projector_forward.1} parent=11 // pred_check_branch
        %223 = sbr.rel (%p221) target = $region36
      $region35: #{projector_forward.1} parent=11 // pred_region
        _
      $region36: #{projector_forward.1} parent=11 // pred_fallthru
        _
    $region12: #{projector_forward.1} parent=5 // pred_fallthru
      _
    %p224 = scmp.lt.s32.totalorder %s13, 2
    // Predicated region
    $region37: #{projector_forward.1} parent=5 // pred_check
      %p225 = pneg %p224
    $region38: #{projector_forward.1} parent=5 // pred_check_branch
      %227 = sbr.rel (%p225) target = $region40
    $region39: #{projector_forward.1} parent=5 // pred_region
      // Predicated region
      $region41: #{projector_forward.1} parent=39 // pred_check
        %p228 = pneg %p33
      $region42: #{projector_forward.1} parent=39 // pred_check_branch
        %230 = sbr.rel (%p228) target = $region44
      $region43: #{projector_forward.1} parent=39 // pred_region
        %p231 = scmp.lt.s32.totalorder %s13, 1
        %s232 = scalar_select %p231, %s13, 1
        %s233 = smul.addr %s232, 4
        %s234 = smul.addr %s233, 4
        %s235 = scalar_lea.vmem %s0, %s234
      $region44: #{projector_forward.1} parent=39 // pred_fallthru
        _
    $region40: #{projector_forward.1} parent=5 // pred_fallthru
      _
    %p236 = scmp.le.s32.totalorder 1, %s13
    %p237 = scmp.lt.s32.totalorder %s13, 3
    %p238 = pnand %p236, %p237
    %p239 = pneg %p238
    // Predicated region
    $region45: #{projector_forward.1} parent=5 // pred_check
      _
    $region46: #{projector_forward.1} parent=5 // pred_check_branch
      %241 = sbr.rel (%p238) target = $region48
    $region47: #{projector_forward.1} parent=5 // pred_region
      %s242 = ssub.s32 %s13, 1
      %p243 = scmp.lt.s32.totalorder %s18, 1
      %s244 = scalar_select %p243, %s18, 1
      %s245 = smul.addr %s244, 4
      %s246 = smul.addr %s245, 4
      %s247 = scalar_lea.vmem %s0, %s246
      %p248 = pneg %p39
      %p249 = pneg %p36
      %p250 = pneg %p60
      %p251 = pneg %p57
      %p252 = pneg %p81
      %p253 = pneg %p78
      %p254 = pneg %p102
      %p255 = pneg %p99
      %p256 = pneg %p123
      %p257 = pneg %p120
      %p258 = pneg %p144
      %p259 = pneg %p141
      %p260 = pneg %p165
      %p261 = pneg %p162
      %p262 = pneg %p191
      %p263 = pneg %p188
      %p264 = scmp.lt.s32.totalorder %s18, 1
      %s265 = scalar_select %p264, %s18, 1
      %s266 = smul.addr %s265, 8
      %s267 = smul.addr %s266, 8
      %s268 = scalar_lea.vmem %s7, %s267
      %p269 = scmp.lt.s32.totalorder %s18, 1
      %s270 = scalar_select %p269, %s18, 1
      %s271 = smul.addr %s270, 4
      %s272 = smul.addr %s271, 4
      %s273 = scalar_lea.vmem %s0, %s272
      %p274 = scmp.lt.s32.totalorder %s18, 1
      %s275 = scalar_select %p274, %s18, 1
      %s276 = smul.addr %s275, 8
      %s277 = smul.addr %s276, 8
      %s278 = scalar_lea.vmem %s7, %s277
      %vm280 = vcmask 256000
      %281 = vst.msk [vmem:[#allocation2] sm:$0x7] %vm280, 0
      %s282 = scalar_lea.vmem [#allocation2], 20
      %283 = vst.msk [vmem:[%s282] sm:$0x7] %vm280, 0
      %s284 = scalar_lea.vmem [#allocation2], 4
      %vm285 = vcmask 253952
      %vm286 = vsmask.f32 256
      %vm287 = vmand %vm285, %vm286
      %v288 = vld [vmem:[%s284] sm:$0x1]
      %v289 = vsel %vm287, 0, %v288
      %290 = vst [vmem:[%s284] sm:$0x1] %v289
      %v291 = vld [vmem:[%s284 + $0x4] sm:$0x1]
      %v292 = vsel %vm287, 0, %v291
      %293 = vst [vmem:[%s284 + $0x4] sm:$0x1] %v292
      %v294 = vld [vmem:[%s284 + $0x8] sm:$0x1]
      %v295 = vsel %vm287, 0, %v294
      %296 = vst [vmem:[%s284 + $0x8] sm:$0x1] %v295
      %v297 = vld [vmem:[%s284 + $0xc] sm:$0x1]
      %v298 = vsel %vm287, 0, %v297
      %299 = vst [vmem:[%s284 + $0xc] sm:$0x1] %v298
      %vm300 = vcmask 256002
      %vm301 = vsmask.f32 7946
      %vm302 = vmand %vm300, %vm301
      %v303 = vld [vmem:[%s284] sm:$0x4]
      %v304 = vsel %vm302, 0, %v303
      %305 = vst [vmem:[%s284] sm:$0x4] %v304
      %v306 = vld [vmem:[%s284 + $0x4] sm:$0x4]
      %v307 = vsel %vm302, 0, %v306
      %308 = vst [vmem:[%s284 + $0x4] sm:$0x4] %v307
      %v309 = vld [vmem:[%s284 + $0x8] sm:$0x4]
      %v310 = vsel %vm302, 0, %v309
      %311 = vst [vmem:[%s284 + $0x8] sm:$0x4] %v310
      %v312 = vld [vmem:[%s284 + $0xc] sm:$0x4]
      %v313 = vsel %vm302, 0, %v312
      %314 = vst [vmem:[%s284 + $0xc] sm:$0x4] %v313
      %v315 = vld [vmem:[%s273] sm:$0xf]
      %v316 = vld [vmem:[%s273 + $0x4] sm:$0xf]
      %v317 = vld [vmem:[%s273 + $0x8] sm:$0xf]
      %v318 = vld [vmem:[%s273 + $0xc] sm:$0xf]
      %v319 = vpack.c.bf16 %v315, %v315
      %v320 = vpack.c.bf16 %v316, %v316
      %v321 = vpack.c.bf16 %v317, %v317
      %v322 = vpack.c.bf16 %v318, %v318
      %v327 = vunpack.c.l.b16 %v319
      %v328 = vunpack.c.l.b16 %v320
      %v329 = vunpack.c.l.b16 %v321
      %v330 = vunpack.c.l.b16 %v322
      %v331 = vpack.c.b16 %v327, %v327
      %v332 = vpack.c.b16 %v328, %v328
      %v333 = vpack.c.b16 %v329, %v329
      %v334 = vpack.c.b16 %v330, %v330
      %v336 = vshrl.u32 %v331, 16
      %v338 = vrot.slane %v336, 7
      %v339 = vshll.u32 %v331, 16
      %v341 = vor.u32 %v338, %v339
      %v343 = vshrl.u32 %v332, 16
      %v345 = vrot.slane %v343, 7
      %v346 = vshll.u32 %v332, 16
      %v348 = vor.u32 %v345, %v346
      %v350 = vshrl.u32 %v333, 16
      %v352 = vrot.slane %v350, 7
      %v353 = vshll.u32 %v333, 16
      %v355 = vor.u32 %v352, %v353
      %v357 = vshrl.u32 %v334, 16
      %v359 = vrot.slane %v357, 7
      %v360 = vshll.u32 %v334, 16
      %v362 = vor.u32 %v359, %v360
      %vm367 = vcmask 256000
      %vm368 = vsmask.f32 2306
      %vm369 = vmand %vm367, %vm368
      %v370 = vld [vmem:[%s284] sm:$0x7]
      %v371 = vsel %vm369, %v341, %v370
      %372 = vst [vmem:[%s284] sm:$0x7] %v371
      %v373 = vld [vmem:[%s284 + $0x4] sm:$0x7]
      %v374 = vsel %vm369, %v348, %v373
      %375 = vst [vmem:[%s284 + $0x4] sm:$0x7] %v374
      %v376 = vld [vmem:[%s284 + $0x8] sm:$0x7]
      %v377 = vsel %vm369, %v355, %v376
      %378 = vst [vmem:[%s284 + $0x8] sm:$0x7] %v377
      %v379 = vld [vmem:[%s284 + $0xc] sm:$0x7]
      %v380 = vsel %vm369, %v362, %v379
      %381 = vst [vmem:[%s284 + $0xc] sm:$0x7] %v380
      %v382 = vld [vmem:[#allocation2] sm:$0x3]
      %v383 = vld [vmem:[#allocation2 + $0x4] sm:$0x3]
      %v384 = vld [vmem:[#allocation2 + $0x8] sm:$0x3]
      %v385 = vld [vmem:[#allocation2 + $0xc] sm:$0x3]
      %v386 = vld [vmem:[%s1] sm:$0xf]
      %v387 = vld [vmem:[%s1 + $0x4] sm:$0xf]
      %v388 = vld [vmem:[%s1 + $0x8] sm:$0xf]
      %v389 = vld [vmem:[%s1 + $0xc] sm:$0xf]
      %v390 = vld [vmem:[#allocation2] sm:$0x7]
      %v391 = vld [vmem:[#allocation2 + $0x4] sm:$0x7]
      %v392 = vld [vmem:[#allocation2 + $0x8] sm:$0x7]
      %v393 = vld [vmem:[#allocation2 + $0xc] sm:$0x7]
      %v399 = vunpack.c.l.s4 1983009808
      %v400 = vunpack.c.0.s8 %v399
      %v401 = vlaneseq
      %v402 = vshrl.u32 %v401, 7
      %v403 = vsub.s32 %v400, %v402
      %v404 = vrot.slane %v390, %v403
      %v405 = vcombine.high %v404, %v404
      %v407 = vunpack.c.l.s4 1983009808
      %v408 = vunpack.c.0.s8 %v407
      %v409 = vlaneseq
      %v410 = vshrl.u32 %v409, 7
      %v411 = vsub.s32 %v408, %v410
      %v412 = vrot.slane %v391, %v411
      %v413 = vcombine.high %v412, %v412
      %v415 = vunpack.c.l.s4 1983009808
      %v416 = vunpack.c.0.s8 %v415
      %v417 = vlaneseq
      %v418 = vshrl.u32 %v417, 7
      %v419 = vsub.s32 %v416, %v418
      %v420 = vrot.slane %v392, %v419
      %v421 = vcombine.high %v420, %v420
      %v423 = vunpack.c.l.s4 1983009808
      %v424 = vunpack.c.0.s8 %v423
      %v425 = vlaneseq
      %v426 = vshrl.u32 %v425, 7
      %v427 = vsub.s32 %v424, %v426
      %v428 = vrot.slane %v393, %v427
      %v429 = vcombine.high %v428, %v428
      %vm430 = vsmask.f32 1280
      %vm431 = vsmask.f32 3336
      %vm432 = vmor %vm430, %vm431
      %vm433 = vsmask.f32 5392
      %vm434 = vmor %vm432, %vm433
      %vm435 = vsmask.f32 7448
      %vm436 = vmor %vm434, %vm435
      %v438 = vshrl.u32 %v404, 16
      %v440 = vrot.slane %v438, 6
      %v441 = vshll.u32 %v404, 16
      %v443 = vrot.slane %v441, 7
      %v444 = vor.u32 %v440, %v443
      %v445 = vrot.slane %v444, 2
      %v447 = vshll.u32 %v405, 16
      %v449 = vrot.slane %v447, 7
      %v450 = vsel %vm436, %v445, %v449
      %v452 = vshrl.u32 %v412, 16
      %v454 = vrot.slane %v452, 6
      %v455 = vshll.u32 %v412, 16
      %v457 = vrot.slane %v455, 7
      %v458 = vor.u32 %v454, %v457
      %v459 = vrot.slane %v458, 2
      %v461 = vshll.u32 %v413, 16
      %v463 = vrot.slane %v461, 7
      %v464 = vsel %vm436, %v459, %v463
      %v466 = vshrl.u32 %v420, 16
      %v468 = vrot.slane %v466, 6
      %v469 = vshll.u32 %v420, 16
      %v471 = vrot.slane %v469, 7
      %v472 = vor.u32 %v468, %v471
      %v473 = vrot.slane %v472, 2
      %v475 = vshll.u32 %v421, 16
      %v477 = vrot.slane %v475, 7
      %v478 = vsel %vm436, %v473, %v477
      %v480 = vshrl.u32 %v428, 16
      %v482 = vrot.slane %v480, 6
      %v483 = vshll.u32 %v428, 16
      %v485 = vrot.slane %v483, 7
      %v486 = vor.u32 %v482, %v485
      %v487 = vrot.slane %v486, 2
      %v489 = vshll.u32 %v429, 16
      %v491 = vrot.slane %v489, 7
      %v492 = vsel %vm436, %v487, %v491
      %v493 = vld [vmem:[%s1 + $0x10] sm:$0xf]
      %v494 = vld [vmem:[%s1 + $0x14] sm:$0xf]
      %v495 = vld [vmem:[%s1 + $0x18] sm:$0xf]
      %v496 = vld [vmem:[%s1 + $0x1c] sm:$0xf]
      %v497 = vcombine.low %v450, %v464
      %v498 = vcombine.low %v478, %v492
      %v500 = vunpack.c.l.s4 1983009808
      %v501 = vunpack.c.0.s8 %v500
      %v502 = vlaneseq
      %v503 = vshrl.u32 %v502, 7
      %v504 = vsub.s32 %v501, %v503
      %v505 = vrot.slane %v497, %v504
      %v507 = vunpack.c.l.s4 1983009808
      %v508 = vunpack.c.0.s8 %v507
      %v509 = vlaneseq
      %v510 = vshrl.u32 %v509, 7
      %v511 = vsub.s32 %v508, %v510
      %v512 = vrot.slane %v498, %v511
      %v513 = vcombine.low %v505, %v512
      %v518 = vunpack.c.l.b16 %v493
      %v519 = vunpack.c.l.b16 %v494
      %v520 = vunpack.c.l.b16 %v495
      %v521 = vunpack.c.l.b16 %v496
      %v522 = vpack.c.b16 %v519, %v518
      %v523 = vpack.c.b16 %v521, %v520
      %vm526 = vcmask 261120
      %v528 = vsel %vm526, %v513, 0
      %530 = vmatprep.subr.bf16.mxu0 0
      %531 = vmatpush1.bf16.msra.mxu0 0
      %532 = vmatprep.subr.bf16.mxu0 0
      %533 = vmatpush1.bf16.msra.mxu0 0
      %534 = vmatprep.subr.bf16.mxu0 0
      %535 = vmatpush1.bf16.msra.mxu0 0
      %536 = vmatprep.subr.bf16.mxu0 0
      %537 = vmatpush1.bf16.msra.mxu0 0
      %538 = vmatprep.subr.bf16.mxu0 0
      %539 = vmatpush1.bf16.msra.mxu0 0
      %540 = vmatprep.subr.bf16.mxu0 0
      %541 = vmatpush1.bf16.msra.mxu0 0
      %542 = vmatprep.subr.bf16.mxu0 0
      %543 = vmatpush1.bf16.msra.mxu0 %v523
      %544 = vmatprep.subr.bf16.mxu0 0
      %545 = vmatpush1.bf16.msra.mxu0 %v522
      %546 = vmatprep.subr.bf16.mxu0 0
      %547 = vmatpush2.bf16.msra.mxu0 0
      %548 = vmatprep.subr.bf16.mxu0 0
      %549 = vmatpush2.bf16.msra.mxu0 0
      %550 = vmatprep.subr.bf16.mxu0 0
      %551 = vmatpush2.bf16.msra.mxu0 0
      %552 = vmatprep.subr.bf16.mxu0 0
      %553 = vmatpush2.bf16.msra.mxu0 0
      %554 = vmatprep.subr.bf16.mxu0 0
      %555 = vmatpush2.bf16.msra.mxu0 0
      %556 = vmatprep.subr.bf16.mxu0 0
      %557 = vmatpush2.bf16.msra.mxu0 0
      %558 = vmatprep.subr.bf16.mxu0 0
      %559 = vmatpush2.bf16.msra.mxu0 0
      %560 = vmatprep.subr.bf16.mxu0 0
      %561 = vmatpush2.bf16.msra.mxu0 0
      %562 = vmatprep.mubr.bf16.mxu0 0
      %563 = vmatmul.mubr.bf16.gmra.mxu0 %v528
      %v564 = vpop.f32.mrf.mxu0
      %v565 = vadd.f32 0.0, %v564
      %v566 = vpop.f32.mrf.mxu0
      %v567 = vpop.f32.mrf.mxu0
      %v568 = vadd.f32 0.0, %v567
      %v569 = vpop.f32.mrf.mxu0
      %570 = vdwg.mxu0
      %v575 = vcombine.low %v382, %v383
      %v576 = vcombine.low %v384, %v385
      %v578 = vunpack.c.l.s4 1983009808
      %v579 = vunpack.c.0.s8 %v578
      %v580 = vlaneseq
      %v581 = vshrl.u32 %v580, 7
      %v582 = vsub.s32 %v579, %v581
      %v583 = vrot.slane %v575, %v582
      %v585 = vunpack.c.l.s4 1983009808
      %v586 = vunpack.c.0.s8 %v585
      %v587 = vlaneseq
      %v588 = vshrl.u32 %v587, 7
      %v589 = vsub.s32 %v586, %v588
      %v590 = vrot.slane %v576, %v589
      %v591 = vcombine.low %v583, %v590
      %v596 = vunpack.c.l.b16 %v386
      %v597 = vunpack.c.l.b16 %v387
      %v598 = vunpack.c.l.b16 %v388
      %v599 = vunpack.c.l.b16 %v389
      %v600 = vpack.c.b16 %v597, %v596
      %v601 = vpack.c.b16 %v599, %v598
      %v605 = vsel %vm526, %v591, 0
      %607 = vmatprep.subr.bf16.mxu0 0
      %608 = vmatpush1.bf16.msra.mxu0 0
      %609 = vmatprep.subr.bf16.mxu0 0
      %610 = vmatpush1.bf16.msra.mxu0 0
      %611 = vmatprep.subr.bf16.mxu0 0
      %612 = vmatpush1.bf16.msra.mxu0 0
      %613 = vmatprep.subr.bf16.mxu0 0
      %614 = vmatpush1.bf16.msra.mxu0 0
      %615 = vmatprep.subr.bf16.mxu0 0
      %616 = vmatpush1.bf16.msra.mxu0 0
      %617 = vmatprep.subr.bf16.mxu0 0
      %618 = vmatpush1.bf16.msra.mxu0 0
      %619 = vmatprep.subr.bf16.mxu0 0
      %620 = vmatpush1.bf16.msra.mxu0 %v601
      %621 = vmatprep.subr.bf16.mxu0 0
      %622 = vmatpush1.bf16.msra.mxu0 %v600
      %623 = vmatprep.subr.bf16.mxu0 0
      %624 = vmatpush2.bf16.msra.mxu0 0
      %625 = vmatprep.subr.bf16.mxu0 0
      %626 = vmatpush2.bf16.msra.mxu0 0
      %627 = vmatprep.subr.bf16.mxu0 0
      %628 = vmatpush2.bf16.msra.mxu0 0
      %629 = vmatprep.subr.bf16.mxu0 0
      %630 = vmatpush2.bf16.msra.mxu0 0
      %631 = vmatprep.subr.bf16.mxu0 0
      %632 = vmatpush2.bf16.msra.mxu0 0
      %633 = vmatprep.subr.bf16.mxu0 0
      %634 = vmatpush2.bf16.msra.mxu0 0
      %635 = vmatprep.subr.bf16.mxu0 0
      %636 = vmatpush2.bf16.msra.mxu0 0
      %637 = vmatprep.subr.bf16.mxu0 0
      %638 = vmatpush2.bf16.msra.mxu0 0
      %639 = vmatprep.mubr.bf16.mxu0 0
      %640 = vmatmul.mubr.bf16.gmra.mxu0 %v605
      %v641 = vpop.f32.mrf.mxu0
      %v642 = vadd.f32 %v565, %v641
      %v643 = vpop.f32.mrf.mxu0
      %v644 = vpop.f32.mrf.mxu0
      %v645 = vadd.f32 %v568, %v644
      %v646 = vpop.f32.mrf.mxu0
      %647 = vdwg.mxu0
      %v648 = vld [vmem:[#allocation2] sm:$0x6]
      %v649 = vld [vmem:[#allocation2 + $0x4] sm:$0x6]
      %v650 = vld [vmem:[#allocation2 + $0x8] sm:$0x6]
      %v651 = vld [vmem:[#allocation2 + $0xc] sm:$0x6]
      %v657 = vunpack.c.l.s4 1983009808
      %v658 = vunpack.c.0.s8 %v657
      %v659 = vlaneseq
      %v660 = vshrl.u32 %v659, 7
      %v661 = vsub.s32 %v658, %v660
      %v662 = vrot.slane %v648, %v661
      %v663 = vcombine.high %v662, %v662
      %v665 = vunpack.c.l.s4 1983009808
      %v666 = vunpack.c.0.s8 %v665
      %v667 = vlaneseq
      %v668 = vshrl.u32 %v667, 7
      %v669 = vsub.s32 %v666, %v668
      %v670 = vrot.slane %v649, %v669
      %v671 = vcombine.high %v670, %v670
      %v673 = vunpack.c.l.s4 1983009808
      %v674 = vunpack.c.0.s8 %v673
      %v675 = vlaneseq
      %v676 = vshrl.u32 %v675, 7
      %v677 = vsub.s32 %v674, %v676
      %v678 = vrot.slane %v650, %v677
      %v679 = vcombine.high %v678, %v678
      %v681 = vunpack.c.l.s4 1983009808
      %v682 = vunpack.c.0.s8 %v681
      %v683 = vlaneseq
      %v684 = vshrl.u32 %v683, 7
      %v685 = vsub.s32 %v682, %v684
      %v686 = vrot.slane %v651, %v685
      %v687 = vcombine.high %v686, %v686
      %vm688 = vcmask 1040384
      %vm689 = vcmask 1042434
      %vm690 = vmor %vm688, %vm689
      %vm691 = vcmask 1044484
      %vm692 = vmor %vm690, %vm691
      %vm693 = vcmask 1046534
      %vm694 = vmor %vm692, %vm693
      %v695 = vrot.slane %v662, 7
      %v696 = vrot.slane %v695, 2
      %v697 = vrot.slane %v663, 7
      %v698 = vsel %vm694, %v696, %v697
      %v699 = vrot.slane %v670, 7
      %v700 = vrot.slane %v699, 2
      %v701 = vrot.slane %v671, 7
      %v702 = vsel %vm694, %v700, %v701
      %v703 = vrot.slane %v678, 7
      %v704 = vrot.slane %v703, 2
      %v705 = vrot.slane %v679, 7
      %v706 = vsel %vm694, %v704, %v705
      %v707 = vrot.slane %v686, 7
      %v708 = vrot.slane %v707, 2
      %v709 = vrot.slane %v687, 7
      %v710 = vsel %vm694, %v708, %v709
      %v711 = vld [vmem:[%s1 + $0x20] sm:$0xf]
      %v712 = vld [vmem:[%s1 + $0x24] sm:$0xf]
      %v713 = vld [vmem:[%s1 + $0x28] sm:$0xf]
      %v714 = vld [vmem:[%s1 + $0x2c] sm:$0xf]
      %v715 = vcombine.low %v698, %v702
      %v716 = vcombine.low %v706, %v710
      %v718 = vunpack.c.l.s4 1983009808
      %v719 = vunpack.c.0.s8 %v718
      %v720 = vlaneseq
      %v721 = vshrl.u32 %v720, 7
      %v722 = vsub.s32 %v719, %v721
      %v723 = vrot.slane %v715, %v722
      %v725 = vunpack.c.l.s4 1983009808
      %v726 = vunpack.c.0.s8 %v725
      %v727 = vlaneseq
      %v728 = vshrl.u32 %v727, 7
      %v729 = vsub.s32 %v726, %v728
      %v730 = vrot.slane %v716, %v729
      %v731 = vcombine.low %v723, %v730
      %v736 = vunpack.c.l.b16 %v711
      %v737 = vunpack.c.l.b16 %v712
      %v738 = vunpack.c.l.b16 %v713
      %v739 = vunpack.c.l.b16 %v714
      %v740 = vpack.c.b16 %v737, %v736
      %v741 = vpack.c.b16 %v739, %v738
      %v745 = vsel %vm526, %v731, 0
      %747 = vmatprep.subr.bf16.mxu0 0
      %748 = vmatpush1.bf16.msra.mxu0 0
      %749 = vmatprep.subr.bf16.mxu0 0
      %750 = vmatpush1.bf16.msra.mxu0 0
      %751 = vmatprep.subr.bf16.mxu0 0
      %752 = vmatpush1.bf16.msra.mxu0 0
      %753 = vmatprep.subr.bf16.mxu0 0
      %754 = vmatpush1.bf16.msra.mxu0 0
      %755 = vmatprep.subr.bf16.mxu0 0
      %756 = vmatpush1.bf16.msra.mxu0 0
      %757 = vmatprep.subr.bf16.mxu0 0
      %758 = vmatpush1.bf16.msra.mxu0 0
      %759 = vmatprep.subr.bf16.mxu0 0
      %760 = vmatpush1.bf16.msra.mxu0 %v741
      %761 = vmatprep.subr.bf16.mxu0 0
      %762 = vmatpush1.bf16.msra.mxu0 %v740
      %763 = vmatprep.subr.bf16.mxu0 0
      %764 = vmatpush2.bf16.msra.mxu0 0
      %765 = vmatprep.subr.bf16.mxu0 0
      %766 = vmatpush2.bf16.msra.mxu0 0
      %767 = vmatprep.subr.bf16.mxu0 0
      %768 = vmatpush2.bf16.msra.mxu0 0
      %769 = vmatprep.subr.bf16.mxu0 0
      %770 = vmatpush2.bf16.msra.mxu0 0
      %771 = vmatprep.subr.bf16.mxu0 0
      %772 = vmatpush2.bf16.msra.mxu0 0
      %773 = vmatprep.subr.bf16.mxu0 0
      %774 = vmatpush2.bf16.msra.mxu0 0
      %775 = vmatprep.subr.bf16.mxu0 0
      %776 = vmatpush2.bf16.msra.mxu0 0
      %777 = vmatprep.subr.bf16.mxu0 0
      %778 = vmatpush2.bf16.msra.mxu0 0
      %779 = vmatprep.mubr.bf16.mxu0 0
      %780 = vmatmul.mubr.bf16.gmra.mxu0 %v745
      %v781 = vpop.f32.mrf.mxu0
      %v782 = vadd.f32 0.0, %v781
      %v783 = vpop.f32.mrf.mxu0
      %v784 = vpop.f32.mrf.mxu0
      %v785 = vadd.f32 0.0, %v784
      %v786 = vpop.f32.mrf.mxu0
      %787 = vdwg.mxu0
      %v788 = vadd.f32 %v642, %v782
      %v789 = vadd.f32 %v645, %v785
      %v790 = vld [vmem:[%s284] sm:$0x3]
      %v791 = vld [vmem:[%s284 + $0x4] sm:$0x3]
      %v792 = vld [vmem:[%s284 + $0x8] sm:$0x3]
      %v793 = vld [vmem:[%s284 + $0xc] sm:$0x3]
      %v794 = vld [vmem:[%s1 + $0x30] sm:$0xf]
      %v795 = vld [vmem:[%s1 + $0x34] sm:$0xf]
      %v796 = vld [vmem:[%s1 + $0x38] sm:$0xf]
      %v797 = vld [vmem:[%s1 + $0x3c] sm:$0xf]
      %v802 = vcombine.low %v790, %v791
      %v803 = vcombine.low %v792, %v793
      %v805 = vunpack.c.l.s4 1983009808
      %v806 = vunpack.c.0.s8 %v805
      %v807 = vlaneseq
      %v808 = vshrl.u32 %v807, 7
      %v809 = vsub.s32 %v806, %v808
      %v810 = vrot.slane %v802, %v809
      %v812 = vunpack.c.l.s4 1983009808
      %v813 = vunpack.c.0.s8 %v812
      %v814 = vlaneseq
      %v815 = vshrl.u32 %v814, 7
      %v816 = vsub.s32 %v813, %v815
      %v817 = vrot.slane %v803, %v816
      %v818 = vcombine.low %v810, %v817
      %v823 = vunpack.c.l.b16 %v794
      %v824 = vunpack.c.l.b16 %v795
      %v825 = vunpack.c.l.b16 %v796
      %v826 = vunpack.c.l.b16 %v797
      %v827 = vpack.c.b16 %v824, %v823
      %v828 = vpack.c.b16 %v826, %v825
      %v832 = vsel %vm526, %v818, 0
      %834 = vmatprep.subr.bf16.mxu0 0
      %835 = vmatpush1.bf16.msra.mxu0 0
      %836 = vmatprep.subr.bf16.mxu0 0
      %837 = vmatpush1.bf16.msra.mxu0 0
      %838 = vmatprep.subr.bf16.mxu0 0
      %839 = vmatpush1.bf16.msra.mxu0 0
      %840 = vmatprep.subr.bf16.mxu0 0
      %841 = vmatpush1.bf16.msra.mxu0 0
      %842 = vmatprep.subr.bf16.mxu0 0
      %843 = vmatpush1.bf16.msra.mxu0 0
      %844 = vmatprep.subr.bf16.mxu0 0
      %845 = vmatpush1.bf16.msra.mxu0 0
      %846 = vmatprep.subr.bf16.mxu0 0
      %847 = vmatpush1.bf16.msra.mxu0 %v828
      %848 = vmatprep.subr.bf16.mxu0 0
      %849 = vmatpush1.bf16.msra.mxu0 %v827
      %850 = vmatprep.subr.bf16.mxu0 0
      %851 = vmatpush2.bf16.msra.mxu0 0
      %852 = vmatprep.subr.bf16.mxu0 0
      %853 = vmatpush2.bf16.msra.mxu0 0
      %854 = vmatprep.subr.bf16.mxu0 0
      %855 = vmatpush2.bf16.msra.mxu0 0
      %856 = vmatprep.subr.bf16.mxu0 0
      %857 = vmatpush2.bf16.msra.mxu0 0
      %858 = vmatprep.subr.bf16.mxu0 0
      %859 = vmatpush2.bf16.msra.mxu0 0
      %860 = vmatprep.subr.bf16.mxu0 0
      %861 = vmatpush2.bf16.msra.mxu0 0
      %862 = vmatprep.subr.bf16.mxu0 0
      %863 = vmatpush2.bf16.msra.mxu0 0
      %864 = vmatprep.subr.bf16.mxu0 0
      %865 = vmatpush2.bf16.msra.mxu0 0
      %866 = vmatprep.mubr.bf16.mxu0 0
      %867 = vmatmul.mubr.bf16.gmra.mxu0 %v832
      %v868 = vpop.f32.mrf.mxu0
      %v869 = vadd.f32 0.0, %v868
      %v870 = vpop.f32.mrf.mxu0
      %v871 = vpop.f32.mrf.mxu0
      %v872 = vadd.f32 0.0, %v871
      %v873 = vpop.f32.mrf.mxu0
      %874 = vdwg.mxu0
      %v875 = vadd.f32 %v788, %v869
      %v876 = vadd.f32 %v789, %v872
      %v877 = vld [vmem:[%s284] sm:$0x7]
      %v878 = vld [vmem:[%s284 + $0x4] sm:$0x7]
      %v879 = vld [vmem:[%s284 + $0x8] sm:$0x7]
      %v880 = vld [vmem:[%s284 + $0xc] sm:$0x7]
      %v886 = vunpack.c.l.s4 1983009808
      %v887 = vunpack.c.0.s8 %v886
      %v888 = vlaneseq
      %v889 = vshrl.u32 %v888, 7
      %v890 = vsub.s32 %v887, %v889
      %v891 = vrot.slane %v877, %v890
      %v892 = vcombine.high %v891, %v891
      %v894 = vunpack.c.l.s4 1983009808
      %v895 = vunpack.c.0.s8 %v894
      %v896 = vlaneseq
      %v897 = vshrl.u32 %v896, 7
      %v898 = vsub.s32 %v895, %v897
      %v899 = vrot.slane %v878, %v898
      %v900 = vcombine.high %v899, %v899
      %v902 = vunpack.c.l.s4 1983009808
      %v903 = vunpack.c.0.s8 %v902
      %v904 = vlaneseq
      %v905 = vshrl.u32 %v904, 7
      %v906 = vsub.s32 %v903, %v905
      %v907 = vrot.slane %v879, %v906
      %v908 = vcombine.high %v907, %v907
      %v910 = vunpack.c.l.s4 1983009808
      %v911 = vunpack.c.0.s8 %v910
      %v912 = vlaneseq
      %v913 = vshrl.u32 %v912, 7
      %v914 = vsub.s32 %v911, %v913
      %v915 = vrot.slane %v880, %v914
      %v916 = vcombine.high %v915, %v915
      %v918 = vshrl.u32 %v891, 16
      %v920 = vrot.slane %v918, 6
      %v921 = vshll.u32 %v891, 16
      %v923 = vrot.slane %v921, 7
      %v924 = vor.u32 %v920, %v923
      %v925 = vrot.slane %v924, 2
      %v927 = vshll.u32 %v892, 16
      %v929 = vrot.slane %v927, 7
      %v930 = vsel %vm436, %v925, %v929
      %v932 = vshrl.u32 %v899, 16
      %v934 = vrot.slane %v932, 6
      %v935 = vshll.u32 %v899, 16
      %v937 = vrot.slane %v935, 7
      %v938 = vor.u32 %v934, %v937
      %v939 = vrot.slane %v938, 2
      %v941 = vshll.u32 %v900, 16
      %v943 = vrot.slane %v941, 7
      %v944 = vsel %vm436, %v939, %v943
      %v946 = vshrl.u32 %v907, 16
      %v948 = vrot.slane %v946, 6
      %v949 = vshll.u32 %v907, 16
      %v951 = vrot.slane %v949, 7
      %v952 = vor.u32 %v948, %v951
      %v953 = vrot.slane %v952, 2
      %v955 = vshll.u32 %v908, 16
      %v957 = vrot.slane %v955, 7
      %v958 = vsel %vm436, %v953, %v957
      %v960 = vshrl.u32 %v915, 16
      %v962 = vrot.slane %v960, 6
      %v963 = vshll.u32 %v915, 16
      %v965 = vrot.slane %v963, 7
      %v966 = vor.u32 %v962, %v965
      %v967 = vrot.slane %v966, 2
      %v969 = vshll.u32 %v916, 16
      %v971 = vrot.slane %v969, 7
      %v972 = vsel %vm436, %v967, %v971
      %v973 = vld [vmem:[%s1 + $0x40] sm:$0xf]
      %v974 = vld [vmem:[%s1 + $0x44] sm:$0xf]
      %v975 = vld [vmem:[%s1 + $0x48] sm:$0xf]
      %v976 = vld [vmem:[%s1 + $0x4c] sm:$0xf]
      %v977 = vcombine.low %v930, %v944
      %v978 = vcombine.low %v958, %v972
      %v980 = vunpack.c.l.s4 1983009808
      %v981 = vunpack.c.0.s8 %v980
      %v982 = vlaneseq
      %v983 = vshrl.u32 %v982, 7
      %v984 = vsub.s32 %v981, %v983
      %v985 = vrot.slane %v977, %v984
      %v987 = vunpack.c.l.s4 1983009808
      %v988 = vunpack.c.0.s8 %v987
      %v989 = vlaneseq
      %v990 = vshrl.u32 %v989, 7
      %v991 = vsub.s32 %v988, %v990
      %v992 = vrot.slane %v978, %v991
      %v993 = vcombine.low %v985, %v992
      %v998 = vunpack.c.l.b16 %v973
      %v999 = vunpack.c.l.b16 %v974
      %v1000 = vunpack.c.l.b16 %v975
      %v1001 = vunpack.c.l.b16 %v976
      %v1002 = vpack.c.b16 %v999, %v998
      %v1003 = vpack.c.b16 %v1001, %v1000
      %v1007 = vsel %vm526, %v993, 0
      %1009 = vmatprep.subr.bf16.mxu0 0
      %1010 = vmatpush1.bf16.msra.mxu0 0
      %1011 = vmatprep.subr.bf16.mxu0 0
      %1012 = vmatpush1.bf16.msra.mxu0 0
      %1013 = vmatprep.subr.bf16.mxu0 0
      %1014 = vmatpush1.bf16.msra.mxu0 0
      %1015 = vmatprep.subr.bf16.mxu0 0
      %1016 = vmatpush1.bf16.msra.mxu0 0
      %1017 = vmatprep.subr.bf16.mxu0 0
      %1018 = vmatpush1.bf16.msra.mxu0 0
      %1019 = vmatprep.subr.bf16.mxu0 0
      %1020 = vmatpush1.bf16.msra.mxu0 0
      %1021 = vmatprep.subr.bf16.mxu0 0
      %1022 = vmatpush1.bf16.msra.mxu0 %v1003
      %1023 = vmatprep.subr.bf16.mxu0 0
      %1024 = vmatpush1.bf16.msra.mxu0 %v1002
      %1025 = vmatprep.subr.bf16.mxu0 0
      %1026 = vmatpush2.bf16.msra.mxu0 0
      %1027 = vmatprep.subr.bf16.mxu0 0
      %1028 = vmatpush2.bf16.msra.mxu0 0
      %1029 = vmatprep.subr.bf16.mxu0 0
      %1030 = vmatpush2.bf16.msra.mxu0 0
      %1031 = vmatprep.subr.bf16.mxu0 0
      %1032 = vmatpush2.bf16.msra.mxu0 0
      %1033 = vmatprep.subr.bf16.mxu0 0
      %1034 = vmatpush2.bf16.msra.mxu0 0
      %1035 = vmatprep.subr.bf16.mxu0 0
      %1036 = vmatpush2.bf16.msra.mxu0 0
      %1037 = vmatprep.subr.bf16.mxu0 0
      %1038 = vmatpush2.bf16.msra.mxu0 0
      %1039 = vmatprep.subr.bf16.mxu0 0
      %1040 = vmatpush2.bf16.msra.mxu0 0
      %1041 = vmatprep.mubr.bf16.mxu0 0
      %1042 = vmatmul.mubr.bf16.gmra.mxu0 %v1007
      %v1043 = vpop.f32.mrf.mxu0
      %v1044 = vadd.f32 0.0, %v1043
      %v1045 = vpop.f32.mrf.mxu0
      %v1046 = vpop.f32.mrf.mxu0
      %v1047 = vadd.f32 0.0, %v1046
      %v1048 = vpop.f32.mrf.mxu0
      %1049 = vdwg.mxu0
      %v1050 = vadd.f32 %v875, %v1044
      %v1051 = vadd.f32 %v876, %v1047
      %v1052 = vld [vmem:[%s284] sm:$0x6]
      %v1053 = vld [vmem:[%s284 + $0x4] sm:$0x6]
      %v1054 = vld [vmem:[%s284 + $0x8] sm:$0x6]
      %v1055 = vld [vmem:[%s284 + $0xc] sm:$0x6]
      %v1061 = vunpack.c.l.s4 1983009808
      %v1062 = vunpack.c.0.s8 %v1061
      %v1063 = vlaneseq
      %v1064 = vshrl.u32 %v1063, 7
      %v1065 = vsub.s32 %v1062, %v1064
      %v1066 = vrot.slane %v1052, %v1065
      %v1067 = vcombine.high %v1066, %v1066
      %v1069 = vunpack.c.l.s4 1983009808
      %v1070 = vunpack.c.0.s8 %v1069
      %v1071 = vlaneseq
      %v1072 = vshrl.u32 %v1071, 7
      %v1073 = vsub.s32 %v1070, %v1072
      %v1074 = vrot.slane %v1053, %v1073
      %v1075 = vcombine.high %v1074, %v1074
      %v1077 = vunpack.c.l.s4 1983009808
      %v1078 = vunpack.c.0.s8 %v1077
      %v1079 = vlaneseq
      %v1080 = vshrl.u32 %v1079, 7
      %v1081 = vsub.s32 %v1078, %v1080
      %v1082 = vrot.slane %v1054, %v1081
      %v1083 = vcombine.high %v1082, %v1082
      %v1085 = vunpack.c.l.s4 1983009808
      %v1086 = vunpack.c.0.s8 %v1085
      %v1087 = vlaneseq
      %v1088 = vshrl.u32 %v1087, 7
      %v1089 = vsub.s32 %v1086, %v1088
      %v1090 = vrot.slane %v1055, %v1089
      %v1091 = vcombine.high %v1090, %v1090
      %v1092 = vrot.slane %v1066, 7
      %v1093 = vrot.slane %v1092, 2
      %v1094 = vrot.slane %v1067, 7
      %v1095 = vsel %vm694, %v1093, %v1094
      %v1096 = vrot.slane %v1074, 7
      %v1097 = vrot.slane %v1096, 2
      %v1098 = vrot.slane %v1075, 7
      %v1099 = vsel %vm694, %v1097, %v1098
      %v1100 = vrot.slane %v1082, 7
      %v1101 = vrot.slane %v1100, 2
      %v1102 = vrot.slane %v1083, 7
      %v1103 = vsel %vm694, %v1101, %v1102
      %v1104 = vrot.slane %v1090, 7
      %v1105 = vrot.slane %v1104, 2
      %v1106 = vrot.slane %v1091, 7
      %v1107 = vsel %vm694, %v1105, %v1106
      %v1108 = vld [vmem:[%s1 + $0x50] sm:$0xf]
      %v1109 = vld [vmem:[%s1 + $0x54] sm:$0xf]
      %v1110 = vld [vmem:[%s1 + $0x58] sm:$0xf]
      %v1111 = vld [vmem:[%s1 + $0x5c] sm:$0xf]
      %v1112 = vcombine.low %v1095, %v1099
      %v1113 = vcombine.low %v1103, %v1107
      %v1115 = vunpack.c.l.s4 1983009808
      %v1116 = vunpack.c.0.s8 %v1115
      %v1117 = vlaneseq
      %v1118 = vshrl.u32 %v1117, 7
      %v1119 = vsub.s32 %v1116, %v1118
      %v1120 = vrot.slane %v1112, %v1119
      %v1122 = vunpack.c.l.s4 1983009808
      %v1123 = vunpack.c.0.s8 %v1122
      %v1124 = vlaneseq
      %v1125 = vshrl.u32 %v1124, 7
      %v1126 = vsub.s32 %v1123, %v1125
      %v1127 = vrot.slane %v1113, %v1126
      %v1128 = vcombine.low %v1120, %v1127
      %v1133 = vunpack.c.l.b16 %v1108
      %v1134 = vunpack.c.l.b16 %v1109
      %v1135 = vunpack.c.l.b16 %v1110
      %v1136 = vunpack.c.l.b16 %v1111
      %v1137 = vpack.c.b16 %v1134, %v1133
      %v1138 = vpack.c.b16 %v1136, %v1135
      %v1142 = vsel %vm526, %v1128, 0
      %1144 = vmatprep.subr.bf16.mxu0 0
      %1145 = vmatpush1.bf16.msra.mxu0 0
      %1146 = vmatprep.subr.bf16.mxu0 0
      %1147 = vmatpush1.bf16.msra.mxu0 0
      %1148 = vmatprep.subr.bf16.mxu0 0
      %1149 = vmatpush1.bf16.msra.mxu0 0
      %1150 = vmatprep.subr.bf16.mxu0 0
      %1151 = vmatpush1.bf16.msra.mxu0 0
      %1152 = vmatprep.subr.bf16.mxu0 0
      %1153 = vmatpush1.bf16.msra.mxu0 0
      %1154 = vmatprep.subr.bf16.mxu0 0
      %1155 = vmatpush1.bf16.msra.mxu0 0
      %1156 = vmatprep.subr.bf16.mxu0 0
      %1157 = vmatpush1.bf16.msra.mxu0 %v1138
      %1158 = vmatprep.subr.bf16.mxu0 0
      %1159 = vmatpush1.bf16.msra.mxu0 %v1137
      %1160 = vmatprep.subr.bf16.mxu0 0
      %1161 = vmatpush2.bf16.msra.mxu0 0
      %1162 = vmatprep.subr.bf16.mxu0 0
      %1163 = vmatpush2.bf16.msra.mxu0 0
      %1164 = vmatprep.subr.bf16.mxu0 0
      %1165 = vmatpush2.bf16.msra.mxu0 0
      %1166 = vmatprep.subr.bf16.mxu0 0
      %1167 = vmatpush2.bf16.msra.mxu0 0
      %1168 = vmatprep.subr.bf16.mxu0 0
      %1169 = vmatpush2.bf16.msra.mxu0 0
      %1170 = vmatprep.subr.bf16.mxu0 0
      %1171 = vmatpush2.bf16.msra.mxu0 0
      %1172 = vmatprep.subr.bf16.mxu0 0
      %1173 = vmatpush2.bf16.msra.mxu0 0
      %1174 = vmatprep.subr.bf16.mxu0 0
      %1175 = vmatpush2.bf16.msra.mxu0 0
      %1176 = vmatprep.mubr.bf16.mxu0 0
      %1177 = vmatmul.mubr.bf16.gmra.mxu0 %v1142
      %v1178 = vpop.f32.mrf.mxu0
      %v1179 = vadd.f32 0.0, %v1178
      %v1180 = vpop.f32.mrf.mxu0
      %v1181 = vpop.f32.mrf.mxu0
      %v1182 = vadd.f32 0.0, %v1181
      %v1183 = vpop.f32.mrf.mxu0
      %1184 = vdwg.mxu0
      %v1185 = vadd.f32 %v1050, %v1179
      %v1186 = vadd.f32 %v1051, %v1182
      %s1187 = scalar_lea.vmem [#allocation2], 8
      %v1188 = vld [vmem:[%s1187] sm:$0x3]
      %v1189 = vld [vmem:[%s1187 + $0x4] sm:$0x3]
      %v1190 = vld [vmem:[%s1187 + $0x8] sm:$0x3]
      %v1191 = vld [vmem:[%s1187 + $0xc] sm:$0x3]
      %v1192 = vld [vmem:[%s1 + $0x60] sm:$0xf]
      %v1193 = vld [vmem:[%s1 + $0x64] sm:$0xf]
      %v1194 = vld [vmem:[%s1 + $0x68] sm:$0xf]
      %v1195 = vld [vmem:[%s1 + $0x6c] sm:$0xf]
      %v1200 = vcombine.low %v1188, %v1189
      %v1201 = vcombine.low %v1190, %v1191
      %v1203 = vunpack.c.l.s4 1983009808
      %v1204 = vunpack.c.0.s8 %v1203
      %v1205 = vlaneseq
      %v1206 = vshrl.u32 %v1205, 7
      %v1207 = vsub.s32 %v1204, %v1206
      %v1208 = vrot.slane %v1200, %v1207
      %v1210 = vunpack.c.l.s4 1983009808
      %v1211 = vunpack.c.0.s8 %v1210
      %v1212 = vlaneseq
      %v1213 = vshrl.u32 %v1212, 7
      %v1214 = vsub.s32 %v1211, %v1213
      %v1215 = vrot.slane %v1201, %v1214
      %v1216 = vcombine.low %v1208, %v1215
      %v1221 = vunpack.c.l.b16 %v1192
      %v1222 = vunpack.c.l.b16 %v1193
      %v1223 = vunpack.c.l.b16 %v1194
      %v1224 = vunpack.c.l.b16 %v1195
      %v1225 = vpack.c.b16 %v1222, %v1221
      %v1226 = vpack.c.b16 %v1224, %v1223
      %v1230 = vsel %vm526, %v1216, 0
      %1232 = vmatprep.subr.bf16.mxu0 0
      %1233 = vmatpush1.bf16.msra.mxu0 0
      %1234 = vmatprep.subr.bf16.mxu0 0
      %1235 = vmatpush1.bf16.msra.mxu0 0
      %1236 = vmatprep.subr.bf16.mxu0 0
      %1237 = vmatpush1.bf16.msra.mxu0 0
      %1238 = vmatprep.subr.bf16.mxu0 0
      %1239 = vmatpush1.bf16.msra.mxu0 0
      %1240 = vmatprep.subr.bf16.mxu0 0
      %1241 = vmatpush1.bf16.msra.mxu0 0
      %1242 = vmatprep.subr.bf16.mxu0 0
      %1243 = vmatpush1.bf16.msra.mxu0 0
      %1244 = vmatprep.subr.bf16.mxu0 0
      %1245 = vmatpush1.bf16.msra.mxu0 %v1226
      %1246 = vmatprep.subr.bf16.mxu0 0
      %1247 = vmatpush1.bf16.msra.mxu0 %v1225
      %1248 = vmatprep.subr.bf16.mxu0 0
      %1249 = vmatpush2.bf16.msra.mxu0 0
      %1250 = vmatprep.subr.bf16.mxu0 0
      %1251 = vmatpush2.bf16.msra.mxu0 0
      %1252 = vmatprep.subr.bf16.mxu0 0
      %1253 = vmatpush2.bf16.msra.mxu0 0
      %1254 = vmatprep.subr.bf16.mxu0 0
      %1255 = vmatpush2.bf16.msra.mxu0 0
      %1256 = vmatprep.subr.bf16.mxu0 0
      %1257 = vmatpush2.bf16.msra.mxu0 0
      %1258 = vmatprep.subr.bf16.mxu0 0
      %1259 = vmatpush2.bf16.msra.mxu0 0
      %1260 = vmatprep.subr.bf16.mxu0 0
      %1261 = vmatpush2.bf16.msra.mxu0 0
      %1262 = vmatprep.subr.bf16.mxu0 0
      %1263 = vmatpush2.bf16.msra.mxu0 0
      %1264 = vmatprep.mubr.bf16.mxu0 0
      %1265 = vmatmul.mubr.bf16.gmra.mxu0 %v1230
      %v1266 = vpop.f32.mrf.mxu0
      %v1267 = vadd.f32 0.0, %v1266
      %v1268 = vpop.f32.mrf.mxu0
      %v1269 = vpop.f32.mrf.mxu0
      %v1270 = vadd.f32 0.0, %v1269
      %v1271 = vpop.f32.mrf.mxu0
      %1272 = vdwg.mxu0
      %v1273 = vadd.f32 %v1185, %v1267
      %v1274 = vadd.f32 %v1186, %v1270
      %v1275 = vld [vmem:[%s1187] sm:$0x7]
      %v1276 = vld [vmem:[%s1187 + $0x4] sm:$0x7]
      %v1277 = vld [vmem:[%s1187 + $0x8] sm:$0x7]
      %v1278 = vld [vmem:[%s1187 + $0xc] sm:$0x7]
      %v1284 = vunpack.c.l.s4 1983009808
      %v1285 = vunpack.c.0.s8 %v1284
      %v1286 = vlaneseq
      %v1287 = vshrl.u32 %v1286, 7
      %v1288 = vsub.s32 %v1285, %v1287
      %v1289 = vrot.slane %v1275, %v1288
      %v1290 = vcombine.high %v1289, %v1289
      %v1292 = vunpack.c.l.s4 1983009808
      %v1293 = vunpack.c.0.s8 %v1292
      %v1294 = vlaneseq
      %v1295 = vshrl.u32 %v1294, 7
      %v1296 = vsub.s32 %v1293, %v1295
      %v1297 = vrot.slane %v1276, %v1296
      %v1298 = vcombine.high %v1297, %v1297
      %v1300 = vunpack.c.l.s4 1983009808
      %v1301 = vunpack.c.0.s8 %v1300
      %v1302 = vlaneseq
      %v1303 = vshrl.u32 %v1302, 7
      %v1304 = vsub.s32 %v1301, %v1303
      %v1305 = vrot.slane %v1277, %v1304
      %v1306 = vcombine.high %v1305, %v1305
      %v1308 = vunpack.c.l.s4 1983009808
      %v1309 = vunpack.c.0.s8 %v1308
      %v1310 = vlaneseq
      %v1311 = vshrl.u32 %v1310, 7
      %v1312 = vsub.s32 %v1309, %v1311
      %v1313 = vrot.slane %v1278, %v1312
      %v1314 = vcombine.high %v1313, %v1313
      %v1316 = vshrl.u32 %v1289, 16
      %v1318 = vrot.slane %v1316, 6
      %v1319 = vshll.u32 %v1289, 16
      %v1321 = vrot.slane %v1319, 7
      %v1322 = vor.u32 %v1318, %v1321
      %v1323 = vrot.slane %v1322, 2
      %v1325 = vshll.u32 %v1290, 16
      %v1327 = vrot.slane %v1325, 7
      %v1328 = vsel %vm436, %v1323, %v1327
      %v1330 = vshrl.u32 %v1297, 16
      %v1332 = vrot.slane %v1330, 6
      %v1333 = vshll.u32 %v1297, 16
      %v1335 = vrot.slane %v1333, 7
      %v1336 = vor.u32 %v1332, %v1335
      %v1337 = vrot.slane %v1336, 2
      %v1339 = vshll.u32 %v1298, 16
      %v1341 = vrot.slane %v1339, 7
      %v1342 = vsel %vm436, %v1337, %v1341
      %v1344 = vshrl.u32 %v1305, 16
      %v1346 = vrot.slane %v1344, 6
      %v1347 = vshll.u32 %v1305, 16
      %v1349 = vrot.slane %v1347, 7
      %v1350 = vor.u32 %v1346, %v1349
      %v1351 = vrot.slane %v1350, 2
      %v1353 = vshll.u32 %v1306, 16
      %v1355 = vrot.slane %v1353, 7
      %v1356 = vsel %vm436, %v1351, %v1355
      %v1358 = vshrl.u32 %v1313, 16
      %v1360 = vrot.slane %v1358, 6
      %v1361 = vshll.u32 %v1313, 16
      %v1363 = vrot.slane %v1361, 7
      %v1364 = vor.u32 %v1360, %v1363
      %v1365 = vrot.slane %v1364, 2
      %v1367 = vshll.u32 %v1314, 16
      %v1369 = vrot.slane %v1367, 7
      %v1370 = vsel %vm436, %v1365, %v1369
      %v1371 = vld [vmem:[%s1 + $0x70] sm:$0xf]
      %v1372 = vld [vmem:[%s1 + $0x74] sm:$0xf]
      %v1373 = vld [vmem:[%s1 + $0x78] sm:$0xf]
      %v1374 = vld [vmem:[%s1 + $0x7c] sm:$0xf]
      %v1375 = vcombine.low %v1328, %v1342
      %v1376 = vcombine.low %v1356, %v1370
      %v1378 = vunpack.c.l.s4 1983009808
      %v1379 = vunpack.c.0.s8 %v1378
      %v1380 = vlaneseq
      %v1381 = vshrl.u32 %v1380, 7
      %v1382 = vsub.s32 %v1379, %v1381
      %v1383 = vrot.slane %v1375, %v1382
      %v1385 = vunpack.c.l.s4 1983009808
      %v1386 = vunpack.c.0.s8 %v1385
      %v1387 = vlaneseq
      %v1388 = vshrl.u32 %v1387, 7
      %v1389 = vsub.s32 %v1386, %v1388
      %v1390 = vrot.slane %v1376, %v1389
      %v1391 = vcombine.low %v1383, %v1390
      %v1396 = vunpack.c.l.b16 %v1371
      %v1397 = vunpack.c.l.b16 %v1372
      %v1398 = vunpack.c.l.b16 %v1373
      %v1399 = vunpack.c.l.b16 %v1374
      %v1400 = vpack.c.b16 %v1397, %v1396
      %v1401 = vpack.c.b16 %v1399, %v1398
      %v1405 = vsel %vm526, %v1391, 0
      %1407 = vmatprep.subr.bf16.mxu0 0
      %1408 = vmatpush1.bf16.msra.mxu0 0
      %1409 = vmatprep.subr.bf16.mxu0 0
      %1410 = vmatpush1.bf16.msra.mxu0 0
      %1411 = vmatprep.subr.bf16.mxu0 0
      %1412 = vmatpush1.bf16.msra.mxu0 0
      %1413 = vmatprep.subr.bf16.mxu0 0
      %1414 = vmatpush1.bf16.msra.mxu0 0
      %1415 = vmatprep.subr.bf16.mxu0 0
      %1416 = vmatpush1.bf16.msra.mxu0 0
      %1417 = vmatprep.subr.bf16.mxu0 0
      %1418 = vmatpush1.bf16.msra.mxu0 0
      %1419 = vmatprep.subr.bf16.mxu0 0
      %1420 = vmatpush1.bf16.msra.mxu0 %v1401
      %1421 = vmatprep.subr.bf16.mxu0 0
      %1422 = vmatpush1.bf16.msra.mxu0 %v1400
      %1423 = vmatprep.subr.bf16.mxu0 0
      %1424 = vmatpush2.bf16.msra.mxu0 0
      %1425 = vmatprep.subr.bf16.mxu0 0
      %1426 = vmatpush2.bf16.msra.mxu0 0
      %1427 = vmatprep.subr.bf16.mxu0 0
      %1428 = vmatpush2.bf16.msra.mxu0 0
      %1429 = vmatprep.subr.bf16.mxu0 0
      %1430 = vmatpush2.bf16.msra.mxu0 0
      %1431 = vmatprep.subr.bf16.mxu0 0
      %1432 = vmatpush2.bf16.msra.mxu0 0
      %1433 = vmatprep.subr.bf16.mxu0 0
      %1434 = vmatpush2.bf16.msra.mxu0 0
      %1435 = vmatprep.subr.bf16.mxu0 0
      %1436 = vmatpush2.bf16.msra.mxu0 0
      %1437 = vmatprep.subr.bf16.mxu0 0
      %1438 = vmatpush2.bf16.msra.mxu0 0
      %1439 = vmatprep.mubr.bf16.mxu0 0
      %1440 = vmatmul.mubr.bf16.gmra.mxu0 %v1405
      %v1441 = vpop.f32.mrf.mxu0
      %v1442 = vadd.f32 0.0, %v1441
      %v1443 = vpop.f32.mrf.mxu0
      %v1444 = vpop.f32.mrf.mxu0
      %v1445 = vadd.f32 0.0, %v1444
      %v1446 = vpop.f32.mrf.mxu0
      %1447 = vdwg.mxu0
      %v1448 = vadd.f32 %v1273, %v1442
      %v1449 = vadd.f32 %v1274, %v1445
      %v1450 = vld [vmem:[%s1187] sm:$0x6]
      %v1451 = vld [vmem:[%s1187 + $0x4] sm:$0x6]
      %v1452 = vld [vmem:[%s1187 + $0x8] sm:$0x6]
      %v1453 = vld [vmem:[%s1187 + $0xc] sm:$0x6]
      %v1459 = vunpack.c.l.s4 1983009808
      %v1460 = vunpack.c.0.s8 %v1459
      %v1461 = vlaneseq
      %v1462 = vshrl.u32 %v1461, 7
      %v1463 = vsub.s32 %v1460, %v1462
      %v1464 = vrot.slane %v1450, %v1463
      %v1465 = vcombine.high %v1464, %v1464
      %v1467 = vunpack.c.l.s4 1983009808
      %v1468 = vunpack.c.0.s8 %v1467
      %v1469 = vlaneseq
      %v1470 = vshrl.u32 %v1469, 7
      %v1471 = vsub.s32 %v1468, %v1470
      %v1472 = vrot.slane %v1451, %v1471
      %v1473 = vcombine.high %v1472, %v1472
      %v1475 = vunpack.c.l.s4 1983009808
      %v1476 = vunpack.c.0.s8 %v1475
      %v1477 = vlaneseq
      %v1478 = vshrl.u32 %v1477, 7
      %v1479 = vsub.s32 %v1476, %v1478
      %v1480 = vrot.slane %v1452, %v1479
      %v1481 = vcombine.high %v1480, %v1480
      %v1483 = vunpack.c.l.s4 1983009808
      %v1484 = vunpack.c.0.s8 %v1483
      %v1485 = vlaneseq
      %v1486 = vshrl.u32 %v1485, 7
      %v1487 = vsub.s32 %v1484, %v1486
      %v1488 = vrot.slane %v1453, %v1487
      %v1489 = vcombine.high %v1488, %v1488
      %v1490 = vrot.slane %v1464, 7
      %v1491 = vrot.slane %v1490, 2
      %v1492 = vrot.slane %v1465, 7
      %v1493 = vsel %vm694, %v1491, %v1492
      %v1494 = vrot.slane %v1472, 7
      %v1495 = vrot.slane %v1494, 2
      %v1496 = vrot.slane %v1473, 7
      %v1497 = vsel %vm694, %v1495, %v1496
      %v1498 = vrot.slane %v1480, 7
      %v1499 = vrot.slane %v1498, 2
      %v1500 = vrot.slane %v1481, 7
      %v1501 = vsel %vm694, %v1499, %v1500
      %v1502 = vrot.slane %v1488, 7
      %v1503 = vrot.slane %v1502, 2
      %v1504 = vrot.slane %v1489, 7
      %v1505 = vsel %vm694, %v1503, %v1504
      %v1506 = vld [vmem:[%s1 + $0x80] sm:$0xf]
      %v1507 = vld [vmem:[%s1 + $0x84] sm:$0xf]
      %v1508 = vld [vmem:[%s1 + $0x88] sm:$0xf]
      %v1509 = vld [vmem:[%s1 + $0x8c] sm:$0xf]
      %v1510 = vcombine.low %v1493, %v1497
      %v1511 = vcombine.low %v1501, %v1505
      %v1513 = vunpack.c.l.s4 1983009808
      %v1514 = vunpack.c.0.s8 %v1513
      %v1515 = vlaneseq
      %v1516 = vshrl.u32 %v1515, 7
      %v1517 = vsub.s32 %v1514, %v1516
      %v1518 = vrot.slane %v1510, %v1517
      %v1520 = vunpack.c.l.s4 1983009808
      %v1521 = vunpack.c.0.s8 %v1520
      %v1522 = vlaneseq
      %v1523 = vshrl.u32 %v1522, 7
      %v1524 = vsub.s32 %v1521, %v1523
      %v1525 = vrot.slane %v1511, %v1524
      %v1526 = vcombine.low %v1518, %v1525
      %v1531 = vunpack.c.l.b16 %v1506
      %v1532 = vunpack.c.l.b16 %v1507
      %v1533 = vunpack.c.l.b16 %v1508
      %v1534 = vunpack.c.l.b16 %v1509
      %v1535 = vpack.c.b16 %v1532, %v1531
      %v1536 = vpack.c.b16 %v1534, %v1533
      %v1540 = vsel %vm526, %v1526, 0
      %1542 = vmatprep.subr.bf16.mxu0 0
      %1543 = vmatpush1.bf16.msra.mxu0 0
      %1544 = vmatprep.subr.bf16.mxu0 0
      %1545 = vmatpush1.bf16.msra.mxu0 0
      %1546 = vmatprep.subr.bf16.mxu0 0
      %1547 = vmatpush1.bf16.msra.mxu0 0
      %1548 = vmatprep.subr.bf16.mxu0 0
      %1549 = vmatpush1.bf16.msra.mxu0 0
      %1550 = vmatprep.subr.bf16.mxu0 0
      %1551 = vmatpush1.bf16.msra.mxu0 0
      %1552 = vmatprep.subr.bf16.mxu0 0
      %1553 = vmatpush1.bf16.msra.mxu0 0
      %1554 = vmatprep.subr.bf16.mxu0 0
      %1555 = vmatpush1.bf16.msra.mxu0 %v1536
      %1556 = vmatprep.subr.bf16.mxu0 0
      %1557 = vmatpush1.bf16.msra.mxu0 %v1535
      %1558 = vmatprep.subr.bf16.mxu0 0
      %1559 = vmatpush2.bf16.msra.mxu0 0
      %1560 = vmatprep.subr.bf16.mxu0 0
      %1561 = vmatpush2.bf16.msra.mxu0 0
      %1562 = vmatprep.subr.bf16.mxu0 0
      %1563 = vmatpush2.bf16.msra.mxu0 0
      %1564 = vmatprep.subr.bf16.mxu0 0
      %1565 = vmatpush2.bf16.msra.mxu0 0
      %1566 = vmatprep.subr.bf16.mxu0 0
      %1567 = vmatpush2.bf16.msra.mxu0 0
      %1568 = vmatprep.subr.bf16.mxu0 0
      %1569 = vmatpush2.bf16.msra.mxu0 0
      %1570 = vmatprep.subr.bf16.mxu0 0
      %1571 = vmatpush2.bf16.msra.mxu0 0
      %1572 = vmatprep.subr.bf16.mxu0 0
      %1573 = vmatpush2.bf16.msra.mxu0 0
      %1574 = vmatprep.mubr.bf16.mxu0 0
      %1575 = vmatmul.mubr.bf16.gmra.mxu0 %v1540
      %v1576 = vpop.f32.mrf.mxu0
      %v1577 = vadd.f32 0.0, %v1576
      %v1578 = vpop.f32.mrf.mxu0
      %v1579 = vpop.f32.mrf.mxu0
      %v1580 = vadd.f32 0.0, %v1579
      %v1581 = vpop.f32.mrf.mxu0
      %1582 = vdwg.mxu0
      %v1583 = vadd.f32 %v1448, %v1577
      %v1584 = vadd.f32 %v1449, %v1580
      %v1585 = vld [vmem:[%s2] sm:$0x1]
      %v1587 = vlaneseq
      %v1588 = vshrl.u32 %v1587, 7
      %v1589 = vsub.s32 0, %v1588
      %v1590 = vrot.slane %v1585, %v1589
      %v1592 = vadd.f32 %v1583, %v1590
      %v1593 = vadd.f32 %v1584, %v1590
      %v1594 = vsel %vm526, %v1592, 0.0
      %1595 = vadd.xlane.f32.xlu0 %v1594
      %v1596 = vpop.xlane.xlu0 %1595
      %v1597 = vsel %vm526, %v1593, 0.0
      %1598 = vadd.xlane.f32.xlu0 %v1597
      %v1599 = vpop.xlane.xlu0 %1598
      %v1600 = vrcp.pop 32.0
      %v1601 = vmul.f32 %v1596, %v1600
      %v1602 = vmul.f32 %v1599, %v1600
      %v1603 = vsub.f32 %v1592, %v1601
      %v1604 = vsub.f32 %v1593, %v1602
      %v1605 = vmul.f32 %v1603, %v1603
      %v1606 = vmul.f32 %v1604, %v1604
      %v1607 = vsel %vm526, %v1605, 0.0
      %1608 = vadd.xlane.f32.xlu0 %v1607
      %v1609 = vpop.xlane.xlu0 %1608
      %v1610 = vsel %vm526, %v1606, 0.0
      %1611 = vadd.xlane.f32.xlu0 %v1610
      %v1612 = vpop.xlane.xlu0 %1611
      %v1613 = vmul.f32 %v1609, %v1600
      %v1614 = vmul.f32 %v1612, %v1600
      %v1615 = vadd.f32 %v1613, 1e-05
      %v1616 = vadd.f32 %v1614, 1e-05
      %v1617 = vrsqrt.pop %v1615
      %v1618 = vrsqrt.pop %v1616
      %v1619 = vmul.f32 %v1603, %v1617
      %v1620 = vmul.f32 %v1604, %v1618
      %v1621 = vmul.f32 %v1619, 0.5
      %v1622 = vmul.f32 %v1620, 0.5
      %v1623 = vmul.f32 %v1619, 0.70710677
      %v1624 = vmul.f32 %v1620, 0.70710677
      %v1625 = verf.f32.pop %v1623
      %v1626 = verf.f32.pop %v1624
      %v1627 = vadd.f32 %v1625, 1.0
      %v1628 = vadd.f32 %v1626, 1.0
      %v1629 = vmul.f32 %v1621, %v1627
      %v1630 = vmul.f32 %v1622, %v1628
      %v1635 = vcombine.low %v315, %v316
      %v1636 = vcombine.low %v317, %v318
      %v1639 = vadd.f32 %v1629, %v1635
      %v1640 = vadd.f32 %v1630, %v1636
      %v1643 = vcombine.high %v1639, %v1639
      %v1644 = vcombine.high %v1640, %v1640
      %v1647 = vpack.c.bf16 %v1639, %v1639
      %v1648 = vpack.c.bf16 %v1643, %v1643
      %v1649 = vpack.c.bf16 %v1640, %v1640
      %v1650 = vpack.c.bf16 %v1644, %v1644
      %v1655 = vunpack.c.l.b16 %v1647
      %v1656 = vunpack.c.l.b16 %v1648
      %v1657 = vunpack.c.l.b16 %v1649
      %v1658 = vunpack.c.l.b16 %v1650
      %v1659 = vpack.c.b16 %v1655, %v1655
      %v1660 = vpack.c.b16 %v1656, %v1656
      %v1661 = vpack.c.b16 %v1657, %v1657
      %v1662 = vpack.c.b16 %v1658, %v1658
      %v1664 = vshrl.u32 %v1659, 16
      %v1666 = vrot.slane %v1664, 7
      %v1667 = vshll.u32 %v1659, 16
      %v1669 = vor.u32 %v1666, %v1667
      %v1671 = vshrl.u32 %v1660, 16
      %v1673 = vrot.slane %v1671, 7
      %v1674 = vshll.u32 %v1660, 16
      %v1676 = vor.u32 %v1673, %v1674
      %v1678 = vshrl.u32 %v1661, 16
      %v1680 = vrot.slane %v1678, 7
      %v1681 = vshll.u32 %v1661, 16
      %v1683 = vor.u32 %v1680, %v1681
      %v1685 = vshrl.u32 %v1662, 16
      %v1687 = vrot.slane %v1685, 7
      %v1688 = vshll.u32 %v1662, 16
      %v1690 = vor.u32 %v1687, %v1688
      %v1695 = vld [vmem:[%s284] sm:$0x7]
      %v1696 = vsel %vm369, %v1669, %v1695
      %1697 = vst [vmem:[%s284] sm:$0x7] %v1696
      %v1698 = vld [vmem:[%s284 + $0x4] sm:$0x7]
      %v1699 = vsel %vm369, %v1676, %v1698
      %1700 = vst [vmem:[%s284 + $0x4] sm:$0x7] %v1699
      %v1701 = vld [vmem:[%s284 + $0x8] sm:$0x7]
      %v1702 = vsel %vm369, %v1683, %v1701
      %1703 = vst [vmem:[%s284 + $0x8] sm:$0x7] %v1702
      %v1704 = vld [vmem:[%s284 + $0xc] sm:$0x7]
      %v1705 = vsel %vm369, %v1690, %v1704
      %1706 = vst [vmem:[%s284 + $0xc] sm:$0x7] %v1705
      %v1707 = vld [vmem:[#allocation2] sm:$0x3]
      %v1708 = vld [vmem:[#allocation2 + $0x4] sm:$0x3]
      %v1709 = vld [vmem:[#allocation2 + $0x8] sm:$0x3]
      %v1710 = vld [vmem:[#allocation2 + $0xc] sm:$0x3]
      %v1711 = vld [vmem:[%s3] sm:$0xf]
      %v1712 = vld [vmem:[%s3 + $0x4] sm:$0xf]
      %v1713 = vld [vmem:[%s3 + $0x8] sm:$0xf]
      %v1714 = vld [vmem:[%s3 + $0xc] sm:$0xf]
      %v1715 = vld [vmem:[#allocation2] sm:$0x7]
      %v1716 = vld [vmem:[#allocation2 + $0x4] sm:$0x7]
      %v1717 = vld [vmem:[#allocation2 + $0x8] sm:$0x7]
      %v1718 = vld [vmem:[#allocation2 + $0xc] sm:$0x7]
      %v1724 = vunpack.c.l.s4 1983009808
      %v1725 = vunpack.c.0.s8 %v1724
      %v1726 = vlaneseq
      %v1727 = vshrl.u32 %v1726, 7
      %v1728 = vsub.s32 %v1725, %v1727
      %v1729 = vrot.slane %v1715, %v1728
      %v1730 = vcombine.high %v1729, %v1729
      %v1732 = vunpack.c.l.s4 1983009808
      %v1733 = vunpack.c.0.s8 %v1732
      %v1734 = vlaneseq
      %v1735 = vshrl.u32 %v1734, 7
      %v1736 = vsub.s32 %v1733, %v1735
      %v1737 = vrot.slane %v1716, %v1736
      %v1738 = vcombine.high %v1737, %v1737
      %v1740 = vunpack.c.l.s4 1983009808
      %v1741 = vunpack.c.0.s8 %v1740
      %v1742 = vlaneseq
      %v1743 = vshrl.u32 %v1742, 7
      %v1744 = vsub.s32 %v1741, %v1743
      %v1745 = vrot.slane %v1717, %v1744
      %v1746 = vcombine.high %v1745, %v1745
      %v1748 = vunpack.c.l.s4 1983009808
      %v1749 = vunpack.c.0.s8 %v1748
      %v1750 = vlaneseq
      %v1751 = vshrl.u32 %v1750, 7
      %v1752 = vsub.s32 %v1749, %v1751
      %v1753 = vrot.slane %v1718, %v1752
      %v1754 = vcombine.high %v1753, %v1753
      %v1756 = vshrl.u32 %v1729, 16
      %v1758 = vrot.slane %v1756, 6
      %v1759 = vshll.u32 %v1729, 16
      %v1761 = vrot.slane %v1759, 7
      %v1762 = vor.u32 %v1758, %v1761
      %v1763 = vrot.slane %v1762, 2
      %v1765 = vshll.u32 %v1730, 16
      %v1767 = vrot.slane %v1765, 7
      %v1768 = vsel %vm436, %v1763, %v1767
      %v1770 = vshrl.u32 %v1737, 16
      %v1772 = vrot.slane %v1770, 6
      %v1773 = vshll.u32 %v1737, 16
      %v1775 = vrot.slane %v1773, 7
      %v1776 = vor.u32 %v1772, %v1775
      %v1777 = vrot.slane %v1776, 2
      %v1779 = vshll.u32 %v1738, 16
      %v1781 = vrot.slane %v1779, 7
      %v1782 = vsel %vm436, %v1777, %v1781
      %v1784 = vshrl.u32 %v1745, 16
      %v1786 = vrot.slane %v1784, 6
      %v1787 = vshll.u32 %v1745, 16
      %v1789 = vrot.slane %v1787, 7
      %v1790 = vor.u32 %v1786, %v1789
      %v1791 = vrot.slane %v1790, 2
      %v1793 = vshll.u32 %v1746, 16
      %v1795 = vrot.slane %v1793, 7
      %v1796 = vsel %vm436, %v1791, %v1795
      %v1798 = vshrl.u32 %v1753, 16
      %v1800 = vrot.slane %v1798, 6
      %v1801 = vshll.u32 %v1753, 16
      %v1803 = vrot.slane %v1801, 7
      %v1804 = vor.u32 %v1800, %v1803
      %v1805 = vrot.slane %v1804, 2
      %v1807 = vshll.u32 %v1754, 16
      %v1809 = vrot.slane %v1807, 7
      %v1810 = vsel %vm436, %v1805, %v1809
      %v1811 = vld [vmem:[%s3 + $0x10] sm:$0xf]
      %v1812 = vld [vmem:[%s3 + $0x14] sm:$0xf]
      %v1813 = vld [vmem:[%s3 + $0x18] sm:$0xf]
      %v1814 = vld [vmem:[%s3 + $0x1c] sm:$0xf]
      %v1815 = vcombine.low %v1768, %v1782
      %v1816 = vcombine.low %v1796, %v1810
      %v1818 = vunpack.c.l.s4 1983009808
      %v1819 = vunpack.c.0.s8 %v1818
      %v1820 = vlaneseq
      %v1821 = vshrl.u32 %v1820, 7
      %v1822 = vsub.s32 %v1819, %v1821
      %v1823 = vrot.slane %v1815, %v1822
      %v1825 = vunpack.c.l.s4 1983009808
      %v1826 = vunpack.c.0.s8 %v1825
      %v1827 = vlaneseq
      %v1828 = vshrl.u32 %v1827, 7
      %v1829 = vsub.s32 %v1826, %v1828
      %v1830 = vrot.slane %v1816, %v1829
      %v1831 = vcombine.low %v1823, %v1830
      %v1836 = vunpack.c.l.b16 %v1811
      %v1837 = vunpack.c.l.b16 %v1812
      %v1838 = vunpack.c.l.b16 %v1813
      %v1839 = vunpack.c.l.b16 %v1814
      %v1840 = vpack.c.b16 %v1837, %v1836
      %v1841 = vpack.c.b16 %v1839, %v1838
      %v1845 = vsel %vm526, %v1831, 0
      %1847 = vmatprep.subr.bf16.mxu0 0
      %1848 = vmatpush1.bf16.msra.mxu0 0
      %1849 = vmatprep.subr.bf16.mxu0 0
      %1850 = vmatpush1.bf16.msra.mxu0 0
      %1851 = vmatprep.subr.bf16.mxu0 0
      %1852 = vmatpush1.bf16.msra.mxu0 0
      %1853 = vmatprep.subr.bf16.mxu0 0
      %1854 = vmatpush1.bf16.msra.mxu0 0
      %1855 = vmatprep.subr.bf16.mxu0 0
      %1856 = vmatpush1.bf16.msra.mxu0 0
      %1857 = vmatprep.subr.bf16.mxu0 0
      %1858 = vmatpush1.bf16.msra.mxu0 0
      %1859 = vmatprep.subr.bf16.mxu0 0
      %1860 = vmatpush1.bf16.msra.mxu0 %v1841
      %1861 = vmatprep.subr.bf16.mxu0 0
      %1862 = vmatpush1.bf16.msra.mxu0 %v1840
      %1863 = vmatprep.subr.bf16.mxu0 0
      %1864 = vmatpush2.bf16.msra.mxu0 0
      %1865 = vmatprep.subr.bf16.mxu0 0
      %1866 = vmatpush2.bf16.msra.mxu0 0
      %1867 = vmatprep.subr.bf16.mxu0 0
      %1868 = vmatpush2.bf16.msra.mxu0 0
      %1869 = vmatprep.subr.bf16.mxu0 0
      %1870 = vmatpush2.bf16.msra.mxu0 0
      %1871 = vmatprep.subr.bf16.mxu0 0
      %1872 = vmatpush2.bf16.msra.mxu0 0
      %1873 = vmatprep.subr.bf16.mxu0 0
      %1874 = vmatpush2.bf16.msra.mxu0 0
      %1875 = vmatprep.subr.bf16.mxu0 0
      %1876 = vmatpush2.bf16.msra.mxu0 0
      %1877 = vmatprep.subr.bf16.mxu0 0
      %1878 = vmatpush2.bf16.msra.mxu0 0
      %1879 = vmatprep.mubr.bf16.mxu0 0
      %1880 = vmatmul.mubr.bf16.gmra.mxu0 %v1845
      %v1881 = vpop.f32.mrf.mxu0
      %v1882 = vadd.f32 0.0, %v1881
      %v1883 = vpop.f32.mrf.mxu0
      %v1884 = vpop.f32.mrf.mxu0
      %v1885 = vadd.f32 0.0, %v1884
      %v1886 = vpop.f32.mrf.mxu0
      %1887 = vdwg.mxu0
      %v1892 = vcombine.low %v1707, %v1708
      %v1893 = vcombine.low %v1709, %v1710
      %v1895 = vunpack.c.l.s4 1983009808
      %v1896 = vunpack.c.0.s8 %v1895
      %v1897 = vlaneseq
      %v1898 = vshrl.u32 %v1897, 7
      %v1899 = vsub.s32 %v1896, %v1898
      %v1900 = vrot.slane %v1892, %v1899
      %v1902 = vunpack.c.l.s4 1983009808
      %v1903 = vunpack.c.0.s8 %v1902
      %v1904 = vlaneseq
      %v1905 = vshrl.u32 %v1904, 7
      %v1906 = vsub.s32 %v1903, %v1905
      %v1907 = vrot.slane %v1893, %v1906
      %v1908 = vcombine.low %v1900, %v1907
      %v1913 = vunpack.c.l.b16 %v1711
      %v1914 = vunpack.c.l.b16 %v1712
      %v1915 = vunpack.c.l.b16 %v1713
      %v1916 = vunpack.c.l.b16 %v1714
      %v1917 = vpack.c.b16 %v1914, %v1913
      %v1918 = vpack.c.b16 %v1916, %v1915
      %v1922 = vsel %vm526, %v1908, 0
      %1924 = vmatprep.subr.bf16.mxu0 0
      %1925 = vmatpush1.bf16.msra.mxu0 0
      %1926 = vmatprep.subr.bf16.mxu0 0
      %1927 = vmatpush1.bf16.msra.mxu0 0
      %1928 = vmatprep.subr.bf16.mxu0 0
      %1929 = vmatpush1.bf16.msra.mxu0 0
      %1930 = vmatprep.subr.bf16.mxu0 0
      %1931 = vmatpush1.bf16.msra.mxu0 0
      %1932 = vmatprep.subr.bf16.mxu0 0
      %1933 = vmatpush1.bf16.msra.mxu0 0
      %1934 = vmatprep.subr.bf16.mxu0 0
      %1935 = vmatpush1.bf16.msra.mxu0 0
      %1936 = vmatprep.subr.bf16.mxu0 0
      %1937 = vmatpush1.bf16.msra.mxu0 %v1918
      %1938 = vmatprep.subr.bf16.mxu0 0
      %1939 = vmatpush1.bf16.msra.mxu0 %v1917
      %1940 = vmatprep.subr.bf16.mxu0 0
      %1941 = vmatpush2.bf16.msra.mxu0 0
      %1942 = vmatprep.subr.bf16.mxu0 0
      %1943 = vmatpush2.bf16.msra.mxu0 0
      %1944 = vmatprep.subr.bf16.mxu0 0
      %1945 = vmatpush2.bf16.msra.mxu0 0
      %1946 = vmatprep.subr.bf16.mxu0 0
      %1947 = vmatpush2.bf16.msra.mxu0 0
      %1948 = vmatprep.subr.bf16.mxu0 0
      %1949 = vmatpush2.bf16.msra.mxu0 0
      %1950 = vmatprep.subr.bf16.mxu0 0
      %1951 = vmatpush2.bf16.msra.mxu0 0
      %1952 = vmatprep.subr.bf16.mxu0 0
      %1953 = vmatpush2.bf16.msra.mxu0 0
      %1954 = vmatprep.subr.bf16.mxu0 0
      %1955 = vmatpush2.bf16.msra.mxu0 0
      %1956 = vmatprep.mubr.bf16.mxu0 0
      %1957 = vmatmul.mubr.bf16.gmra.mxu0 %v1922
      %v1958 = vpop.f32.mrf.mxu0
      %v1959 = vadd.f32 %v1882, %v1958
      %v1960 = vpop.f32.mrf.mxu0
      %v1961 = vpop.f32.mrf.mxu0
      %v1962 = vadd.f32 %v1885, %v1961
      %v1963 = vpop.f32.mrf.mxu0
      %1964 = vdwg.mxu0
      %v1965 = vld [vmem:[#allocation2] sm:$0x6]
      %v1966 = vld [vmem:[#allocation2 + $0x4] sm:$0x6]
      %v1967 = vld [vmem:[#allocation2 + $0x8] sm:$0x6]
      %v1968 = vld [vmem:[#allocation2 + $0xc] sm:$0x6]
      %v1974 = vunpack.c.l.s4 1983009808
      %v1975 = vunpack.c.0.s8 %v1974
      %v1976 = vlaneseq
      %v1977 = vshrl.u32 %v1976, 7
      %v1978 = vsub.s32 %v1975, %v1977
      %v1979 = vrot.slane %v1965, %v1978
      %v1980 = vcombine.high %v1979, %v1979
      %v1982 = vunpack.c.l.s4 1983009808
      %v1983 = vunpack.c.0.s8 %v1982
      %v1984 = vlaneseq
      %v1985 = vshrl.u32 %v1984, 7
      %v1986 = vsub.s32 %v1983, %v1985
      %v1987 = vrot.slane %v1966, %v1986
      %v1988 = vcombine.high %v1987, %v1987
      %v1990 = vunpack.c.l.s4 1983009808
      %v1991 = vunpack.c.0.s8 %v1990
      %v1992 = vlaneseq
      %v1993 = vshrl.u32 %v1992, 7
      %v1994 = vsub.s32 %v1991, %v1993
      %v1995 = vrot.slane %v1967, %v1994
      %v1996 = vcombine.high %v1995, %v1995
      %v1998 = vunpack.c.l.s4 1983009808
      %v1999 = vunpack.c.0.s8 %v1998
      %v2000 = vlaneseq
      %v2001 = vshrl.u32 %v2000, 7
      %v2002 = vsub.s32 %v1999, %v2001
      %v2003 = vrot.slane %v1968, %v2002
      %v2004 = vcombine.high %v2003, %v2003
      %v2005 = vrot.slane %v1979, 7
      %v2006 = vrot.slane %v2005, 2
      %v2007 = vrot.slane %v1980, 7
      %v2008 = vsel %vm694, %v2006, %v2007
      %v2009 = vrot.slane %v1987, 7
      %v2010 = vrot.slane %v2009, 2
      %v2011 = vrot.slane %v1988, 7
      %v2012 = vsel %vm694, %v2010, %v2011
      %v2013 = vrot.slane %v1995, 7
      %v2014 = vrot.slane %v2013, 2
      %v2015 = vrot.slane %v1996, 7
      %v2016 = vsel %vm694, %v2014, %v2015
      %v2017 = vrot.slane %v2003, 7
      %v2018 = vrot.slane %v2017, 2
      %v2019 = vrot.slane %v2004, 7
      %v2020 = vsel %vm694, %v2018, %v2019
      %v2021 = vld [vmem:[%s3 + $0x20] sm:$0xf]
      %v2022 = vld [vmem:[%s3 + $0x24] sm:$0xf]
      %v2023 = vld [vmem:[%s3 + $0x28] sm:$0xf]
      %v2024 = vld [vmem:[%s3 + $0x2c] sm:$0xf]
      %v2025 = vcombine.low %v2008, %v2012
      %v2026 = vcombine.low %v2016, %v2020
      %v2028 = vunpack.c.l.s4 1983009808
      %v2029 = vunpack.c.0.s8 %v2028
      %v2030 = vlaneseq
      %v2031 = vshrl.u32 %v2030, 7
      %v2032 = vsub.s32 %v2029, %v2031
      %v2033 = vrot.slane %v2025, %v2032
      %v2035 = vunpack.c.l.s4 1983009808
      %v2036 = vunpack.c.0.s8 %v2035
      %v2037 = vlaneseq
      %v2038 = vshrl.u32 %v2037, 7
      %v2039 = vsub.s32 %v2036, %v2038
      %v2040 = vrot.slane %v2026, %v2039
      %v2041 = vcombine.low %v2033, %v2040
      %v2046 = vunpack.c.l.b16 %v2021
      %v2047 = vunpack.c.l.b16 %v2022
      %v2048 = vunpack.c.l.b16 %v2023
      %v2049 = vunpack.c.l.b16 %v2024
      %v2050 = vpack.c.b16 %v2047, %v2046
      %v2051 = vpack.c.b16 %v2049, %v2048
      %v2055 = vsel %vm526, %v2041, 0
      %2057 = vmatprep.subr.bf16.mxu0 0
      %2058 = vmatpush1.bf16.msra.mxu0 0
      %2059 = vmatprep.subr.bf16.mxu0 0
      %2060 = vmatpush1.bf16.msra.mxu0 0
      %2061 = vmatprep.subr.bf16.mxu0 0
      %2062 = vmatpush1.bf16.msra.mxu0 0
      %2063 = vmatprep.subr.bf16.mxu0 0
      %2064 = vmatpush1.bf16.msra.mxu0 0
      %2065 = vmatprep.subr.bf16.mxu0 0
      %2066 = vmatpush1.bf16.msra.mxu0 0
      %2067 = vmatprep.subr.bf16.mxu0 0
      %2068 = vmatpush1.bf16.msra.mxu0 0
      %2069 = vmatprep.subr.bf16.mxu0 0
      %2070 = vmatpush1.bf16.msra.mxu0 %v2051
      %2071 = vmatprep.subr.bf16.mxu0 0
      %2072 = vmatpush1.bf16.msra.mxu0 %v2050
      %2073 = vmatprep.subr.bf16.mxu0 0
      %2074 = vmatpush2.bf16.msra.mxu0 0
      %2075 = vmatprep.subr.bf16.mxu0 0
      %2076 = vmatpush2.bf16.msra.mxu0 0
      %2077 = vmatprep.subr.bf16.mxu0 0
      %2078 = vmatpush2.bf16.msra.mxu0 0
      %2079 = vmatprep.subr.bf16.mxu0 0
      %2080 = vmatpush2.bf16.msra.mxu0 0
      %2081 = vmatprep.subr.bf16.mxu0 0
      %2082 = vmatpush2.bf16.msra.mxu0 0
      %2083 = vmatprep.subr.bf16.mxu0 0
      %2084 = vmatpush2.bf16.msra.mxu0 0
      %2085 = vmatprep.subr.bf16.mxu0 0
      %2086 = vmatpush2.bf16.msra.mxu0 0
      %2087 = vmatprep.subr.bf16.mxu0 0
      %2088 = vmatpush2.bf16.msra.mxu0 0
      %2089 = vmatprep.mubr.bf16.mxu0 0
      %2090 = vmatmul.mubr.bf16.gmra.mxu0 %v2055
      %v2091 = vpop.f32.mrf.mxu0
      %v2092 = vadd.f32 0.0, %v2091
      %v2093 = vpop.f32.mrf.mxu0
      %v2094 = vpop.f32.mrf.mxu0
      %v2095 = vadd.f32 0.0, %v2094
      %v2096 = vpop.f32.mrf.mxu0
      %2097 = vdwg.mxu0
      %v2098 = vadd.f32 %v1959, %v2092
      %v2099 = vadd.f32 %v1962, %v2095
      %v2100 = vld [vmem:[%s284] sm:$0x3]
      %v2101 = vld [vmem:[%s284 + $0x4] sm:$0x3]
      %v2102 = vld [vmem:[%s284 + $0x8] sm:$0x3]
      %v2103 = vld [vmem:[%s284 + $0xc] sm:$0x3]
      %v2104 = vld [vmem:[%s3 + $0x30] sm:$0xf]
      %v2105 = vld [vmem:[%s3 + $0x34] sm:$0xf]
      %v2106 = vld [vmem:[%s3 + $0x38] sm:$0xf]
      %v2107 = vld [vmem:[%s3 + $0x3c] sm:$0xf]
      %v2112 = vcombine.low %v2100, %v2101
      %v2113 = vcombine.low %v2102, %v2103
      %v2115 = vunpack.c.l.s4 1983009808
      %v2116 = vunpack.c.0.s8 %v2115
      %v2117 = vlaneseq
      %v2118 = vshrl.u32 %v2117, 7
      %v2119 = vsub.s32 %v2116, %v2118
      %v2120 = vrot.slane %v2112, %v2119
      %v2122 = vunpack.c.l.s4 1983009808
      %v2123 = vunpack.c.0.s8 %v2122
      %v2124 = vlaneseq
      %v2125 = vshrl.u32 %v2124, 7
      %v2126 = vsub.s32 %v2123, %v2125
      %v2127 = vrot.slane %v2113, %v2126
      %v2128 = vcombine.low %v2120, %v2127
      %v2133 = vunpack.c.l.b16 %v2104
      %v2134 = vunpack.c.l.b16 %v2105
      %v2135 = vunpack.c.l.b16 %v2106
      %v2136 = vunpack.c.l.b16 %v2107
      %v2137 = vpack.c.b16 %v2134, %v2133
      %v2138 = vpack.c.b16 %v2136, %v2135
      %v2142 = vsel %vm526, %v2128, 0
      %2144 = vmatprep.subr.bf16.mxu0 0
      %2145 = vmatpush1.bf16.msra.mxu0 0
      %2146 = vmatprep.subr.bf16.mxu0 0
      %2147 = vmatpush1.bf16.msra.mxu0 0
      %2148 = vmatprep.subr.bf16.mxu0 0
      %2149 = vmatpush1.bf16.msra.mxu0 0
      %2150 = vmatprep.subr.bf16.mxu0 0
      %2151 = vmatpush1.bf16.msra.mxu0 0
      %2152 = vmatprep.subr.bf16.mxu0 0
      %2153 = vmatpush1.bf16.msra.mxu0 0
      %2154 = vmatprep.subr.bf16.mxu0 0
      %2155 = vmatpush1.bf16.msra.mxu0 0
      %2156 = vmatprep.subr.bf16.mxu0 0
      %2157 = vmatpush1.bf16.msra.mxu0 %v2138
      %2158 = vmatprep.subr.bf16.mxu0 0
      %2159 = vmatpush1.bf16.msra.mxu0 %v2137
      %2160 = vmatprep.subr.bf16.mxu0 0
      %2161 = vmatpush2.bf16.msra.mxu0 0
      %2162 = vmatprep.subr.bf16.mxu0 0
      %2163 = vmatpush2.bf16.msra.mxu0 0
      %2164 = vmatprep.subr.bf16.mxu0 0
      %2165 = vmatpush2.bf16.msra.mxu0 0
      %2166 = vmatprep.subr.bf16.mxu0 0
      %2167 = vmatpush2.bf16.msra.mxu0 0
      %2168 = vmatprep.subr.bf16.mxu0 0
      %2169 = vmatpush2.bf16.msra.mxu0 0
      %2170 = vmatprep.subr.bf16.mxu0 0
      %2171 = vmatpush2.bf16.msra.mxu0 0
      %2172 = vmatprep.subr.bf16.mxu0 0
      %2173 = vmatpush2.bf16.msra.mxu0 0
      %2174 = vmatprep.subr.bf16.mxu0 0
      %2175 = vmatpush2.bf16.msra.mxu0 0
      %2176 = vmatprep.mubr.bf16.mxu0 0
      %2177 = vmatmul.mubr.bf16.gmra.mxu0 %v2142
      %v2178 = vpop.f32.mrf.mxu0
      %v2179 = vadd.f32 0.0, %v2178
      %v2180 = vpop.f32.mrf.mxu0
      %v2181 = vpop.f32.mrf.mxu0
      %v2182 = vadd.f32 0.0, %v2181
      %v2183 = vpop.f32.mrf.mxu0
      %2184 = vdwg.mxu0
      %v2185 = vadd.f32 %v2098, %v2179
      %v2186 = vadd.f32 %v2099, %v2182
      %v2187 = vld [vmem:[%s284] sm:$0x7]
      %v2188 = vld [vmem:[%s284 + $0x4] sm:$0x7]
      %v2189 = vld [vmem:[%s284 + $0x8] sm:$0x7]
      %v2190 = vld [vmem:[%s284 + $0xc] sm:$0x7]
      %v2196 = vunpack.c.l.s4 1983009808
      %v2197 = vunpack.c.0.s8 %v2196
      %v2198 = vlaneseq
      %v2199 = vshrl.u32 %v2198, 7
      %v2200 = vsub.s32 %v2197, %v2199
      %v2201 = vrot.slane %v2187, %v2200
      %v2202 = vcombine.high %v2201, %v2201
      %v2204 = vunpack.c.l.s4 1983009808
      %v2205 = vunpack.c.0.s8 %v2204
      %v2206 = vlaneseq
      %v2207 = vshrl.u32 %v2206, 7
      %v2208 = vsub.s32 %v2205, %v2207
      %v2209 = vrot.slane %v2188, %v2208
      %v2210 = vcombine.high %v2209, %v2209
      %v2212 = vunpack.c.l.s4 1983009808
      %v2213 = vunpack.c.0.s8 %v2212
      %v2214 = vlaneseq
      %v2215 = vshrl.u32 %v2214, 7
      %v2216 = vsub.s32 %v2213, %v2215
      %v2217 = vrot.slane %v2189, %v2216
      %v2218 = vcombine.high %v2217, %v2217
      %v2220 = vunpack.c.l.s4 1983009808
      %v2221 = vunpack.c.0.s8 %v2220
      %v2222 = vlaneseq
      %v2223 = vshrl.u32 %v2222, 7
      %v2224 = vsub.s32 %v2221, %v2223
      %v2225 = vrot.slane %v2190, %v2224
      %v2226 = vcombine.high %v2225, %v2225
      %v2228 = vshrl.u32 %v2201, 16
      %v2230 = vrot.slane %v2228, 6
      %v2231 = vshll.u32 %v2201, 16
      %v2233 = vrot.slane %v2231, 7
      %v2234 = vor.u32 %v2230, %v2233
      %v2235 = vrot.slane %v2234, 2
      %v2237 = vshll.u32 %v2202, 16
      %v2239 = vrot.slane %v2237, 7
      %v2240 = vsel %vm436, %v2235, %v2239
      %v2242 = vshrl.u32 %v2209, 16
      %v2244 = vrot.slane %v2242, 6
      %v2245 = vshll.u32 %v2209, 16
      %v2247 = vrot.slane %v2245, 7
      %v2248 = vor.u32 %v2244, %v2247
      %v2249 = vrot.slane %v2248, 2
      %v2251 = vshll.u32 %v2210, 16
      %v2253 = vrot.slane %v2251, 7
      %v2254 = vsel %vm436, %v2249, %v2253
      %v2256 = vshrl.u32 %v2217, 16
      %v2258 = vrot.slane %v2256, 6
      %v2259 = vshll.u32 %v2217, 16
      %v2261 = vrot.slane %v2259, 7
      %v2262 = vor.u32 %v2258, %v2261
      %v2263 = vrot.slane %v2262, 2
      %v2265 = vshll.u32 %v2218, 16
      %v2267 = vrot.slane %v2265, 7
      %v2268 = vsel %vm436, %v2263, %v2267
      %v2270 = vshrl.u32 %v2225, 16
      %v2272 = vrot.slane %v2270, 6
      %v2273 = vshll.u32 %v2225, 16
      %v2275 = vrot.slane %v2273, 7
      %v2276 = vor.u32 %v2272, %v2275
      %v2277 = vrot.slane %v2276, 2
      %v2279 = vshll.u32 %v2226, 16
      %v2281 = vrot.slane %v2279, 7
      %v2282 = vsel %vm436, %v2277, %v2281
      %v2283 = vld [vmem:[%s3 + $0x40] sm:$0xf]
      %v2284 = vld [vmem:[%s3 + $0x44] sm:$0xf]
      %v2285 = vld [vmem:[%s3 + $0x48] sm:$0xf]
      %v2286 = vld [vmem:[%s3 + $0x4c] sm:$0xf]
      %v2287 = vcombine.low %v2240, %v2254
      %v2288 = vcombine.low %v2268, %v2282
      %v2290 = vunpack.c.l.s4 1983009808
      %v2291 = vunpack.c.0.s8 %v2290
      %v2292 = vlaneseq
      %v2293 = vshrl.u32 %v2292, 7
      %v2294 = vsub.s32 %v2291, %v2293
      %v2295 = vrot.slane %v2287, %v2294
      %v2297 = vunpack.c.l.s4 1983009808
      %v2298 = vunpack.c.0.s8 %v2297
      %v2299 = vlaneseq
      %v2300 = vshrl.u32 %v2299, 7
      %v2301 = vsub.s32 %v2298, %v2300
      %v2302 = vrot.slane %v2288, %v2301
      %v2303 = vcombine.low %v2295, %v2302
      %v2308 = vunpack.c.l.b16 %v2283
      %v2309 = vunpack.c.l.b16 %v2284
      %v2310 = vunpack.c.l.b16 %v2285
      %v2311 = vunpack.c.l.b16 %v2286
      %v2312 = vpack.c.b16 %v2309, %v2308
      %v2313 = vpack.c.b16 %v2311, %v2310
      %v2317 = vsel %vm526, %v2303, 0
      %2319 = vmatprep.subr.bf16.mxu0 0
      %2320 = vmatpush1.bf16.msra.mxu0 0
      %2321 = vmatprep.subr.bf16.mxu0 0
      %2322 = vmatpush1.bf16.msra.mxu0 0
      %2323 = vmatprep.subr.bf16.mxu0 0
      %2324 = vmatpush1.bf16.msra.mxu0 0
      %2325 = vmatprep.subr.bf16.mxu0 0
      %2326 = vmatpush1.bf16.msra.mxu0 0
      %2327 = vmatprep.subr.bf16.mxu0 0
      %2328 = vmatpush1.bf16.msra.mxu0 0
      %2329 = vmatprep.subr.bf16.mxu0 0
      %2330 = vmatpush1.bf16.msra.mxu0 0
      %2331 = vmatprep.subr.bf16.mxu0 0
      %2332 = vmatpush1.bf16.msra.mxu0 %v2313
      %2333 = vmatprep.subr.bf16.mxu0 0
      %2334 = vmatpush1.bf16.msra.mxu0 %v2312
      %2335 = vmatprep.subr.bf16.mxu0 0
      %2336 = vmatpush2.bf16.msra.mxu0 0
      %2337 = vmatprep.subr.bf16.mxu0 0
      %2338 = vmatpush2.bf16.msra.mxu0 0
      %2339 = vmatprep.subr.bf16.mxu0 0
      %2340 = vmatpush2.bf16.msra.mxu0 0
      %2341 = vmatprep.subr.bf16.mxu0 0
      %2342 = vmatpush2.bf16.msra.mxu0 0
      %2343 = vmatprep.subr.bf16.mxu0 0
      %2344 = vmatpush2.bf16.msra.mxu0 0
      %2345 = vmatprep.subr.bf16.mxu0 0
      %2346 = vmatpush2.bf16.msra.mxu0 0
      %2347 = vmatprep.subr.bf16.mxu0 0
      %2348 = vmatpush2.bf16.msra.mxu0 0
      %2349 = vmatprep.subr.bf16.mxu0 0
      %2350 = vmatpush2.bf16.msra.mxu0 0
      %2351 = vmatprep.mubr.bf16.mxu0 0
      %2352 = vmatmul.mubr.bf16.gmra.mxu0 %v2317
      %v2353 = vpop.f32.mrf.mxu0
      %v2354 = vadd.f32 0.0, %v2353
      %v2355 = vpop.f32.mrf.mxu0
      %v2356 = vpop.f32.mrf.mxu0
      %v2357 = vadd.f32 0.0, %v2356
      %v2358 = vpop.f32.mrf.mxu0
      %2359 = vdwg.mxu0
      %v2360 = vadd.f32 %v2185, %v2354
      %v2361 = vadd.f32 %v2186, %v2357
      %v2362 = vld [vmem:[%s284] sm:$0x6]
      %v2363 = vld [vmem:[%s284 + $0x4] sm:$0x6]
      %v2364 = vld [vmem:[%s284 + $0x8] sm:$0x6]
      %v2365 = vld [vmem:[%s284 + $0xc] sm:$0x6]
      %v2371 = vunpack.c.l.s4 1983009808
      %v2372 = vunpack.c.0.s8 %v2371
      %v2373 = vlaneseq
      %v2374 = vshrl.u32 %v2373, 7
      %v2375 = vsub.s32 %v2372, %v2374
      %v2376 = vrot.slane %v2362, %v2375
      %v2377 = vcombine.high %v2376, %v2376
      %v2379 = vunpack.c.l.s4 1983009808
      %v2380 = vunpack.c.0.s8 %v2379
      %v2381 = vlaneseq
      %v2382 = vshrl.u32 %v2381, 7
      %v2383 = vsub.s32 %v2380, %v2382
      %v2384 = vrot.slane %v2363, %v2383
      %v2385 = vcombine.high %v2384, %v2384
      %v2387 = vunpack.c.l.s4 1983009808
      %v2388 = vunpack.c.0.s8 %v2387
      %v2389 = vlaneseq
      %v2390 = vshrl.u32 %v2389, 7
      %v2391 = vsub.s32 %v2388, %v2390
      %v2392 = vrot.slane %v2364, %v2391
      %v2393 = vcombine.high %v2392, %v2392
      %v2395 = vunpack.c.l.s4 1983009808
      %v2396 = vunpack.c.0.s8 %v2395
      %v2397 = vlaneseq
      %v2398 = vshrl.u32 %v2397, 7
      %v2399 = vsub.s32 %v2396, %v2398
      %v2400 = vrot.slane %v2365, %v2399
      %v2401 = vcombine.high %v2400, %v2400
      %v2402 = vrot.slane %v2376, 7
      %v2403 = vrot.slane %v2402, 2
      %v2404 = vrot.slane %v2377, 7
      %v2405 = vsel %vm694, %v2403, %v2404
      %v2406 = vrot.slane %v2384, 7
      %v2407 = vrot.slane %v2406, 2
      %v2408 = vrot.slane %v2385, 7
      %v2409 = vsel %vm694, %v2407, %v2408
      %v2410 = vrot.slane %v2392, 7
      %v2411 = vrot.slane %v2410, 2
      %v2412 = vrot.slane %v2393, 7
      %v2413 = vsel %vm694, %v2411, %v2412
      %v2414 = vrot.slane %v2400, 7
      %v2415 = vrot.slane %v2414, 2
      %v2416 = vrot.slane %v2401, 7
      %v2417 = vsel %vm694, %v2415, %v2416
      %v2418 = vld [vmem:[%s3 + $0x50] sm:$0xf]
      %v2419 = vld [vmem:[%s3 + $0x54] sm:$0xf]
      %v2420 = vld [vmem:[%s3 + $0x58] sm:$0xf]
      %v2421 = vld [vmem:[%s3 + $0x5c] sm:$0xf]
      %v2422 = vcombine.low %v2405, %v2409
      %v2423 = vcombine.low %v2413, %v2417
      %v2425 = vunpack.c.l.s4 1983009808
      %v2426 = vunpack.c.0.s8 %v2425
      %v2427 = vlaneseq
      %v2428 = vshrl.u32 %v2427, 7
      %v2429 = vsub.s32 %v2426, %v2428
      %v2430 = vrot.slane %v2422, %v2429
      %v2432 = vunpack.c.l.s4 1983009808
      %v2433 = vunpack.c.0.s8 %v2432
      %v2434 = vlaneseq
      %v2435 = vshrl.u32 %v2434, 7
      %v2436 = vsub.s32 %v2433, %v2435
      %v2437 = vrot.slane %v2423, %v2436
      %v2438 = vcombine.low %v2430, %v2437
      %v2443 = vunpack.c.l.b16 %v2418
      %v2444 = vunpack.c.l.b16 %v2419
      %v2445 = vunpack.c.l.b16 %v2420
      %v2446 = vunpack.c.l.b16 %v2421
      %v2447 = vpack.c.b16 %v2444, %v2443
      %v2448 = vpack.c.b16 %v2446, %v2445
      %v2452 = vsel %vm526, %v2438, 0
      %2454 = vmatprep.subr.bf16.mxu0 0
      %2455 = vmatpush1.bf16.msra.mxu0 0
      %2456 = vmatprep.subr.bf16.mxu0 0
      %2457 = vmatpush1.bf16.msra.mxu0 0
      %2458 = vmatprep.subr.bf16.mxu0 0
      %2459 = vmatpush1.bf16.msra.mxu0 0
      %2460 = vmatprep.subr.bf16.mxu0 0
      %2461 = vmatpush1.bf16.msra.mxu0 0
      %2462 = vmatprep.subr.bf16.mxu0 0
      %2463 = vmatpush1.bf16.msra.mxu0 0
      %2464 = vmatprep.subr.bf16.mxu0 0
      %2465 = vmatpush1.bf16.msra.mxu0 0
      %2466 = vmatprep.subr.bf16.mxu0 0
      %2467 = vmatpush1.bf16.msra.mxu0 %v2448
      %2468 = vmatprep.subr.bf16.mxu0 0
      %2469 = vmatpush1.bf16.msra.mxu0 %v2447
      %2470 = vmatprep.subr.bf16.mxu0 0
      %2471 = vmatpush2.bf16.msra.mxu0 0
      %2472 = vmatprep.subr.bf16.mxu0 0
      %2473 = vmatpush2.bf16.msra.mxu0 0
      %2474 = vmatprep.subr.bf16.mxu0 0
      %2475 = vmatpush2.bf16.msra.mxu0 0
      %2476 = vmatprep.subr.bf16.mxu0 0
      %2477 = vmatpush2.bf16.msra.mxu0 0
      %2478 = vmatprep.subr.bf16.mxu0 0
      %2479 = vmatpush2.bf16.msra.mxu0 0
      %2480 = vmatprep.subr.bf16.mxu0 0
      %2481 = vmatpush2.bf16.msra.mxu0 0
      %2482 = vmatprep.subr.bf16.mxu0 0
      %2483 = vmatpush2.bf16.msra.mxu0 0
      %2484 = vmatprep.subr.bf16.mxu0 0
      %2485 = vmatpush2.bf16.msra.mxu0 0
      %2486 = vmatprep.mubr.bf16.mxu0 0
      %2487 = vmatmul.mubr.bf16.gmra.mxu0 %v2452
      %v2488 = vpop.f32.mrf.mxu0
      %v2489 = vadd.f32 0.0, %v2488
      %v2490 = vpop.f32.mrf.mxu0
      %v2491 = vpop.f32.mrf.mxu0
      %v2492 = vadd.f32 0.0, %v2491
      %v2493 = vpop.f32.mrf.mxu0
      %2494 = vdwg.mxu0
      %v2495 = vadd.f32 %v2360, %v2489
      %v2496 = vadd.f32 %v2361, %v2492
      %v2497 = vld [vmem:[%s1187] sm:$0x3]
      %v2498 = vld [vmem:[%s1187 + $0x4] sm:$0x3]
      %v2499 = vld [vmem:[%s1187 + $0x8] sm:$0x3]
      %v2500 = vld [vmem:[%s1187 + $0xc] sm:$0x3]
      %v2501 = vld [vmem:[%s3 + $0x60] sm:$0xf]
      %v2502 = vld [vmem:[%s3 + $0x64] sm:$0xf]
      %v2503 = vld [vmem:[%s3 + $0x68] sm:$0xf]
      %v2504 = vld [vmem:[%s3 + $0x6c] sm:$0xf]
      %v2509 = vcombine.low %v2497, %v2498
      %v2510 = vcombine.low %v2499, %v2500
      %v2512 = vunpack.c.l.s4 1983009808
      %v2513 = vunpack.c.0.s8 %v2512
      %v2514 = vlaneseq
      %v2515 = vshrl.u32 %v2514, 7
      %v2516 = vsub.s32 %v2513, %v2515
      %v2517 = vrot.slane %v2509, %v2516
      %v2519 = vunpack.c.l.s4 1983009808
      %v2520 = vunpack.c.0.s8 %v2519
      %v2521 = vlaneseq
      %v2522 = vshrl.u32 %v2521, 7
      %v2523 = vsub.s32 %v2520, %v2522
      %v2524 = vrot.slane %v2510, %v2523
      %v2525 = vcombine.low %v2517, %v2524
      %v2530 = vunpack.c.l.b16 %v2501
      %v2531 = vunpack.c.l.b16 %v2502
      %v2532 = vunpack.c.l.b16 %v2503
      %v2533 = vunpack.c.l.b16 %v2504
      %v2534 = vpack.c.b16 %v2531, %v2530
      %v2535 = vpack.c.b16 %v2533, %v2532
      %v2539 = vsel %vm526, %v2525, 0
      %2541 = vmatprep.subr.bf16.mxu0 0
      %2542 = vmatpush1.bf16.msra.mxu0 0
      %2543 = vmatprep.subr.bf16.mxu0 0
      %2544 = vmatpush1.bf16.msra.mxu0 0
      %2545 = vmatprep.subr.bf16.mxu0 0
      %2546 = vmatpush1.bf16.msra.mxu0 0
      %2547 = vmatprep.subr.bf16.mxu0 0
      %2548 = vmatpush1.bf16.msra.mxu0 0
      %2549 = vmatprep.subr.bf16.mxu0 0
      %2550 = vmatpush1.bf16.msra.mxu0 0
      %2551 = vmatprep.subr.bf16.mxu0 0
      %2552 = vmatpush1.bf16.msra.mxu0 0
      %2553 = vmatprep.subr.bf16.mxu0 0
      %2554 = vmatpush1.bf16.msra.mxu0 %v2535
      %2555 = vmatprep.subr.bf16.mxu0 0
      %2556 = vmatpush1.bf16.msra.mxu0 %v2534
      %2557 = vmatprep.subr.bf16.mxu0 0
      %2558 = vmatpush2.bf16.msra.mxu0 0
      %2559 = vmatprep.subr.bf16.mxu0 0
      %2560 = vmatpush2.bf16.msra.mxu0 0
      %2561 = vmatprep.subr.bf16.mxu0 0
      %2562 = vmatpush2.bf16.msra.mxu0 0
      %2563 = vmatprep.subr.bf16.mxu0 0
      %2564 = vmatpush2.bf16.msra.mxu0 0
      %2565 = vmatprep.subr.bf16.mxu0 0
      %2566 = vmatpush2.bf16.msra.mxu0 0
      %2567 = vmatprep.subr.bf16.mxu0 0
      %2568 = vmatpush2.bf16.msra.mxu0 0
      %2569 = vmatprep.subr.bf16.mxu0 0
      %2570 = vmatpush2.bf16.msra.mxu0 0
      %2571 = vmatprep.subr.bf16.mxu0 0
      %2572 = vmatpush2.bf16.msra.mxu0 0
      %2573 = vmatprep.mubr.bf16.mxu0 0
      %2574 = vmatmul.mubr.bf16.gmra.mxu0 %v2539
      %v2575 = vpop.f32.mrf.mxu0
      %v2576 = vadd.f32 0.0, %v2575
      %v2577 = vpop.f32.mrf.mxu0
      %v2578 = vpop.f32.mrf.mxu0
      %v2579 = vadd.f32 0.0, %v2578
      %v2580 = vpop.f32.mrf.mxu0
      %2581 = vdwg.mxu0
      %v2582 = vadd.f32 %v2495, %v2576
      %v2583 = vadd.f32 %v2496, %v2579
      %v2584 = vld [vmem:[%s1187] sm:$0x7]
      %v2585 = vld [vmem:[%s1187 + $0x4] sm:$0x7]
      %v2586 = vld [vmem:[%s1187 + $0x8] sm:$0x7]
      %v2587 = vld [vmem:[%s1187 + $0xc] sm:$0x7]
      %v2593 = vunpack.c.l.s4 1983009808
      %v2594 = vunpack.c.0.s8 %v2593
      %v2595 = vlaneseq
      %v2596 = vshrl.u32 %v2595, 7
      %v2597 = vsub.s32 %v2594, %v2596
      %v2598 = vrot.slane %v2584, %v2597
      %v2599 = vcombine.high %v2598, %v2598
      %v2601 = vunpack.c.l.s4 1983009808
      %v2602 = vunpack.c.0.s8 %v2601
      %v2603 = vlaneseq
      %v2604 = vshrl.u32 %v2603, 7
      %v2605 = vsub.s32 %v2602, %v2604
      %v2606 = vrot.slane %v2585, %v2605
      %v2607 = vcombine.high %v2606, %v2606
      %v2609 = vunpack.c.l.s4 1983009808
      %v2610 = vunpack.c.0.s8 %v2609
      %v2611 = vlaneseq
      %v2612 = vshrl.u32 %v2611, 7
      %v2613 = vsub.s32 %v2610, %v2612
      %v2614 = vrot.slane %v2586, %v2613
      %v2615 = vcombine.high %v2614, %v2614
      %v2617 = vunpack.c.l.s4 1983009808
      %v2618 = vunpack.c.0.s8 %v2617
      %v2619 = vlaneseq
      %v2620 = vshrl.u32 %v2619, 7
      %v2621 = vsub.s32 %v2618, %v2620
      %v2622 = vrot.slane %v2587, %v2621
      %v2623 = vcombine.high %v2622, %v2622
      %v2625 = vshrl.u32 %v2598, 16
      %v2627 = vrot.slane %v2625, 6
      %v2628 = vshll.u32 %v2598, 16
      %v2630 = vrot.slane %v2628, 7
      %v2631 = vor.u32 %v2627, %v2630
      %v2632 = vrot.slane %v2631, 2
      %v2634 = vshll.u32 %v2599, 16
      %v2636 = vrot.slane %v2634, 7
      %v2637 = vsel %vm436, %v2632, %v2636
      %v2639 = vshrl.u32 %v2606, 16
      %v2641 = vrot.slane %v2639, 6
      %v2642 = vshll.u32 %v2606, 16
      %v2644 = vrot.slane %v2642, 7
      %v2645 = vor.u32 %v2641, %v2644
      %v2646 = vrot.slane %v2645, 2
      %v2648 = vshll.u32 %v2607, 16
      %v2650 = vrot.slane %v2648, 7
      %v2651 = vsel %vm436, %v2646, %v2650
      %v2653 = vshrl.u32 %v2614, 16
      %v2655 = vrot.slane %v2653, 6
      %v2656 = vshll.u32 %v2614, 16
      %v2658 = vrot.slane %v2656, 7
      %v2659 = vor.u32 %v2655, %v2658
      %v2660 = vrot.slane %v2659, 2
      %v2662 = vshll.u32 %v2615, 16
      %v2664 = vrot.slane %v2662, 7
      %v2665 = vsel %vm436, %v2660, %v2664
      %v2667 = vshrl.u32 %v2622, 16
      %v2669 = vrot.slane %v2667, 6
      %v2670 = vshll.u32 %v2622, 16
      %v2672 = vrot.slane %v2670, 7
      %v2673 = vor.u32 %v2669, %v2672
      %v2674 = vrot.slane %v2673, 2
      %v2676 = vshll.u32 %v2623, 16
      %v2678 = vrot.slane %v2676, 7
      %v2679 = vsel %vm436, %v2674, %v2678
      %v2680 = vld [vmem:[%s3 + $0x70] sm:$0xf]
      %v2681 = vld [vmem:[%s3 + $0x74] sm:$0xf]
      %v2682 = vld [vmem:[%s3 + $0x78] sm:$0xf]
      %v2683 = vld [vmem:[%s3 + $0x7c] sm:$0xf]
      %v2684 = vcombine.low %v2637, %v2651
      %v2685 = vcombine.low %v2665, %v2679
      %v2687 = vunpack.c.l.s4 1983009808
      %v2688 = vunpack.c.0.s8 %v2687
      %v2689 = vlaneseq
      %v2690 = vshrl.u32 %v2689, 7
      %v2691 = vsub.s32 %v2688, %v2690
      %v2692 = vrot.slane %v2684, %v2691
      %v2694 = vunpack.c.l.s4 1983009808
      %v2695 = vunpack.c.0.s8 %v2694
      %v2696 = vlaneseq
      %v2697 = vshrl.u32 %v2696, 7
      %v2698 = vsub.s32 %v2695, %v2697
      %v2699 = vrot.slane %v2685, %v2698
      %v2700 = vcombine.low %v2692, %v2699
      %v2705 = vunpack.c.l.b16 %v2680
      %v2706 = vunpack.c.l.b16 %v2681
      %v2707 = vunpack.c.l.b16 %v2682
      %v2708 = vunpack.c.l.b16 %v2683
      %v2709 = vpack.c.b16 %v2706, %v2705
      %v2710 = vpack.c.b16 %v2708, %v2707
      %v2714 = vsel %vm526, %v2700, 0
      %2716 = vmatprep.subr.bf16.mxu0 0
      %2717 = vmatpush1.bf16.msra.mxu0 0
      %2718 = vmatprep.subr.bf16.mxu0 0
      %2719 = vmatpush1.bf16.msra.mxu0 0
      %2720 = vmatprep.subr.bf16.mxu0 0
      %2721 = vmatpush1.bf16.msra.mxu0 0
      %2722 = vmatprep.subr.bf16.mxu0 0
      %2723 = vmatpush1.bf16.msra.mxu0 0
      %2724 = vmatprep.subr.bf16.mxu0 0
      %2725 = vmatpush1.bf16.msra.mxu0 0
      %2726 = vmatprep.subr.bf16.mxu0 0
      %2727 = vmatpush1.bf16.msra.mxu0 0
      %2728 = vmatprep.subr.bf16.mxu0 0
      %2729 = vmatpush1.bf16.msra.mxu0 %v2710
      %2730 = vmatprep.subr.bf16.mxu0 0
      %2731 = vmatpush1.bf16.msra.mxu0 %v2709
      %2732 = vmatprep.subr.bf16.mxu0 0
      %2733 = vmatpush2.bf16.msra.mxu0 0
      %2734 = vmatprep.subr.bf16.mxu0 0
      %2735 = vmatpush2.bf16.msra.mxu0 0
      %2736 = vmatprep.subr.bf16.mxu0 0
      %2737 = vmatpush2.bf16.msra.mxu0 0
      %2738 = vmatprep.subr.bf16.mxu0 0
      %2739 = vmatpush2.bf16.msra.mxu0 0
      %2740 = vmatprep.subr.bf16.mxu0 0
      %2741 = vmatpush2.bf16.msra.mxu0 0
      %2742 = vmatprep.subr.bf16.mxu0 0
      %2743 = vmatpush2.bf16.msra.mxu0 0
      %2744 = vmatprep.subr.bf16.mxu0 0
      %2745 = vmatpush2.bf16.msra.mxu0 0
      %2746 = vmatprep.subr.bf16.mxu0 0
      %2747 = vmatpush2.bf16.msra.mxu0 0
      %2748 = vmatprep.mubr.bf16.mxu0 0
      %2749 = vmatmul.mubr.bf16.gmra.mxu0 %v2714
      %v2750 = vpop.f32.mrf.mxu0
      %v2751 = vadd.f32 0.0, %v2750
      %v2752 = vpop.f32.mrf.mxu0
      %v2753 = vpop.f32.mrf.mxu0
      %v2754 = vadd.f32 0.0, %v2753
      %v2755 = vpop.f32.mrf.mxu0
      %2756 = vdwg.mxu0
      %v2757 = vadd.f32 %v2582, %v2751
      %v2758 = vadd.f32 %v2583, %v2754
      %v2759 = vld [vmem:[%s1187] sm:$0x6]
      %v2760 = vld [vmem:[%s1187 + $0x4] sm:$0x6]
      %v2761 = vld [vmem:[%s1187 + $0x8] sm:$0x6]
      %v2762 = vld [vmem:[%s1187 + $0xc] sm:$0x6]
      %v2768 = vunpack.c.l.s4 1983009808
      %v2769 = vunpack.c.0.s8 %v2768
      %v2770 = vlaneseq
      %v2771 = vshrl.u32 %v2770, 7
      %v2772 = vsub.s32 %v2769, %v2771
      %v2773 = vrot.slane %v2759, %v2772
      %v2774 = vcombine.high %v2773, %v2773
      %v2776 = vunpack.c.l.s4 1983009808
      %v2777 = vunpack.c.0.s8 %v2776
      %v2778 = vlaneseq
      %v2779 = vshrl.u32 %v2778, 7
      %v2780 = vsub.s32 %v2777, %v2779
      %v2781 = vrot.slane %v2760, %v2780
      %v2782 = vcombine.high %v2781, %v2781
      %v2784 = vunpack.c.l.s4 1983009808
      %v2785 = vunpack.c.0.s8 %v2784
      %v2786 = vlaneseq
      %v2787 = vshrl.u32 %v2786, 7
      %v2788 = vsub.s32 %v2785, %v2787
      %v2789 = vrot.slane %v2761, %v2788
      %v2790 = vcombine.high %v2789, %v2789
      %v2792 = vunpack.c.l.s4 1983009808
      %v2793 = vunpack.c.0.s8 %v2792
      %v2794 = vlaneseq
      %v2795 = vshrl.u32 %v2794, 7
      %v2796 = vsub.s32 %v2793, %v2795
      %v2797 = vrot.slane %v2762, %v2796
      %v2798 = vcombine.high %v2797, %v2797
      %v2799 = vrot.slane %v2773, 7
      %v2800 = vrot.slane %v2799, 2
      %v2801 = vrot.slane %v2774, 7
      %v2802 = vsel %vm694, %v2800, %v2801
      %v2803 = vrot.slane %v2781, 7
      %v2804 = vrot.slane %v2803, 2
      %v2805 = vrot.slane %v2782, 7
      %v2806 = vsel %vm694, %v2804, %v2805
      %v2807 = vrot.slane %v2789, 7
      %v2808 = vrot.slane %v2807, 2
      %v2809 = vrot.slane %v2790, 7
      %v2810 = vsel %vm694, %v2808, %v2809
      %v2811 = vrot.slane %v2797, 7
      %v2812 = vrot.slane %v2811, 2
      %v2813 = vrot.slane %v2798, 7
      %v2814 = vsel %vm694, %v2812, %v2813
      %v2815 = vld [vmem:[%s3 + $0x80] sm:$0xf]
      %v2816 = vld [vmem:[%s3 + $0x84] sm:$0xf]
      %v2817 = vld [vmem:[%s3 + $0x88] sm:$0xf]
      %v2818 = vld [vmem:[%s3 + $0x8c] sm:$0xf]
      %v2819 = vcombine.low %v2802, %v2806
      %v2820 = vcombine.low %v2810, %v2814
      %v2822 = vunpack.c.l.s4 1983009808
      %v2823 = vunpack.c.0.s8 %v2822
      %v2824 = vlaneseq
      %v2825 = vshrl.u32 %v2824, 7
      %v2826 = vsub.s32 %v2823, %v2825
      %v2827 = vrot.slane %v2819, %v2826
      %v2829 = vunpack.c.l.s4 1983009808
      %v2830 = vunpack.c.0.s8 %v2829
      %v2831 = vlaneseq
      %v2832 = vshrl.u32 %v2831, 7
      %v2833 = vsub.s32 %v2830, %v2832
      %v2834 = vrot.slane %v2820, %v2833
      %v2835 = vcombine.low %v2827, %v2834
      %v2840 = vunpack.c.l.b16 %v2815
      %v2841 = vunpack.c.l.b16 %v2816
      %v2842 = vunpack.c.l.b16 %v2817
      %v2843 = vunpack.c.l.b16 %v2818
      %v2844 = vpack.c.b16 %v2841, %v2840
      %v2845 = vpack.c.b16 %v2843, %v2842
      %v2849 = vsel %vm526, %v2835, 0
      %2851 = vmatprep.subr.bf16.mxu0 0
      %2852 = vmatpush1.bf16.msra.mxu0 0
      %2853 = vmatprep.subr.bf16.mxu0 0
      %2854 = vmatpush1.bf16.msra.mxu0 0
      %2855 = vmatprep.subr.bf16.mxu0 0
      %2856 = vmatpush1.bf16.msra.mxu0 0
      %2857 = vmatprep.subr.bf16.mxu0 0
      %2858 = vmatpush1.bf16.msra.mxu0 0
      %2859 = vmatprep.subr.bf16.mxu0 0
      %2860 = vmatpush1.bf16.msra.mxu0 0
      %2861 = vmatprep.subr.bf16.mxu0 0
      %2862 = vmatpush1.bf16.msra.mxu0 0
      %2863 = vmatprep.subr.bf16.mxu0 0
      %2864 = vmatpush1.bf16.msra.mxu0 %v2845
      %2865 = vmatprep.subr.bf16.mxu0 0
      %2866 = vmatpush1.bf16.msra.mxu0 %v2844
      %2867 = vmatprep.subr.bf16.mxu0 0
      %2868 = vmatpush2.bf16.msra.mxu0 0
      %2869 = vmatprep.subr.bf16.mxu0 0
      %2870 = vmatpush2.bf16.msra.mxu0 0
      %2871 = vmatprep.subr.bf16.mxu0 0
      %2872 = vmatpush2.bf16.msra.mxu0 0
      %2873 = vmatprep.subr.bf16.mxu0 0
      %2874 = vmatpush2.bf16.msra.mxu0 0
      %2875 = vmatprep.subr.bf16.mxu0 0
      %2876 = vmatpush2.bf16.msra.mxu0 0
      %2877 = vmatprep.subr.bf16.mxu0 0
      %2878 = vmatpush2.bf16.msra.mxu0 0
      %2879 = vmatprep.subr.bf16.mxu0 0
      %2880 = vmatpush2.bf16.msra.mxu0 0
      %2881 = vmatprep.subr.bf16.mxu0 0
      %2882 = vmatpush2.bf16.msra.mxu0 0
      %2883 = vmatprep.mubr.bf16.mxu0 0
      %2884 = vmatmul.mubr.bf16.gmra.mxu0 %v2849
      %v2885 = vpop.f32.mrf.mxu0
      %v2886 = vadd.f32 0.0, %v2885
      %v2887 = vpop.f32.mrf.mxu0
      %v2888 = vpop.f32.mrf.mxu0
      %v2889 = vadd.f32 0.0, %v2888
      %v2890 = vpop.f32.mrf.mxu0
      %2891 = vdwg.mxu0
      %v2892 = vadd.f32 %v2757, %v2886
      %v2893 = vadd.f32 %v2758, %v2889
      %v2894 = vld [vmem:[%s4] sm:$0x1]
      %v2896 = vlaneseq
      %v2897 = vshrl.u32 %v2896, 7
      %v2898 = vsub.s32 0, %v2897
      %v2899 = vrot.slane %v2894, %v2898
      %v2901 = vadd.f32 %v2892, %v2899
      %v2902 = vadd.f32 %v2893, %v2899
      %v2903 = vsel %vm526, %v2901, 0.0
      %2904 = vadd.xlane.f32.xlu0 %v2903
      %v2905 = vpop.xlane.xlu0 %2904
      %v2906 = vsel %vm526, %v2902, 0.0
      %2907 = vadd.xlane.f32.xlu0 %v2906
      %v2908 = vpop.xlane.xlu0 %2907
      %v2909 = vmul.f32 %v2905, %v1600
      %v2910 = vmul.f32 %v2908, %v1600
      %v2911 = vsub.f32 %v2901, %v2909
      %v2912 = vsub.f32 %v2902, %v2910
      %v2913 = vmul.f32 %v2911, %v2911
      %v2914 = vmul.f32 %v2912, %v2912
      %v2915 = vsel %vm526, %v2913, 0.0
      %2916 = vadd.xlane.f32.xlu0 %v2915
      %v2917 = vpop.xlane.xlu0 %2916
      %v2918 = vsel %vm526, %v2914, 0.0
      %2919 = vadd.xlane.f32.xlu0 %v2918
      %v2920 = vpop.xlane.xlu0 %2919
      %v2921 = vmul.f32 %v2917, %v1600
      %v2922 = vmul.f32 %v2920, %v1600
      %v2923 = vadd.f32 %v2921, 1e-05
      %v2924 = vadd.f32 %v2922, 1e-05
      %v2925 = vrsqrt.pop %v2923
      %v2926 = vrsqrt.pop %v2924
      %v2927 = vmul.f32 %v2911, %v2925
      %v2928 = vmul.f32 %v2912, %v2926
      %v2929 = vmul.f32 %v2927, 0.5
      %v2930 = vmul.f32 %v2928, 0.5
      %v2931 = vmul.f32 %v2927, 0.70710677
      %v2932 = vmul.f32 %v2928, 0.70710677
      %v2933 = verf.f32.pop %v2931
      %v2934 = verf.f32.pop %v2932
      %v2935 = vadd.f32 %v2933, 1.0
      %v2936 = vadd.f32 %v2934, 1.0
      %v2937 = vmul.f32 %v2929, %v2935
      %v2938 = vmul.f32 %v2930, %v2936
      %v2939 = vadd.f32 %v2937, %v1639
      %v2940 = vadd.f32 %v2938, %v1640
      %v2941 = vpack.c.bf16 %v2940, %v2939
      %v2942 = vld [vmem:[%s5] sm:$0xf]
      %v2943 = vld [vmem:[%s5 + $0x4] sm:$0xf]
      %v2944 = vld [vmem:[%s5 + $0x8] sm:$0xf]
      %v2945 = vld [vmem:[%s5 + $0xc] sm:$0xf]
      %v2946 = vld [vmem:[%s6] sm:$0x1]
      %v2948 = vlaneseq
      %v2949 = vshrl.u32 %v2948, 7
      %v2950 = vsub.s32 0, %v2949
      %v2951 = vrot.slane %v2946, %v2950
      %v2957 = vunpack.c.l.b16 %v2942
      %v2958 = vunpack.c.l.b16 %v2943
      %v2959 = vunpack.c.l.b16 %v2944
      %v2960 = vunpack.c.l.b16 %v2945
      %v2961 = vpack.c.b16 %v2958, %v2957
      %v2962 = vpack.c.b16 %v2960, %v2959
      %v2966 = vsel %vm526, %v2941, 0
      %2968 = vmatprep.subr.bf16.mxu0 0
      %2969 = vmatpush1.bf16.msra.mxu0 0
      %2970 = vmatprep.subr.bf16.mxu0 0
      %2971 = vmatpush1.bf16.msra.mxu0 0
      %2972 = vmatprep.subr.bf16.mxu0 0
      %2973 = vmatpush1.bf16.msra.mxu0 0
      %2974 = vmatprep.subr.bf16.mxu0 0
      %2975 = vmatpush1.bf16.msra.mxu0 0
      %2976 = vmatprep.subr.bf16.mxu0 0
      %2977 = vmatpush1.bf16.msra.mxu0 0
      %2978 = vmatprep.subr.bf16.mxu0 0
      %2979 = vmatpush1.bf16.msra.mxu0 0
      %2980 = vmatprep.subr.bf16.mxu0 0
      %2981 = vmatpush1.bf16.msra.mxu0 %v2962
      %2982 = vmatprep.subr.bf16.mxu0 0
      %2983 = vmatpush1.bf16.msra.mxu0 %v2961
      %2984 = vmatprep.subr.bf16.mxu0 0
      %2985 = vmatpush2.bf16.msra.mxu0 0
      %2986 = vmatprep.subr.bf16.mxu0 0
      %2987 = vmatpush2.bf16.msra.mxu0 0
      %2988 = vmatprep.subr.bf16.mxu0 0
      %2989 = vmatpush2.bf16.msra.mxu0 0
      %2990 = vmatprep.subr.bf16.mxu0 0
      %2991 = vmatpush2.bf16.msra.mxu0 0
      %2992 = vmatprep.subr.bf16.mxu0 0
      %2993 = vmatpush2.bf16.msra.mxu0 0
      %2994 = vmatprep.subr.bf16.mxu0 0
      %2995 = vmatpush2.bf16.msra.mxu0 0
      %2996 = vmatprep.subr.bf16.mxu0 0
      %2997 = vmatpush2.bf16.msra.mxu0 0
      %2998 = vmatprep.subr.bf16.mxu0 0
      %2999 = vmatpush2.bf16.msra.mxu0 0
      %3000 = vmatprep.mubr.bf16.mxu0 0
      %3001 = vmatmul.mubr.bf16.gmra.mxu0 %v2966
      %v3002 = vpop.f32.mrf.mxu0
      %v3003 = vadd.f32 %v2951, %v3002
      %v3004 = vpop.f32.mrf.mxu0
      %v3005 = vpop.f32.mrf.mxu0
      %v3006 = vadd.f32 %v2951, %v3005
      %v3007 = vpop.f32.mrf.mxu0
      %3008 = vdwg.mxu0
      %3009 = vxpose.xlu0.b32.start [1/16] %v3003, 128
      %3010 = vxpose.xlu0.b32.cont [2/16] %v3006, 128
      %3011 = vxpose.xlu0.b32.cont [3/16] 0.0, 128
      %3012 = vxpose.xlu0.b32.cont [4/16] 0.0, 128
      %3013 = vxpose.xlu0.b32.cont [5/16] 0.0, 128
      %3014 = vxpose.xlu0.b32.cont [6/16] 0.0, 128
      %3015 = vxpose.xlu0.b32.cont [7/16] 0.0, 128
      %3016 = vxpose.xlu0.b32.cont [8/16] 0.0, 128
      %3017 = vxpose.xlu0.b32.cont [9/16] 0.0, 128
      %3018 = vxpose.xlu0.b32.cont [10/16] 0.0, 128
      %3019 = vxpose.xlu0.b32.cont [11/16] 0.0, 128
      %3020 = vxpose.xlu0.b32.cont [12/16] 0.0, 128
      %3021 = vxpose.xlu0.b32.cont [13/16] 0.0, 128
      %3022 = vxpose.xlu0.b32.cont [14/16] 0.0, 128
      %3023 = vxpose.xlu0.b32.cont [15/16] 0.0, 128
      %3024 = vxpose.xlu0.b32.end [16/16] 0.0, 128
      %v3025 = vpop.trf.xlu0
      %v3026 = vpop.trf.xlu0
      %v3027 = vpop.trf.xlu0
      %v3028 = vpop.trf.xlu0
      %v3029 = vpop.trf.xlu0
      %v3030 = vpop.trf.xlu0
      %v3031 = vpop.trf.xlu0
      %v3032 = vpop.trf.xlu0
      %v3033 = vpop.trf.xlu0
      %v3034 = vpop.trf.xlu0
      %v3035 = vpop.trf.xlu0
      %v3036 = vpop.trf.xlu0
      %v3037 = vpop.trf.xlu0
      %v3038 = vpop.trf.xlu0
      %v3039 = vpop.trf.xlu0
      %v3040 = vpop.trf.xlu0
      %vm3041 = vcmask 130048
      %3042 = vst.msk [vmem:[%s278] sm:$0xff] %vm3041, %v3025
      %3043 = vst.msk [vmem:[%s278 + $0x8] sm:$0xff] %vm3041, %v3026
      %3044 = vst.msk [vmem:[%s278 + $0x10] sm:$0xff] %vm3041, %v3027
      %3045 = vst.msk [vmem:[%s278 + $0x18] sm:$0xff] %vm3041, %v3028
      %3046 = vst.msk [vmem:[%s278 + $0x20] sm:$0xff] %vm3041, %v3029
      %3047 = vst.msk [vmem:[%s278 + $0x28] sm:$0xff] %vm3041, %v3030
      %3048 = vst.msk [vmem:[%s278 + $0x30] sm:$0xff] %vm3041, %v3031
      %3049 = vst.msk [vmem:[%s278 + $0x38] sm:$0xff] %vm3041, %v3032
      %p3050 = scmp.lt.s32.totalorder %s18, 1
      %s3051 = scalar_select %p3050, %s18, 1
      %s3052 = smul.addr %s3051, 8
      %s3053 = smul.addr %s3052, 8
      %s3054 = scalar_lea.vmem %s7, %s3053
      // Predicated region
      $region49: #{projector_forward.1} parent=47 // pred_check
        %p3055 = pneg %p188
      $region50: #{projector_forward.1} parent=47 // pred_check_branch
        %3057 = sbr.rel (%p3055) target = $region52
      $region51: #{projector_forward.1} parent=47 // pred_region
        _
      $region52: #{projector_forward.1} parent=47 // pred_fallthru
        _
    $region48: #{projector_forward.1} parent=5 // pred_fallthru
      _
    %p3058 = scmp.le.s32.totalorder 2, %s13
    // Predicated region
    $region53: #{projector_forward.1} parent=5 // pred_check
      %p3059 = pneg %p3058
    $region54: #{projector_forward.1} parent=5 // pred_check_branch
      %3061 = sbr.rel (%p3059) target = $region56
    $region55: #{projector_forward.1} parent=5 // pred_region
      %s3062 = ssub.s32 %s13, 2
      // Predicated region
      $region57: #{projector_forward.1} parent=55 // pred_check
        %p3063 = pneg %p194
      $region58: #{projector_forward.1} parent=55 // pred_check_branch
        %3065 = sbr.rel (%p3063) target = $region60
      $region59: #{projector_forward.1} parent=55 // pred_region
        %p3066 = scmp.lt.s32.totalorder %s19, 1
        %s3067 = scalar_select %p3066, %s19, 1
        %s3068 = smul.addr %s3067, 8
        %s3069 = smul.addr %s3068, 8
        %s3070 = scalar_lea.vmem %s7, %s3069
      $region60: #{projector_forward.1} parent=55 // pred_fallthru
        _
    $region56: #{projector_forward.1} parent=5 // pred_fallthru
      _
  $region6: #{projector_forward.1} parent=0 // loop_footer
    %s17 = sadd.s32 1, %s13
  $region7: #{projector_forward.1} parent=0 // loop_footer_branch
    %12 = sbr.rel target = $region3
  $region8: #{projector_forward.1} parent=0 // loop_exit
    _

</llo_original>
